<compile_context>
chip_gen: v7x
topology: tpu7x:2x2x1
jax: 0.10.0
libtpu: 0.0.40
codegen_flags: <defaults>
</compile_context>

<pallas_src>
import functools

import jax
import jax.numpy as jnp
from jax import lax
from jax.experimental import pallas as pl
from jax.experimental.pallas import tpu as pltpu

LANE = 128


def _round_up(x, m):
    return (x + m - 1) // m * m


# ----------------------------------------------------------------------------
# Kernel
# ----------------------------------------------------------------------------
def _bottleneck_kernel(x_ref, w1_ref, b1_ref, w2_ref, b2_ref, w3_ref, b3_ref,
                       out_ref, hpad_ref, *, W):
    # x_ref   : (1, HW, Cin_p)        bf16  one image, spatially flattened
    # w1_ref  : (Cin_p, P_p)          bf16  (BN1 scale folded in)
    # w2_ref  : (9, P_p, P_p)         bf16  per-tap 3x3 weights (BN2 folded)
    # w3_ref  : (P_p, Cout_p)         bf16  (BN3 scale folded in)
    # b*_ref  : (1, C_p)              f32
    # out_ref : (1, HW, Cout_p)       bf16
    # hpad_ref: (PRE + HW + PRE, P_p) bf16  zero-haloed flat copy of h1
    hw = out_ref.shape[1]
    p = hpad_ref.shape[1]
    pre = (hpad_ref.shape[0] - hw) // 2          # multiple of 8 by construction

    x2d = x_ref[0]                               # (HW, Cin_p) bf16, reused below

    # ---- conv1 (1x1) + bias + relu  (BN scale already in the weights) ----
    h1 = jnp.dot(x2d, w1_ref[...], preferred_element_type=jnp.float32)
    h1 = jnp.maximum(h1 + b1_ref[...], 0.0)      # f32 epilogue

    # Flat zero-haloed staging of h1.  The interior store is sublane-aligned
    # (offset `pre` % 8 == 0, width = full 128 lanes); the thin top/bottom
    # halos are re-zeroed unconditionally every grid step (a few KB, and safe
    # regardless of how the parallel N axis is split across TensorCores).
    hpad_ref[0:pre, :] = jnp.zeros((pre, p), hpad_ref.dtype)
    hpad_ref[pre + hw:, :] = jnp.zeros(
        (hpad_ref.shape[0] - pre - hw, p), hpad_ref.dtype)
    hpad_ref[pre:pre + hw, :] = h1.astype(hpad_ref.dtype)

    # Per-output-row column masks for the 3x3 left/right boundary (dx = +-1).
    col = lax.broadcasted_iota(jnp.int32, (hw, p), 0) % W
    not_left = col != 0                          # valid when reading x-1
    not_right = col != (W - 1)                   # valid when reading x+1

    # ---- conv2 (3x3, stride 1, pad 1): 9 accumulating MXU matmuls over
    #      sublane-shifted windows of the flat h1 buffer (no im2col). ----
    taps = [(dy, dx) for dy in (-1, 0, 1) for dx in (-1, 0, 1)]
    acc = None
    for t, (dy, dx) in enumerate(taps):
        start = pre + dy * W + dx                # static Python int
        win = hpad_ref[start:start + hw, :]      # (HW, P_p) bf16
        if dx == -1:
            win = jnp.where(not_left, win, 0)
        elif dx == 1:
            win = jnp.where(not_right, win, 0)
        part = jnp.dot(win, w2_ref[t], preferred_element_type=jnp.float32)
        acc = part if acc is None else acc + part
    h2 = jnp.maximum(acc + b2_ref[...], 0.0)     # f32 epilogue

    # ---- conv3 (1x1, expansion 4) + bias + residual + relu ----
    h3 = jnp.dot(h2.astype(w3_ref.dtype), w3_ref[...],
                 preferred_element_type=jnp.float32)
    out = jnp.maximum(h3 + b3_ref[...] + x2d.astype(jnp.float32), 0.0)
    out_ref[0] = out.astype(out_ref.dtype)       # bf16, lane-dense store


# ----------------------------------------------------------------------------
# Wrappers
# ----------------------------------------------------------------------------
def bottleneck_nhwc_flat(x, kp, *, H, W):
    """Primary entry point.

    x : (N, H*W, Cin_p) bf16, channel-padded, spatially-flattened NHWC.
    Returns (N, H*W, Cout_p) bf16 in the same format, so stacked blocks chain
    without any HBM-level layout traffic.
    """
    N, HW, cin_p = x.shape
    assert HW == H * W
    p_p, cout_p = kp["p_p"], kp["cout_p"]
    w1, b1, w2, b2, w3, b3 = (kp["w1"], kp["b1"], kp["w2"], kp["b2"],
                              kp["w3"], kp["b3"])

    pre = _round_up(W + 1, 8)      # halo rows; multiple of 8 -> aligned store
    pad_rows = pre + HW + pre

    def const_spec(a):
        nd = a.ndim
        return pl.BlockSpec(a.shape, lambda n, _nd=nd: (0,) * _nd)

    # Scoped-VMEM budget derived from actual block / scratch / f32-temp sizes
    # (double-buffered activations & weights), capped under v7x's 64 MiB.
    x_blk = HW * cin_p * 2
    out_blk = HW * cout_p * 2
    weights = ((cin_p * p_p + 9 * p_p * p_p + p_p * cout_p) * 2
               + (2 * p_p + cout_p) * 4)
    scratch = pad_rows * p_p * 2
    f32_tmp = 4 * HW * max(p_p, cout_p) * 4
    est = 2 * (x_blk + out_blk) + 2 * weights + scratch + f32_tmp
    vmem_limit = int(min(max(est * 5 // 4 + (4 << 20), 16 << 20), 48 << 20))

    kernel = functools.partial(_bottleneck_kernel, W=W)

    return pl.pallas_call(
        kernel,
        out_shape=jax.ShapeDtypeStruct((N, HW, cout_p), jnp.bfloat16),
        grid_spec=pltpu.PrefetchScalarGridSpec(
            num_scalar_prefetch=0,
            grid=(N,),
            in_specs=[
                pl.BlockSpec((1, HW, cin_p), lambda n: (n, 0, 0)),
                const_spec(w1), const_spec(b1),
                const_spec(w2), const_spec(b2),
                const_spec(w3), const_spec(b3),
            ],
            out_specs=pl.BlockSpec((1, HW, cout_p), lambda n: (n, 0, 0)),
            scratch_shapes=[
                pltpu.VMEM((pad_rows, p_p), jnp.bfloat16),   # zero-haloed h1
            ],
        ),
        compiler_params=pltpu.CompilerParams(
            dimension_semantics=("parallel",),
            vmem_limit_bytes=vmem_limit,
        ),
    )(x, w1, b1, w2, b2, w3, b3)


def bottleneck_nchw(x_nchw, kp):
    """PyTorch-convention wrapper: (N, C, H, W) f32 -> (N, 4*planes, H, W) bf16.

    Test-harness only.  In a real network call `bottleneck_nhwc_flat` directly
    and keep activations in channel-padded flat-NHWC bf16 across blocks; the
    transpose / pad / slice below are exactly the HBM round trips the kernel
    itself avoids.
    """
    N, C, H, W = x_nchw.shape
    assert C == kp["cin"] == kp["cout"], \
        "identity residual path requires inplanes == 4*planes (no downsample)"
    x = jnp.transpose(x_nchw, (0, 2, 3, 1)).reshape(N, H * W, C)
    if kp["cin_p"] != C:
        x = jnp.pad(x, ((0, 0), (0, 0), (0, kp["cin_p"] - C)))
    x = x.astype(jnp.bfloat16)
    y = bottleneck_nhwc_flat(x, kp, H=H, W=W)        # (N, HW, Cout_p) bf16
    y = y[..., :kp["cout"]].reshape(N, H, W, kp["cout"])
    return jnp.transpose(y, (0, 3, 1, 2))


# ----------------------------------------------------------------------------
# Parameter construction (eval-mode BN folded, channels padded, bf16 weights)
# ----------------------------------------------------------------------------
def _fold_bn(gamma, beta, mean, var, eps=1e-5):
    scale = gamma / jnp.sqrt(var + eps)
    return scale, beta - mean * scale


def make_params(key, inplanes, planes):
    expansion = 4
    cout = planes * expansion
    ks = jax.random.split(key, 15)
    w1 = jax.random.normal(ks[0], (inplanes, planes), jnp.float32) * 0.1
    w2 = jax.random.normal(ks[1], (3, 3, planes, planes), jnp.float32) * 0.1
    w3 = jax.random.normal(ks[2], (planes, cout), jnp.float32) * 0.1

    def bn(k0, k1, k2, k3, c):
        gamma = 0.5 + jax.random.uniform(k0, (c,), jnp.float32)
        beta = jax.random.normal(k1, (c,), jnp.float32) * 0.1
        mean = jax.random.normal(k2, (c,), jnp.float32) * 0.1
        var = 0.5 + jax.random.uniform(k3, (c,), jnp.float32)
        return (gamma, beta, mean, var)

    bn1 = bn(ks[3], ks[4], ks[5], ks[6], planes)
    bn2 = bn(ks[7], ks[8], ks[9], ks[10], planes)
    bn3 = bn(ks[11], ks[12], ks[13], ks[14], cout)
    return (w1, bn1, w2, bn2, w3, bn3)


def prepare_kernel_params(raw, lane=LANE):
    """Fold BN scale into conv weights, pad channels to lane multiples, cast bf16."""
    w1, bn1, w2, bn2, w3, bn3 = raw
    s1, b1 = _fold_bn(*bn1)
    s2, b2 = _fold_bn(*bn2)
    s3, b3 = _fold_bn(*bn3)
    w1 = w1 * s1[None, :]
    w2 = w2 * s2[None, None, None, :]
    w3 = w3 * s3[None, :]

    cin, p = w1.shape
    cout = w3.shape[1]
    cin_p = _round_up(cin, lane)
    p_p = _round_up(p, lane)
    cout_p = _round_up(cout, lane)

    w1p = jnp.zeros((cin_p, p_p), jnp.float32).at[:cin, :p].set(w1)
    w2p = jnp.zeros((3, 3, p_p, p_p), jnp.float32).at[:, :, :p, :p].set(w2)
    w3p = jnp.zeros((p_p, cout_p), jnp.float32).at[:p, :cout].set(w3)
    b1p = jnp.zeros((1, p_p), jnp.float32).at[0, :p].set(b1)
    b2p = jnp.zeros((1, p_p), jnp.float32).at[0, :p].set(b2)
    b3p = jnp.zeros((1, cout_p), jnp.float32).at[0, :cout].set(b3)
    # (3,3,P,P) -> (9,P,P), tap index t = ky*3 + kx, matching the kernel loop.
    w2f = w2p.reshape(9, p_p, p_p)

    return dict(
        w1=w1p.astype(jnp.bfloat16), b1=b1p,
        w2=w2f.astype(jnp.bfloat16), b2=b2p,
        w3=w3p.astype(jnp.bfloat16), b3=b3p,
        cin=cin, cout=cout, cin_p=cin_p, p_p=p_p, cout_p=cout_p)


# ----------------------------------------------------------------------------
# Pure-JAX reference (lax.conv), optionally with matching bf16 quantization
# ----------------------------------------------------------------------------
def reference_nhwc(x, raw, *, cast_bf16):
    w1, bn1, w2, bn2, w3, bn3 = raw
    s1, b1 = _fold_bn(*bn1)
    s2, b2 = _fold_bn(*bn2)
    s3, b3 = _fold_bn(*bn3)
    w1 = (w1 * s1[None, :])[None, None]            # (1,1,Cin,P)  HWIO
    w2 = w2 * s2[None, None, None, :]              # (3,3,P,P)   HWIO
    w3 = (w3 * s3[None, :])[None, None]            # (1,1,P,Cout)
    dn = ('NHWC', 'HWIO', 'NHWC')

    def conv(a, w, pad):
        if cast_bf16:
            a = a.astype(jnp.bfloat16)
            w = w.astype(jnp.bfloat16)
        return lax.conv_general_dilated(
            a, w, window_strides=(1, 1), padding=pad, dimension_numbers=dn,
            preferred_element_type=jnp.float32)

    residual = x
    if cast_bf16:
        residual = x.astype(jnp.bfloat16).astype(jnp.float32)
    h = jnp.maximum(conv(x, w1, 'VALID') + b1, 0.0)
    h = jnp.maximum(conv(h, w2, [(1, 1), (1, 1)]) + b2, 0.0)
    h = conv(h, w3, 'VALID') + b3
    out = jnp.maximum(h + residual, 0.0)
    if cast_bf16:
        out = out.astype(jnp.bfloat16).astype(jnp.float32)   # match bf16 output
    return out


# ----------------------------------------------------------------------------
if __name__ == "__main__":
    key = jax.random.PRNGKey(0)
    k_x, k_p = jax.random.split(key)

    N, planes, H, W = 2, 8, 16, 16
    inplanes = planes * 4   # identity residual requires Cin == 4*planes

    x_nchw = jax.random.normal(k_x, (N, inplanes, H, W), jnp.float32)
    raw_params = make_params(k_p, inplanes, planes)
    kparams = prepare_kernel_params(raw_params)

    out = bottleneck_nchw(x_nchw, kparams)
    out = jax.block_until_ready(out)
    assert out.shape == (N, planes * 4, H, W)
    out_f32 = out.astype(jnp.float32)

    # Check vs. a reference with the same bf16 quantization (inputs, weights,
    # inter-conv activations and the final output).
    x_nhwc = jnp.transpose(x_nchw, (0, 2, 3, 1))
    ref_bf16 = jnp.transpose(reference_nhwc(x_nhwc, raw_params, cast_bf16=True),
                             (0, 3, 1, 2))
    err_tight = float(jnp.max(jnp.abs(out_f32 - ref_bf16)))
    assert err_tight < 1e-1, f"bf16-matched reference mismatch: {err_tight}"

    # Loose sanity check vs. the full-f32 reference.
    ref_f32 = jnp.transpose(reference_nhwc(x_nhwc, raw_params, cast_bf16=False),
                            (0, 3, 1, 2))
    assert jnp.allclose(out_f32, ref_f32, atol=1.5e-1, rtol=1e-1), float(
        jnp.max(jnp.abs(out_f32 - ref_f32)))

    print("KERNEL_OK")
</pallas_src>

<mosaic_0001>
module attributes {stable_mosaic.version = 11 : i64} {
  func.func @_bottleneck_kernel(%arg0: i32, %arg1: memref<1x256x128xbf16, #tpu.memory_space<vmem>>, %arg2: memref<128x128xbf16, #tpu.memory_space<vmem>>, %arg3: memref<1x128xf32, #tpu.memory_space<vmem>>, %arg4: memref<9x128x128xbf16, #tpu.memory_space<vmem>>, %arg5: memref<1x128xf32, #tpu.memory_space<vmem>>, %arg6: memref<128x128xbf16, #tpu.memory_space<vmem>>, %arg7: memref<1x128xf32, #tpu.memory_space<vmem>>, %arg8: memref<1x256x128xbf16, #tpu.memory_space<vmem>>, %arg9: memref<304x128xbf16, #tpu.memory_space<vmem>>) attributes {dimension_semantics = [#tpu.dimension_semantics<parallel>], iteration_bounds = array<i64: 2>, scalar_prefetch = 0 : i64, scratch_operands = 1 : i64, tpu.core_type = #tpu.core_type<tc>, window_params = [{transform_indices = @transform_0, window_bounds = array<i64: 1, 256, 128>}, {pipeline_mode = #tpu.pipeline_mode<synchronous>, transform_indices = @transform_1, window_bounds = array<i64: 128, 128>}, {pipeline_mode = #tpu.pipeline_mode<synchronous>, transform_indices = @transform_2, window_bounds = array<i64: 1, 128>}, {pipeline_mode = #tpu.pipeline_mode<synchronous>, transform_indices = @transform_3, window_bounds = array<i64: 9, 128, 128>}, {pipeline_mode = #tpu.pipeline_mode<synchronous>, transform_indices = @transform_4, window_bounds = array<i64: 1, 128>}, {pipeline_mode = #tpu.pipeline_mode<synchronous>, transform_indices = @transform_5, window_bounds = array<i64: 128, 128>}, {pipeline_mode = #tpu.pipeline_mode<synchronous>, transform_indices = @transform_6, window_bounds = array<i64: 1, 128>}, {transform_indices = @transform_7, window_bounds = array<i64: 1, 256, 128>}]} {
    %c0 = arith.constant 0 : index
    %c0_0 = arith.constant 0 : index
    %c0_1 = arith.constant 0 : index
    %0 = vector.load %arg1[%c0, %c0_0, %c0_1] : memref<1x256x128xbf16, #tpu.memory_space<vmem>>, vector<1x256x128xbf16>
    %1 = vector.shape_cast %0 : vector<1x256x128xbf16> to vector<256x128xbf16>
    %c0_2 = arith.constant 0 : index
    %c0_3 = arith.constant 0 : index
    %2 = vector.load %arg2[%c0_2, %c0_3] : memref<128x128xbf16, #tpu.memory_space<vmem>>, vector<128x128xbf16>
    %cst = arith.constant dense<0.000000e+00> : vector<256x128xf32>
    %3 = tpu.matmul %1, %2, %cst {dimension_numbers = #tpu.dot_dimension_numbers<[1], [0], [0], [1], [0, 0, 1, 1], [], []>} : vector<256x128xbf16>, vector<128x128xbf16>, vector<256x128xf32> -> vector<256x128xf32>
    %c0_4 = arith.constant 0 : index
    %c0_5 = arith.constant 0 : index
    %4 = vector.load %arg3[%c0_4, %c0_5] : memref<1x128xf32, #tpu.memory_space<vmem>>, vector<1x128xf32>
    %5 = vector.broadcast %4 : vector<1x128xf32> to vector<256x128xf32>
    %6 = arith.addf %3, %5 : vector<256x128xf32>
    %cst_6 = arith.constant 0.000000e+00 : f32
    %7 = vector.broadcast %cst_6 : f32 to vector<256x128xf32>
    %8 = arith.maximumf %6, %7 : vector<256x128xf32>
    %cst_7 = arith.constant 0.000000e+00 : bf16
    %9 = vector.broadcast %cst_7 : bf16 to vector<24x128xbf16>
    %c0_8 = arith.constant 0 : index
    %c0_9 = arith.constant 0 : index
    %10 = vector.load %arg9[%c0_8, %c0_9] : memref<304x128xbf16, #tpu.memory_space<vmem>>, vector<24x128xbf16>
    tpu.vector_store %arg9[%c0_8, %c0_9], %9 {strides = array<i32>} : memref<304x128xbf16, #tpu.memory_space<vmem>>, vector<24x128xbf16>,
    %cst_10 = arith.constant 0.000000e+00 : bf16
    %11 = vector.broadcast %cst_10 : bf16 to vector<24x128xbf16>
    %c280 = arith.constant 280 : index
    %c0_11 = arith.constant 0 : index
    %12 = vector.load %arg9[%c280, %c0_11] : memref<304x128xbf16, #tpu.memory_space<vmem>>, vector<24x128xbf16>
    tpu.vector_store %arg9[%c280, %c0_11], %11 {strides = array<i32>} : memref<304x128xbf16, #tpu.memory_space<vmem>>, vector<24x128xbf16>,
    %13 = arith.truncf %8 : vector<256x128xf32> to vector<256x128xbf16>
    %c24 = arith.constant 24 : index
    %c0_12 = arith.constant 0 : index
    %14 = vector.load %arg9[%c24, %c0_12] : memref<304x128xbf16, #tpu.memory_space<vmem>>, vector<256x128xbf16>
    tpu.vector_store %arg9[%c24, %c0_12], %13 {strides = array<i32>} : memref<304x128xbf16, #tpu.memory_space<vmem>>, vector<256x128xbf16>,
    %15 = tpu.iota {dimensions = array<i32: 0>} : vector<256x128xi32>
    %c16_i32 = arith.constant 16 : i32
    %c0_i32 = arith.constant 0 : i32
    %16 = arith.cmpi eq, %c16_i32, %c0_i32 : i32
    %c1_i32 = arith.constant 1 : i32
    %17 = arith.select %16, %c1_i32, %c16_i32 : i32
    %18 = vector.broadcast %17 : i32 to vector<256x128xi32>
    %19 = arith.remsi %15, %18 : vector<256x128xi32>
    %c0_i32_13 = arith.constant 0 : i32
    %20 = vector.broadcast %c0_i32_13 : i32 to vector<256x128xi32>
    %21 = arith.cmpi ne, %19, %20 : vector<256x128xi32>
    %c0_i32_14 = arith.constant 0 : i32
    %22 = vector.broadcast %c0_i32_14 : i32 to vector<256x128xi32>
    %23 = arith.cmpi slt, %19, %22 : vector<256x128xi32>
    %c0_i32_15 = arith.constant 0 : i32
    %24 = arith.cmpi slt, %17, %c0_i32_15 : i32
    %25 = vector.broadcast %24 : i1 to vector<256x128xi1>
    %26 = vector.broadcast %25 : vector<256x128xi1> to vector<256x128xi1>
    %27 = arith.xori %23, %26 : vector<256x128xi1>
    %28 = arith.andi %27, %21 : vector<256x128xi1>
    %29 = vector.broadcast %17 : i32 to vector<256x128xi32>
    %30 = arith.addi %19, %29 : vector<256x128xi32>
    %31 = arith.select %28, %30, %19 : vector<256x128xi1>, vector<256x128xi32>
    %c0_i32_16 = arith.constant 0 : i32
    %32 = vector.broadcast %c0_i32_16 : i32 to vector<256x128xi32>
    %33 = arith.cmpi ne, %31, %32 : vector<256x128xi32>
    %c15_i32 = arith.constant 15 : i32
    %34 = vector.broadcast %c15_i32 : i32 to vector<256x128xi32>
    %35 = arith.cmpi ne, %31, %34 : vector<256x128xi32>
    %c7 = arith.constant 7 : index
    %c0_17 = arith.constant 0 : index
    %36 = vector.load %arg9[%c7, %c0_17] : memref<304x128xbf16, #tpu.memory_space<vmem>>, vector<256x128xbf16>
    %c0_i32_18 = arith.constant 0 : i32
    %37 = arith.sitofp %c0_i32_18 : i32 to bf16
    %38 = vector.broadcast %37 : bf16 to vector<256x128xbf16>
    %39 = arith.select %33, %36, %38 : vector<256x128xi1>, vector<256x128xbf16>
    %c0_19 = arith.constant 0 : index
    %c0_20 = arith.constant 0 : index
    %c0_21 = arith.constant 0 : index
    %40 = vector.load %arg4[%c0_19, %c0_20, %c0_21] : memref<9x128x128xbf16, #tpu.memory_space<vmem>>, vector<1x128x128xbf16>
    %41 = vector.shape_cast %40 : vector<1x128x128xbf16> to vector<128x128xbf16>
    %cst_22 = arith.constant dense<0.000000e+00> : vector<256x128xf32>
    %42 = tpu.matmul %39, %41, %cst_22 {dimension_numbers = #tpu.dot_dimension_numbers<[1], [0], [0], [1], [0, 0, 1, 1], [], []>} : vector<256x128xbf16>, vector<128x128xbf16>, vector<256x128xf32> -> vector<256x128xf32>
    %c8 = arith.constant 8 : index
    %c0_23 = arith.constant 0 : index
    %43 = vector.load %arg9[%c8, %c0_23] : memref<304x128xbf16, #tpu.memory_space<vmem>>, vector<256x128xbf16>
    %c1 = arith.constant 1 : index
    %c0_24 = arith.constant 0 : index
    %c0_25 = arith.constant 0 : index
    %44 = vector.load %arg4[%c1, %c0_24, %c0_25] : memref<9x128x128xbf16, #tpu.memory_space<vmem>>, vector<1x128x128xbf16>
    %45 = vector.shape_cast %44 : vector<1x128x128xbf16> to vector<128x128xbf16>
    %cst_26 = arith.constant dense<0.000000e+00> : vector<256x128xf32>
    %46 = tpu.matmul %43, %45, %cst_26 {dimension_numbers = #tpu.dot_dimension_numbers<[1], [0], [0], [1], [0, 0, 1, 1], [], []>} : vector<256x128xbf16>, vector<128x128xbf16>, vector<256x128xf32> -> vector<256x128xf32>
    %47 = arith.addf %42, %46 : vector<256x128xf32>
    %c9 = arith.constant 9 : index
    %c0_27 = arith.constant 0 : index
    %48 = vector.load %arg9[%c9, %c0_27] : memref<304x128xbf16, #tpu.memory_space<vmem>>, vector<256x128xbf16>
    %c0_i32_28 = arith.constant 0 : i32
    %49 = arith.sitofp %c0_i32_28 : i32 to bf16
    %50 = vector.broadcast %49 : bf16 to vector<256x128xbf16>
    %51 = arith.select %35, %48, %50 : vector<256x128xi1>, vector<256x128xbf16>
    %c2 = arith.constant 2 : index
    %c0_29 = arith.constant 0 : index
    %c0_30 = arith.constant 0 : index
    %52 = vector.load %arg4[%c2, %c0_29, %c0_30] : memref<9x128x128xbf16, #tpu.memory_space<vmem>>, vector<1x128x128xbf16>
    %53 = vector.shape_cast %52 : vector<1x128x128xbf16> to vector<128x128xbf16>
    %cst_31 = arith.constant dense<0.000000e+00> : vector<256x128xf32>
    %54 = tpu.matmul %51, %53, %cst_31 {dimension_numbers = #tpu.dot_dimension_numbers<[1], [0], [0], [1], [0, 0, 1, 1], [], []>} : vector<256x128xbf16>, vector<128x128xbf16>, vector<256x128xf32> -> vector<256x128xf32>
    %55 = arith.addf %47, %54 : vector<256x128xf32>
    %c23 = arith.constant 23 : index
    %c0_32 = arith.constant 0 : index
    %56 = vector.load %arg9[%c23, %c0_32] : memref<304x128xbf16, #tpu.memory_space<vmem>>, vector<256x128xbf16>
    %c0_i32_33 = arith.constant 0 : i32
    %57 = arith.sitofp %c0_i32_33 : i32 to bf16
    %58 = vector.broadcast %57 : bf16 to vector<256x128xbf16>
    %59 = arith.select %33, %56, %58 : vector<256x128xi1>, vector<256x128xbf16>
    %c3 = arith.constant 3 : index
    %c0_34 = arith.constant 0 : index
    %c0_35 = arith.constant 0 : index
    %60 = vector.load %arg4[%c3, %c0_34, %c0_35] : memref<9x128x128xbf16, #tpu.memory_space<vmem>>, vector<1x128x128xbf16>
    %61 = vector.shape_cast %60 : vector<1x128x128xbf16> to vector<128x128xbf16>
    %cst_36 = arith.constant dense<0.000000e+00> : vector<256x128xf32>
    %62 = tpu.matmul %59, %61, %cst_36 {dimension_numbers = #tpu.dot_dimension_numbers<[1], [0], [0], [1], [0, 0, 1, 1], [], []>} : vector<256x128xbf16>, vector<128x128xbf16>, vector<256x128xf32> -> vector<256x128xf32>
    %63 = arith.addf %55, %62 : vector<256x128xf32>
    %c24_37 = arith.constant 24 : index
    %c0_38 = arith.constant 0 : index
    %64 = vector.load %arg9[%c24_37, %c0_38] : memref<304x128xbf16, #tpu.memory_space<vmem>>, vector<256x128xbf16>
    %c4 = arith.constant 4 : index
    %c0_39 = arith.constant 0 : index
    %c0_40 = arith.constant 0 : index
    %65 = vector.load %arg4[%c4, %c0_39, %c0_40] : memref<9x128x128xbf16, #tpu.memory_space<vmem>>, vector<1x128x128xbf16>
    %66 = vector.shape_cast %65 : vector<1x128x128xbf16> to vector<128x128xbf16>
    %cst_41 = arith.constant dense<0.000000e+00> : vector<256x128xf32>
    %67 = tpu.matmul %64, %66, %cst_41 {dimension_numbers = #tpu.dot_dimension_numbers<[1], [0], [0], [1], [0, 0, 1, 1], [], []>} : vector<256x128xbf16>, vector<128x128xbf16>, vector<256x128xf32> -> vector<256x128xf32>
    %68 = arith.addf %63, %67 : vector<256x128xf32>
    %c25 = arith.constant 25 : index
    %c0_42 = arith.constant 0 : index
    %69 = vector.load %arg9[%c25, %c0_42] : memref<304x128xbf16, #tpu.memory_space<vmem>>, vector<256x128xbf16>
    %c0_i32_43 = arith.constant 0 : i32
    %70 = arith.sitofp %c0_i32_43 : i32 to bf16
    %71 = vector.broadcast %70 : bf16 to vector<256x128xbf16>
    %72 = arith.select %35, %69, %71 : vector<256x128xi1>, vector<256x128xbf16>
    %c5 = arith.constant 5 : index
    %c0_44 = arith.constant 0 : index
    %c0_45 = arith.constant 0 : index
    %73 = vector.load %arg4[%c5, %c0_44, %c0_45] : memref<9x128x128xbf16, #tpu.memory_space<vmem>>, vector<1x128x128xbf16>
    %74 = vector.shape_cast %73 : vector<1x128x128xbf16> to vector<128x128xbf16>
    %cst_46 = arith.constant dense<0.000000e+00> : vector<256x128xf32>
    %75 = tpu.matmul %72, %74, %cst_46 {dimension_numbers = #tpu.dot_dimension_numbers<[1], [0], [0], [1], [0, 0, 1, 1], [], []>} : vector<256x128xbf16>, vector<128x128xbf16>, vector<256x128xf32> -> vector<256x128xf32>
    %76 = arith.addf %68, %75 : vector<256x128xf32>
    %c39 = arith.constant 39 : index
    %c0_47 = arith.constant 0 : index
    %77 = vector.load %arg9[%c39, %c0_47] : memref<304x128xbf16, #tpu.memory_space<vmem>>, vector<256x128xbf16>
    %c0_i32_48 = arith.constant 0 : i32
    %78 = arith.sitofp %c0_i32_48 : i32 to bf16
    %79 = vector.broadcast %78 : bf16 to vector<256x128xbf16>
    %80 = arith.select %33, %77, %79 : vector<256x128xi1>, vector<256x128xbf16>
    %c6 = arith.constant 6 : index
    %c0_49 = arith.constant 0 : index
    %c0_50 = arith.constant 0 : index
    %81 = vector.load %arg4[%c6, %c0_49, %c0_50] : memref<9x128x128xbf16, #tpu.memory_space<vmem>>, vector<1x128x128xbf16>
    %82 = vector.shape_cast %81 : vector<1x128x128xbf16> to vector<128x128xbf16>
    %cst_51 = arith.constant dense<0.000000e+00> : vector<256x128xf32>
    %83 = tpu.matmul %80, %82, %cst_51 {dimension_numbers = #tpu.dot_dimension_numbers<[1], [0], [0], [1], [0, 0, 1, 1], [], []>} : vector<256x128xbf16>, vector<128x128xbf16>, vector<256x128xf32> -> vector<256x128xf32>
    %84 = arith.addf %76, %83 : vector<256x128xf32>
    %c40 = arith.constant 40 : index
    %c0_52 = arith.constant 0 : index
    %85 = vector.load %arg9[%c40, %c0_52] : memref<304x128xbf16, #tpu.memory_space<vmem>>, vector<256x128xbf16>
    %c7_53 = arith.constant 7 : index
    %c0_54 = arith.constant 0 : index
    %c0_55 = arith.constant 0 : index
    %86 = vector.load %arg4[%c7_53, %c0_54, %c0_55] : memref<9x128x128xbf16, #tpu.memory_space<vmem>>, vector<1x128x128xbf16>
    %87 = vector.shape_cast %86 : vector<1x128x128xbf16> to vector<128x128xbf16>
    %cst_56 = arith.constant dense<0.000000e+00> : vector<256x128xf32>
    %88 = tpu.matmul %85, %87, %cst_56 {dimension_numbers = #tpu.dot_dimension_numbers<[1], [0], [0], [1], [0, 0, 1, 1], [], []>} : vector<256x128xbf16>, vector<128x128xbf16>, vector<256x128xf32> -> vector<256x128xf32>
    %89 = arith.addf %84, %88 : vector<256x128xf32>
    %c41 = arith.constant 41 : index
    %c0_57 = arith.constant 0 : index
    %90 = vector.load %arg9[%c41, %c0_57] : memref<304x128xbf16, #tpu.memory_space<vmem>>, vector<256x128xbf16>
    %c0_i32_58 = arith.constant 0 : i32
    %91 = arith.sitofp %c0_i32_58 : i32 to bf16
    %92 = vector.broadcast %91 : bf16 to vector<256x128xbf16>
    %93 = arith.select %35, %90, %92 : vector<256x128xi1>, vector<256x128xbf16>
    %c8_59 = arith.constant 8 : index
    %c0_60 = arith.constant 0 : index
    %c0_61 = arith.constant 0 : index
    %94 = vector.load %arg4[%c8_59, %c0_60, %c0_61] : memref<9x128x128xbf16, #tpu.memory_space<vmem>>, vector<1x128x128xbf16>
    %95 = vector.shape_cast %94 : vector<1x128x128xbf16> to vector<128x128xbf16>
    %cst_62 = arith.constant dense<0.000000e+00> : vector<256x128xf32>
    %96 = tpu.matmul %93, %95, %cst_62 {dimension_numbers = #tpu.dot_dimension_numbers<[1], [0], [0], [1], [0, 0, 1, 1], [], []>} : vector<256x128xbf16>, vector<128x128xbf16>, vector<256x128xf32> -> vector<256x128xf32>
    %97 = arith.addf %89, %96 : vector<256x128xf32>
    %c0_63 = arith.constant 0 : index
    %c0_64 = arith.constant 0 : index
    %98 = vector.load %arg5[%c0_63, %c0_64] : memref<1x128xf32, #tpu.memory_space<vmem>>, vector<1x128xf32>
    %99 = vector.broadcast %98 : vector<1x128xf32> to vector<256x128xf32>
    %100 = arith.addf %97, %99 : vector<256x128xf32>
    %cst_65 = arith.constant 0.000000e+00 : f32
    %101 = vector.broadcast %cst_65 : f32 to vector<256x128xf32>
    %102 = arith.maximumf %100, %101 : vector<256x128xf32>
    %103 = arith.truncf %102 : vector<256x128xf32> to vector<256x128xbf16>
    %c0_66 = arith.constant 0 : index
    %c0_67 = arith.constant 0 : index
    %104 = vector.load %arg6[%c0_66, %c0_67] : memref<128x128xbf16, #tpu.memory_space<vmem>>, vector<128x128xbf16>
    %cst_68 = arith.constant dense<0.000000e+00> : vector<256x128xf32>
    %105 = tpu.matmul %103, %104, %cst_68 {dimension_numbers = #tpu.dot_dimension_numbers<[1], [0], [0], [1], [0, 0, 1, 1], [], []>} : vector<256x128xbf16>, vector<128x128xbf16>, vector<256x128xf32> -> vector<256x128xf32>
    %c0_69 = arith.constant 0 : index
    %c0_70 = arith.constant 0 : index
    %106 = vector.load %arg7[%c0_69, %c0_70] : memref<1x128xf32, #tpu.memory_space<vmem>>, vector<1x128xf32>
    %107 = vector.broadcast %106 : vector<1x128xf32> to vector<256x128xf32>
    %108 = arith.addf %105, %107 : vector<256x128xf32>
    %109 = arith.extf %1 : vector<256x128xbf16> to vector<256x128xf32>
    %110 = arith.addf %108, %109 : vector<256x128xf32>
    %cst_71 = arith.constant 0.000000e+00 : f32
    %111 = vector.broadcast %cst_71 : f32 to vector<256x128xf32>
    %112 = arith.maximumf %110, %111 : vector<256x128xf32>
    %113 = arith.truncf %112 : vector<256x128xf32> to vector<256x128xbf16>
    %c0_72 = arith.constant 0 : index
    %c0_73 = arith.constant 0 : index
    %c0_74 = arith.constant 0 : index
    %114 = vector.load %arg8[%c0_72, %c0_73, %c0_74] : memref<1x256x128xbf16, #tpu.memory_space<vmem>>, vector<1x256x128xbf16>
    %115 = vector.shape_cast %114 : vector<1x256x128xbf16> to vector<256x128xbf16>
    %116 = vector.shape_cast %113 : vector<256x128xbf16> to vector<1x256x128xbf16>
    tpu.vector_store %arg8[%c0_72, %c0_73, %c0_74], %116 {strides = array<i32>} : memref<1x256x128xbf16, #tpu.memory_space<vmem>>, vector<1x256x128xbf16>,
    return
  }
  func.func @transform_0(%arg0: i32) -> (i32, i32, i32) {
    %c0_i32 = arith.constant 0 : i32
    %c0_i32_0 = arith.constant 0 : i32
    %c0_i32_1 = arith.constant 0 : i32
    return %arg0, %c0_i32, %c0_i32_0 : i32, i32, i32
  }
  func.func @transform_1(%arg0: i32) -> (i32, i32) {
    %c0_i32 = arith.constant 0 : i32
    %c0_i32_0 = arith.constant 0 : i32
    %c0_i32_1 = arith.constant 0 : i32
    return %c0_i32, %c0_i32_0 : i32, i32
  }
  func.func @transform_2(%arg0: i32) -> (i32, i32) {
    %c0_i32 = arith.constant 0 : i32
    %c0_i32_0 = arith.constant 0 : i32
    %c0_i32_1 = arith.constant 0 : i32
    return %c0_i32, %c0_i32_0 : i32, i32
  }
  func.func @transform_3(%arg0: i32) -> (i32, i32, i32) {
    %c0_i32 = arith.constant 0 : i32
    %c0_i32_0 = arith.constant 0 : i32
    %c0_i32_1 = arith.constant 0 : i32
    %c0_i32_2 = arith.constant 0 : i32
    return %c0_i32, %c0_i32_0, %c0_i32_1 : i32, i32, i32
  }
  func.func @transform_4(%arg0: i32) -> (i32, i32) {
    %c0_i32 = arith.constant 0 : i32
    %c0_i32_0 = arith.constant 0 : i32
    %c0_i32_1 = arith.constant 0 : i32
    return %c0_i32, %c0_i32_0 : i32, i32
  }
  func.func @transform_5(%arg0: i32) -> (i32, i32) {
    %c0_i32 = arith.constant 0 : i32
    %c0_i32_0 = arith.constant 0 : i32
    %c0_i32_1 = arith.constant 0 : i32
    return %c0_i32, %c0_i32_0 : i32, i32
  }
  func.func @transform_6(%arg0: i32) -> (i32, i32) {
    %c0_i32 = arith.constant 0 : i32
    %c0_i32_0 = arith.constant 0 : i32
    %c0_i32_1 = arith.constant 0 : i32
    return %c0_i32, %c0_i32_0 : i32, i32
  }
  func.func @transform_7(%arg0: i32) -> (i32, i32, i32) {
    %c0_i32 = arith.constant 0 : i32
    %c0_i32_0 = arith.constant 0 : i32
    %c0_i32_1 = arith.constant 0 : i32
    return %arg0, %c0_i32, %c0_i32_0 : i32, i32, i32
  }
}

</mosaic_0001>

<llo_original>
// kernel: tpu_custom_call.1
$region0: #{tpu_custom_call.1}
  #allocation0 [shape = 'u32[]', space=smem, size = 0x4, offset = 0x4, fixed_abs, tag = 'smem constant byte address 0x4 - core index']
  #allocation1 [shape = 'u32[144,128]{1,0:T(1,128)}', space=vmem, size = 0x12000, scoped, tag = 'internal scratch']
  #allocation2 [shape = 'bf16[304,128]{1,0:T(16,128)(2,1)}', space=vmem, size = 0x13000, scoped, tag = 'scratch operand']
  %s0 = inlined_call_operand.hbm [shape: bf16[2,256,128], index: 0, kind: input, shape index: {}]
  %s1 = inlined_call_operand.hbm [shape: bf16[128,128], index: 1, kind: input, shape index: {}]
  %s2 = inlined_call_operand.vmem [shape: f32[1,128], index: 2, kind: input, shape index: {}]
  %s3 = inlined_call_operand.hbm [shape: bf16[9,128,128], index: 3, kind: input, shape index: {}]
  %s4 = inlined_call_operand.vmem [shape: f32[1,128], index: 4, kind: input, shape index: {}]
  %s5 = inlined_call_operand.hbm [shape: bf16[128,128], index: 5, kind: input, shape index: {}]
  %s6 = inlined_call_operand.vmem [shape: f32[1,128], index: 6, kind: input, shape index: {}]
  %s7 = inlined_call_operand.hbm [shape: bf16[2,256,128], index: 7, kind: output, shape index: {}]
  %s8 = sld [smem:[#allocation0]]
  $region77: #{tpu_custom_call.1} parent=0
    _
  %s10 = ssub.s32 1, %s8
  %s11 = scalar_select 0, %s10, %s8
  $region1: #{tpu_custom_call.1} parent=0
    #allocation3 [shape = 'u8[131072]{0}', space=vmem, size = 0x20000, scoped, tag = 'input window, operand 0']
    #allocation4 [shape = 's32[2]{0}', space=sflag, size = 0x8, scoped, tag = 'scoped memory for tpu_custom_call.1']
    #allocation5 [shape = 's32[2]{0}', space=sflag, size = 0x8, scoped, tag = 'scoped memory for tpu_custom_call.1']
    #allocation6 [shape = 'u8[32768]{0}', space=vmem, size = 0x8000, scoped, tag = 'input window, operand 1, single buffered']
    #allocation7 [shape = 's32[1]{0}', space=sflag, size = 0x4, scoped, tag = 'scoped memory for tpu_custom_call.1']
    #allocation8 [shape = 'u8[294912]{0}', space=vmem, size = 0x48000, scoped, tag = 'input window, operand 3, single buffered']
    #allocation9 [shape = 'u8[32768]{0}', space=vmem, size = 0x8000, scoped, tag = 'input window, operand 5, single buffered']
    #allocation10 [shape = 's32[1]{0}', space=sflag, size = 0x4, scoped, tag = 'scoped memory for tpu_custom_call.1']
    #allocation11 [shape = 'u8[131072]{0}', space=vmem, size = 0x20000, scoped, tag = 'output window, operand 0']
    %12 = vsyncpa [#allocation4], 0
    %s13 = scalar_lea.sflag [#allocation4], 1
    %14 = vsyncpa %s13, 0
    %15 = vsyncpa [#allocation7], 0
    %16 = vsyncpa [#allocation10], 0
    %17 = vsyncpa [#allocation5], 0
    %s18 = scalar_lea.sflag [#allocation5], 1
    %19 = vsyncpa %s18, 0
    loop: start=0, step=1, limit=4
    $region2: #{tpu_custom_call.1} parent=1 // loop_pre_header
      _
    $region3: #{tpu_custom_call.1} parent=1 // loop_header
      %s21 = sphi 0, %s25
      %p22 = scmp.ge.s32.totalorder %s21, 4
      %s31 = sphi 0, %s33
      %s34 = sphi 0, %s31
      %s35 = sphi 0, %s34
      %s51 = sphi 0, %s35
      %s55 = sphi 0, %s55
      %s57 = sphi 0, %s55
      %s58 = sphi 0, %s57
      %s72 = sphi 0, %s58
      %s76 = sphi 0, %s76
      %s78 = sphi 0, %s76
      %s79 = sphi 0, %s78
      %s93 = sphi 0, %s79
      %s97 = sphi 0, %s97
      %s99 = sphi 0, %s97
      %s100 = sphi 0, %s99
      %s114 = sphi 0, %s100
      %s118 = sphi 0, %s118
      %s120 = sphi 0, %s118
      %s121 = sphi 0, %s120
      %s135 = sphi 0, %s121
      %s139 = sphi 0, %s139
      %s141 = sphi 0, %s139
      %s142 = sphi 0, %s141
      %s156 = sphi 0, %s142
      %s160 = sphi 0, %s160
      %s162 = sphi 0, %s160
      %s163 = sphi 0, %s162
      %s177 = sphi 0, %s163
      %s183 = sphi 0, %s185
      %s186 = sphi 0, %s183
      %s187 = sphi 0, %s186
      %s203 = sphi 0, %s187
    $region4: #{tpu_custom_call.1} parent=1 // loop_header_branch
      %24 = sbr.rel (%p22) target = $region8
    $region5: #{tpu_custom_call.1} parent=1 // loop_body
      %s26 = ssub.s32 %s21, 1
      %s27 = ssub.s32 %s21, 2
      %s28 = sadd.s32 %s21, 1
      %s29 = ssub.s32 %s21, %s28
      %p30 = scmp.eq.s32.totalorder %s29, 0
      %s32 = sadd.s32 %s31, 1
      %s33 = scalar_select %p30, %s31, %s32
      %p36 = pneg %p30
      %p37 = scmp.eq.s32.totalorder %s21, 1
      %p38 = por %p36, %p37
      %p39 = scmp.ne.s32.totalorder %s31, %s34
      %p40 = scmp.eq.s32.totalorder %s21, 0
      %p41 = por %p39, %p40
      %p42 = scmp.ne.s32.totalorder %s31, %s34
      %p43 = scmp.eq.s32.totalorder %s26, 1
      %p44 = por %p42, %p43
      %p45 = scmp.ne.s32.totalorder %s34, %s35
      %p46 = scmp.eq.s32.totalorder %s26, 0
      %p47 = por %p45, %p46
      %p48 = scmp.ne.s32.totalorder %s34, %s35
      %p49 = scmp.eq.s32.totalorder %s27, 1
      %p50 = por %p48, %p49
      %p52 = scmp.ne.s32.totalorder %s35, %s51
      %p53 = scmp.eq.s32.totalorder %s27, 0
      %p54 = por %p52, %p53
      %s56 = sadd.s32 %s55, 1
      %p59 = scmp.eq.s32.totalorder %s21, 1
      %p60 = scmp.ne.s32.totalorder %s55, %s57
      %p61 = scmp.eq.s32.totalorder %s21, 0
      %p62 = por %p60, %p61
      %p63 = scmp.ne.s32.totalorder %s55, %s57
      %p64 = scmp.eq.s32.totalorder %s26, 1
      %p65 = por %p63, %p64
      %p66 = scmp.ne.s32.totalorder %s57, %s58
      %p67 = scmp.eq.s32.totalorder %s26, 0
      %p68 = por %p66, %p67
      %p69 = scmp.ne.s32.totalorder %s57, %s58
      %p70 = scmp.eq.s32.totalorder %s27, 1
      %p71 = por %p69, %p70
      %p73 = scmp.ne.s32.totalorder %s58, %s72
      %p74 = scmp.eq.s32.totalorder %s27, 0
      %p75 = por %p73, %p74
      %s77 = sadd.s32 %s76, 1
      %p80 = scmp.eq.s32.totalorder %s21, 1
      %p81 = scmp.ne.s32.totalorder %s76, %s78
      %p82 = scmp.eq.s32.totalorder %s21, 0
      %p83 = por %p81, %p82
      %p84 = scmp.ne.s32.totalorder %s76, %s78
      %p85 = scmp.eq.s32.totalorder %s26, 1
      %p86 = por %p84, %p85
      %p87 = scmp.ne.s32.totalorder %s78, %s79
      %p88 = scmp.eq.s32.totalorder %s26, 0
      %p89 = por %p87, %p88
      %p90 = scmp.ne.s32.totalorder %s78, %s79
      %p91 = scmp.eq.s32.totalorder %s27, 1
      %p92 = por %p90, %p91
      %p94 = scmp.ne.s32.totalorder %s79, %s93
      %p95 = scmp.eq.s32.totalorder %s27, 0
      %p96 = por %p94, %p95
      %s98 = sadd.s32 %s97, 1
      %p101 = scmp.eq.s32.totalorder %s21, 1
      %p102 = scmp.ne.s32.totalorder %s97, %s99
      %p103 = scmp.eq.s32.totalorder %s21, 0
      %p104 = por %p102, %p103
      %p105 = scmp.ne.s32.totalorder %s97, %s99
      %p106 = scmp.eq.s32.totalorder %s26, 1
      %p107 = por %p105, %p106
      %p108 = scmp.ne.s32.totalorder %s99, %s100
      %p109 = scmp.eq.s32.totalorder %s26, 0
      %p110 = por %p108, %p109
      %p111 = scmp.ne.s32.totalorder %s99, %s100
      %p112 = scmp.eq.s32.totalorder %s27, 1
      %p113 = por %p111, %p112
      %p115 = scmp.ne.s32.totalorder %s100, %s114
      %p116 = scmp.eq.s32.totalorder %s27, 0
      %p117 = por %p115, %p116
      %s119 = sadd.s32 %s118, 1
      %p122 = scmp.eq.s32.totalorder %s21, 1
      %p123 = scmp.ne.s32.totalorder %s118, %s120
      %p124 = scmp.eq.s32.totalorder %s21, 0
      %p125 = por %p123, %p124
      %p126 = scmp.ne.s32.totalorder %s118, %s120
      %p127 = scmp.eq.s32.totalorder %s26, 1
      %p128 = por %p126, %p127
      %p129 = scmp.ne.s32.totalorder %s120, %s121
      %p130 = scmp.eq.s32.totalorder %s26, 0
      %p131 = por %p129, %p130
      %p132 = scmp.ne.s32.totalorder %s120, %s121
      %p133 = scmp.eq.s32.totalorder %s27, 1
      %p134 = por %p132, %p133
      %p136 = scmp.ne.s32.totalorder %s121, %s135
      %p137 = scmp.eq.s32.totalorder %s27, 0
      %p138 = por %p136, %p137
      %s140 = sadd.s32 %s139, 1
      %p143 = scmp.eq.s32.totalorder %s21, 1
      %p144 = scmp.ne.s32.totalorder %s139, %s141
      %p145 = scmp.eq.s32.totalorder %s21, 0
      %p146 = por %p144, %p145
      %p147 = scmp.ne.s32.totalorder %s139, %s141
      %p148 = scmp.eq.s32.totalorder %s26, 1
      %p149 = por %p147, %p148
      %p150 = scmp.ne.s32.totalorder %s141, %s142
      %p151 = scmp.eq.s32.totalorder %s26, 0
      %p152 = por %p150, %p151
      %p153 = scmp.ne.s32.totalorder %s141, %s142
      %p154 = scmp.eq.s32.totalorder %s27, 1
      %p155 = por %p153, %p154
      %p157 = scmp.ne.s32.totalorder %s142, %s156
      %p158 = scmp.eq.s32.totalorder %s27, 0
      %p159 = por %p157, %p158
      %s161 = sadd.s32 %s160, 1
      %p164 = scmp.eq.s32.totalorder %s21, 1
      %p165 = scmp.ne.s32.totalorder %s160, %s162
      %p166 = scmp.eq.s32.totalorder %s21, 0
      %p167 = por %p165, %p166
      %p168 = scmp.ne.s32.totalorder %s160, %s162
      %p169 = scmp.eq.s32.totalorder %s26, 1
      %p170 = por %p168, %p169
      %p171 = scmp.ne.s32.totalorder %s162, %s163
      %p172 = scmp.eq.s32.totalorder %s26, 0
      %p173 = por %p171, %p172
      %p174 = scmp.ne.s32.totalorder %s162, %s163
      %p175 = scmp.eq.s32.totalorder %s27, 1
      %p176 = por %p174, %p175
      %p178 = scmp.ne.s32.totalorder %s163, %s177
      %p179 = scmp.eq.s32.totalorder %s27, 0
      %p180 = por %p178, %p179
      %s181 = ssub.s32 %s21, %s28
      %p182 = scmp.eq.s32.totalorder %s181, 0
      %s184 = sadd.s32 %s183, 1
      %s185 = scalar_select %p182, %s183, %s184
      %p188 = pneg %p182
      %p189 = scmp.eq.s32.totalorder %s21, 1
      %p190 = por %p188, %p189
      %p191 = scmp.ne.s32.totalorder %s183, %s186
      %p192 = scmp.eq.s32.totalorder %s21, 0
      %p193 = por %p191, %p192
      %p194 = scmp.ne.s32.totalorder %s183, %s186
      %p195 = scmp.eq.s32.totalorder %s26, 1
      %p196 = por %p194, %p195
      %p197 = scmp.ne.s32.totalorder %s186, %s187
      %p198 = scmp.eq.s32.totalorder %s26, 0
      %p199 = por %p197, %p198
      %p200 = scmp.ne.s32.totalorder %s186, %s187
      %p201 = scmp.eq.s32.totalorder %s27, 1
      %p202 = por %p200, %p201
      %p204 = scmp.ne.s32.totalorder %s187, %s203
      %p205 = scmp.eq.s32.totalorder %s27, 0
      %p206 = por %p204, %p205
      %p207 = scmp.le.s32.totalorder 1, %s21
      %p208 = scmp.lt.s32.totalorder %s21, 3
      %p209 = pnand %p207, %p208
      %p210 = pneg %p209
      // Predicated region
      $region9: #{tpu_custom_call.1} parent=5 // pred_check
        _
      $region10: #{tpu_custom_call.1} parent=5 // pred_check_branch
        %212 = sbr.rel (%p209) target = $region12
      $region11: #{tpu_custom_call.1} parent=5 // pred_region
        %s213 = ssub.s32 %s21, 1
        // Predicated region
        $region13: #{tpu_custom_call.1} parent=11 // pred_check
          %p214 = pneg %p68
        $region14: #{tpu_custom_call.1} parent=11 // pred_check_branch
          %216 = sbr.rel (%p214) target = $region16
        $region15: #{tpu_custom_call.1} parent=11 // pred_region
          %s218 = ssub.s32 1024, 1024
          %219 = vsyncadd [#allocation7], %s218
          %s220 = sshll.u32 [#allocation6], 4
          %s221 = int_to_ptr.vmem [resolvable:$true] %s220
          %226 = dma.hbm_to_vmem [thread:$0]  %s1, 1024, %s221, [#allocation7], 64, 64, 4
        $region16: #{tpu_custom_call.1} parent=11 // pred_fallthru
          _
        // Predicated region
        $region17: #{tpu_custom_call.1} parent=11 // pred_check
          %p227 = pneg %p89
        $region18: #{tpu_custom_call.1} parent=11 // pred_check_branch
          %229 = sbr.rel (%p227) target = $region20
        $region19: #{tpu_custom_call.1} parent=11 // pred_region
          _
        $region20: #{tpu_custom_call.1} parent=11 // pred_fallthru
          _
        // Predicated region
        $region21: #{tpu_custom_call.1} parent=11 // pred_check
          %p230 = pneg %p110
        $region22: #{tpu_custom_call.1} parent=11 // pred_check_branch
          %232 = sbr.rel (%p230) target = $region24
        $region23: #{tpu_custom_call.1} parent=11 // pred_region
          %s234 = ssub.s32 9216, 9216
          %235 = vsyncadd [#allocation7], %s234
          %s236 = sshll.u32 [#allocation8], 4
          %s237 = int_to_ptr.vmem [resolvable:$true] %s236
          %242 = dma.hbm_to_vmem [thread:$0]  %s3, 9216, %s237, [#allocation7], 64, 64, 4
        $region24: #{tpu_custom_call.1} parent=11 // pred_fallthru
          _
        // Predicated region
        $region25: #{tpu_custom_call.1} parent=11 // pred_check
          %p243 = pneg %p131
        $region26: #{tpu_custom_call.1} parent=11 // pred_check_branch
          %245 = sbr.rel (%p243) target = $region28
        $region27: #{tpu_custom_call.1} parent=11 // pred_region
          _
        $region28: #{tpu_custom_call.1} parent=11 // pred_fallthru
          _
        // Predicated region
        $region29: #{tpu_custom_call.1} parent=11 // pred_check
          %p246 = pneg %p152
        $region30: #{tpu_custom_call.1} parent=11 // pred_check_branch
          %248 = sbr.rel (%p246) target = $region32
        $region31: #{tpu_custom_call.1} parent=11 // pred_region
          %s250 = ssub.s32 1024, 1024
          %251 = vsyncadd [#allocation10], %s250
          %s252 = sshll.u32 [#allocation9], 4
          %s253 = int_to_ptr.vmem [resolvable:$true] %s252
          %258 = dma.hbm_to_vmem [thread:$0]  %s5, 1024, %s253, [#allocation10], 64, 64, 4
        $region32: #{tpu_custom_call.1} parent=11 // pred_fallthru
          _
        // Predicated region
        $region33: #{tpu_custom_call.1} parent=11 // pred_check
          %p259 = pneg %p173
        $region34: #{tpu_custom_call.1} parent=11 // pred_check_branch
          %261 = sbr.rel (%p259) target = $region36
        $region35: #{tpu_custom_call.1} parent=11 // pred_region
          _
        $region36: #{tpu_custom_call.1} parent=11 // pred_fallthru
          _
      $region12: #{tpu_custom_call.1} parent=5 // pred_fallthru
        _
      %p262 = scmp.lt.s32.totalorder %s21, 2
      // Predicated region
      $region37: #{tpu_custom_call.1} parent=5 // pred_check
        %p263 = pneg %p262
      $region38: #{tpu_custom_call.1} parent=5 // pred_check_branch
        %265 = sbr.rel (%p263) target = $region40
      $region39: #{tpu_custom_call.1} parent=5 // pred_region
        // Predicated region
        $region41: #{tpu_custom_call.1} parent=39 // pred_check
          %p266 = pneg %p41
        $region42: #{tpu_custom_call.1} parent=39 // pred_check_branch
          %268 = sbr.rel (%p266) target = $region44
        $region43: #{tpu_custom_call.1} parent=39 // pred_region
          %s269 = sand.u32 %s31, 1
          %s270 = scalar_lea.sflag [#allocation4], %s269
          %s271 = sand.u32 %s31, 1
          %s272 = smul.addr %s271, 128
          %s273 = scalar_lea.vmem [#allocation3], %s272
          %s275 = ssub.s32 2048, 2048
          %276 = vsyncadd %s270, %s275
          %s277 = smul.addr %s21, 32
          %s278 = smul.addr %s277, 64
          %s279 = scalar_lea.hbm %s0, %s278
          %s280 = sshll.u32 %s273, 4
          %s281 = int_to_ptr.vmem [resolvable:$true] %s280
          %286 = dma.hbm_to_vmem [thread:$0]  %s279, 2048, %s281, %s270, 64, 64, 4
        $region44: #{tpu_custom_call.1} parent=39 // pred_fallthru
          _
      $region40: #{tpu_custom_call.1} parent=5 // pred_fallthru
        _
      %p287 = scmp.le.s32.totalorder 1, %s21
      %p288 = scmp.lt.s32.totalorder %s21, 3
      %p289 = pnand %p287, %p288
      %p290 = pneg %p289
      // Predicated region
      $region45: #{tpu_custom_call.1} parent=5 // pred_check
        _
      $region46: #{tpu_custom_call.1} parent=5 // pred_check_branch
        %292 = sbr.rel (%p289) target = $region48
      $region47: #{tpu_custom_call.1} parent=5 // pred_region
        %s293 = ssub.s32 %s21, 1
        %s294 = sand.u32 %s34, 1
        %s295 = scalar_lea.sflag [#allocation4], %s294
        %s296 = sand.u32 %s34, 1
        %s297 = smul.addr %s296, 128
        %s298 = scalar_lea.vmem [#allocation3], %s297
        // Predicated region
        $region49: #{tpu_custom_call.1} parent=47 // pred_check
          %p299 = pneg %p47
        $region50: #{tpu_custom_call.1} parent=47 // pred_check_branch
          %301 = sbr.rel (%p299) target = $region52
        $region51: #{tpu_custom_call.1} parent=47 // pred_region
          %302 = dma.done %s295, 2048
        $region52: #{tpu_custom_call.1} parent=47 // pred_fallthru
          _
        // Predicated region
        $region53: #{tpu_custom_call.1} parent=47 // pred_check
          %p303 = pneg %p68
        $region54: #{tpu_custom_call.1} parent=47 // pred_check_branch
          %305 = sbr.rel (%p303) target = $region56
        $region55: #{tpu_custom_call.1} parent=47 // pred_region
          %306 = dma.done [#allocation7], 1024
        $region56: #{tpu_custom_call.1} parent=47 // pred_fallthru
          _
        // Predicated region
        $region57: #{tpu_custom_call.1} parent=47 // pred_check
          %p307 = pneg %p110
        $region58: #{tpu_custom_call.1} parent=47 // pred_check_branch
          %309 = sbr.rel (%p307) target = $region60
        $region59: #{tpu_custom_call.1} parent=47 // pred_region
          %310 = dma.done [#allocation7], 9216
        $region60: #{tpu_custom_call.1} parent=47 // pred_fallthru
          _
        // Predicated region
        $region61: #{tpu_custom_call.1} parent=47 // pred_check
          %p311 = pneg %p152
        $region62: #{tpu_custom_call.1} parent=47 // pred_check_branch
          %313 = sbr.rel (%p311) target = $region64
        $region63: #{tpu_custom_call.1} parent=47 // pred_region
          %314 = dma.done [#allocation10], 1024
        $region64: #{tpu_custom_call.1} parent=47 // pred_fallthru
          _
        %s315 = sand.u32 %s34, 1
        %s316 = scalar_lea.sflag [#allocation4], %s315
        %s317 = sand.u32 %s34, 1
        %s318 = smul.addr %s317, 128
        %s319 = scalar_lea.vmem [#allocation3], %s318
        %p320 = pneg %p47
        %p321 = pneg %p44
        %p322 = pneg %p68
        %p323 = pneg %p65
        %p324 = pneg %p89
        %p325 = pneg %p86
        %p326 = pneg %p110
        %p327 = pneg %p107
        %p328 = pneg %p131
        %p329 = pneg %p128
        %p330 = pneg %p152
        %p331 = pneg %p149
        %p332 = pneg %p173
        %p333 = pneg %p170
        %p334 = pneg %p199
        %p335 = pneg %p196
        %s336 = sand.u32 %s186, 1
        %s337 = scalar_lea.sflag [#allocation5], %s336
        %s338 = sand.u32 %s186, 1
        %s339 = smul.addr %s338, 128
        %s340 = scalar_lea.vmem [#allocation11], %s339
        %v344 = vld [vmem:[%s298] sm:$0xf]
        %v345 = vld [vmem:[%s298 + $0x4] sm:$0xf]
        %v346 = vld [vmem:[%s298 + $0x8] sm:$0xf]
        %v347 = vld [vmem:[%s298 + $0xc] sm:$0xf]
        %v348 = vld [vmem:[%s298 + $0x10] sm:$0xf]
        %v349 = vld [vmem:[%s298 + $0x14] sm:$0xf]
        %v350 = vld [vmem:[%s298 + $0x18] sm:$0xf]
        %v351 = vld [vmem:[%s298 + $0x1c] sm:$0xf]
        %v352 = vld [vmem:[%s298 + $0x20] sm:$0xf]
        %v353 = vld [vmem:[%s298 + $0x24] sm:$0xf]
        %v354 = vld [vmem:[%s298 + $0x28] sm:$0xf]
        %v355 = vld [vmem:[%s298 + $0x2c] sm:$0xf]
        %v356 = vld [vmem:[%s298 + $0x30] sm:$0xf]
        %v357 = vld [vmem:[%s298 + $0x34] sm:$0xf]
        %v358 = vld [vmem:[%s298 + $0x38] sm:$0xf]
        %v359 = vld [vmem:[%s298 + $0x3c] sm:$0xf]
        %v360 = vld [vmem:[%s298 + $0x40] sm:$0xf]
        %v361 = vld [vmem:[%s298 + $0x44] sm:$0xf]
        %v362 = vld [vmem:[%s298 + $0x48] sm:$0xf]
        %v363 = vld [vmem:[%s298 + $0x4c] sm:$0xf]
        %v364 = vld [vmem:[%s298 + $0x50] sm:$0xf]
        %v365 = vld [vmem:[%s298 + $0x54] sm:$0xf]
        %v366 = vld [vmem:[%s298 + $0x58] sm:$0xf]
        %v367 = vld [vmem:[%s298 + $0x5c] sm:$0xf]
        %v368 = vld [vmem:[%s298 + $0x60] sm:$0xf]
        %v369 = vld [vmem:[%s298 + $0x64] sm:$0xf]
        %v370 = vld [vmem:[%s298 + $0x68] sm:$0xf]
        %v371 = vld [vmem:[%s298 + $0x6c] sm:$0xf]
        %v372 = vld [vmem:[%s298 + $0x70] sm:$0xf]
        %v373 = vld [vmem:[%s298 + $0x74] sm:$0xf]
        %v374 = vld [vmem:[%s298 + $0x78] sm:$0xf]
        %v375 = vld [vmem:[%s298 + $0x7c] sm:$0xf]
        %v376 = vld [vmem:[#allocation6] sm:$0xf]
        %v377 = vld [vmem:[#allocation6 + $0x4] sm:$0xf]
        %v378 = vld [vmem:[#allocation6 + $0x8] sm:$0xf]
        %v379 = vld [vmem:[#allocation6 + $0xc] sm:$0xf]
        %v380 = vld [vmem:[#allocation6 + $0x10] sm:$0xf]
        %v381 = vld [vmem:[#allocation6 + $0x14] sm:$0xf]
        %v382 = vld [vmem:[#allocation6 + $0x18] sm:$0xf]
        %v383 = vld [vmem:[#allocation6 + $0x1c] sm:$0xf]
        %v384 = vld [vmem:[#allocation6 + $0x20] sm:$0xf]
        %v385 = vld [vmem:[#allocation6 + $0x24] sm:$0xf]
        %v386 = vld [vmem:[#allocation6 + $0x28] sm:$0xf]
        %v387 = vld [vmem:[#allocation6 + $0x2c] sm:$0xf]
        %v388 = vld [vmem:[#allocation6 + $0x30] sm:$0xf]
        %v389 = vld [vmem:[#allocation6 + $0x34] sm:$0xf]
        %v390 = vld [vmem:[#allocation6 + $0x38] sm:$0xf]
        %v391 = vld [vmem:[#allocation6 + $0x3c] sm:$0xf]
        %v392 = vld [vmem:[%s2] sm:$0x1]
        %v394 = vlaneseq
        %v395 = vshrl.u32 %v394, 7
        %v396 = vsub.s32 0, %v395
        %v397 = vrot.slane %v392, %v396
        %v431 = vunpack.c.l.b16 %v344
        %v432 = vunpack.c.l.b16 %v345
        %v433 = vunpack.c.l.b16 %v346
        %v434 = vunpack.c.l.b16 %v347
        %v435 = vunpack.c.l.b16 %v348
        %v436 = vunpack.c.l.b16 %v349
        %v437 = vunpack.c.l.b16 %v350
        %v438 = vunpack.c.l.b16 %v351
        %v439 = vunpack.c.l.b16 %v352
        %v440 = vunpack.c.l.b16 %v353
        %v441 = vunpack.c.l.b16 %v354
        %v442 = vunpack.c.l.b16 %v355
        %v443 = vunpack.c.l.b16 %v356
        %v444 = vunpack.c.l.b16 %v357
        %v445 = vunpack.c.l.b16 %v358
        %v446 = vunpack.c.l.b16 %v359
        %v447 = vunpack.c.l.b16 %v360
        %v448 = vunpack.c.l.b16 %v361
        %v449 = vunpack.c.l.b16 %v362
        %v450 = vunpack.c.l.b16 %v363
        %v451 = vunpack.c.l.b16 %v364
        %v452 = vunpack.c.l.b16 %v365
        %v453 = vunpack.c.l.b16 %v366
        %v454 = vunpack.c.l.b16 %v367
        %v455 = vunpack.c.l.b16 %v368
        %v456 = vunpack.c.l.b16 %v369
        %v457 = vunpack.c.l.b16 %v370
        %v458 = vunpack.c.l.b16 %v371
        %v459 = vunpack.c.l.b16 %v372
        %v460 = vunpack.c.l.b16 %v373
        %v461 = vunpack.c.l.b16 %v374
        %v462 = vunpack.c.l.b16 %v375
        %v463 = vpack.c.b16 %v432, %v431
        %v464 = vpack.c.b16 %v434, %v433
        %v465 = vpack.c.b16 %v436, %v435
        %v466 = vpack.c.b16 %v438, %v437
        %v467 = vpack.c.b16 %v440, %v439
        %v468 = vpack.c.b16 %v442, %v441
        %v469 = vpack.c.b16 %v444, %v443
        %v470 = vpack.c.b16 %v446, %v445
        %v471 = vpack.c.b16 %v448, %v447
        %v472 = vpack.c.b16 %v450, %v449
        %v473 = vpack.c.b16 %v452, %v451
        %v474 = vpack.c.b16 %v454, %v453
        %v475 = vpack.c.b16 %v456, %v455
        %v476 = vpack.c.b16 %v458, %v457
        %v477 = vpack.c.b16 %v460, %v459
        %v478 = vpack.c.b16 %v462, %v461
        %v511 = vunpack.c.l.b16 %v376
        %v512 = vunpack.c.l.b16 %v377
        %v513 = vunpack.c.l.b16 %v378
        %v514 = vunpack.c.l.b16 %v379
        %v515 = vunpack.c.l.b16 %v380
        %v516 = vunpack.c.l.b16 %v381
        %v517 = vunpack.c.l.b16 %v382
        %v518 = vunpack.c.l.b16 %v383
        %v519 = vunpack.c.l.b16 %v384
        %v520 = vunpack.c.l.b16 %v385
        %v521 = vunpack.c.l.b16 %v386
        %v522 = vunpack.c.l.b16 %v387
        %v523 = vunpack.c.l.b16 %v388
        %v524 = vunpack.c.l.b16 %v389
        %v525 = vunpack.c.l.b16 %v390
        %v526 = vunpack.c.l.b16 %v391
        %v527 = vpack.c.b16 %v512, %v511
        %v528 = vpack.c.b16 %v514, %v513
        %v529 = vpack.c.b16 %v516, %v515
        %v530 = vpack.c.b16 %v518, %v517
        %v531 = vpack.c.b16 %v520, %v519
        %v532 = vpack.c.b16 %v522, %v521
        %v533 = vpack.c.b16 %v524, %v523
        %v534 = vpack.c.b16 %v526, %v525
        %543 = vmatprep.subr.bf16.mxu0 0
        %544 = vmatpush1.bf16.msra.mxu0 %v527
        %545 = vmatprep.subr.bf16.mxu0 0
        %546 = vmatpush1.bf16.msra.mxu0 %v528
        %547 = vmatprep.subr.bf16.mxu0 0
        %548 = vmatpush1.bf16.msra.mxu0 %v529
        %549 = vmatprep.subr.bf16.mxu0 0
        %550 = vmatpush1.bf16.msra.mxu0 %v530
        %551 = vmatprep.subr.bf16.mxu0 0
        %552 = vmatpush1.bf16.msra.mxu0 %v531
        %553 = vmatprep.subr.bf16.mxu0 0
        %554 = vmatpush1.bf16.msra.mxu0 %v532
        %555 = vmatprep.subr.bf16.mxu0 0
        %556 = vmatpush1.bf16.msra.mxu0 %v533
        %557 = vmatprep.subr.bf16.mxu0 0
        %558 = vmatpush1.bf16.msra.mxu0 %v534
        %559 = vmatprep.subr.bf16.mxu0 0
        %560 = vmatpush1.bf16.msra.mxu0 0
        %561 = vmatprep.subr.bf16.mxu0 0
        %562 = vmatpush1.bf16.msra.mxu0 0
        %563 = vmatprep.subr.bf16.mxu0 0
        %564 = vmatpush1.bf16.msra.mxu0 0
        %565 = vmatprep.subr.bf16.mxu0 0
        %566 = vmatpush1.bf16.msra.mxu0 0
        %567 = vmatprep.subr.bf16.mxu0 0
        %568 = vmatpush1.bf16.msra.mxu0 0
        %569 = vmatprep.subr.bf16.mxu0 0
        %570 = vmatpush1.bf16.msra.mxu0 0
        %571 = vmatprep.subr.bf16.mxu0 0
        %572 = vmatpush1.bf16.msra.mxu0 0
        %573 = vmatprep.subr.bf16.mxu0 0
        %574 = vmatpush1.bf16.msra.mxu0 0
        %575 = vmatprep.mubr.bf16.mxu0 0
        %576 = vmatmul.mubr.bf16.gmra.mrb[0].mxu0 %v463
        %v577 = vpop.f32.mrb[0].mxu0
        %v578 = vadd.f32 %v397, %v577
        %v579 = vpop.f32.mrb[0].mxu0
        %v580 = vpop.f32.mrb[0].mxu0
        %v581 = vadd.f32 %v397, %v580
        %v582 = vpop.f32.mrb[0].mxu0
        %583 = vmatprep.mubr.bf16.mxu0 0
        %584 = vmatmul.mubr.bf16.gmra.mrb[0].mxu0 %v464
        %v585 = vpop.f32.mrb[0].mxu0
        %v586 = vadd.f32 %v397, %v585
        %v587 = vpop.f32.mrb[0].mxu0
        %v588 = vpop.f32.mrb[0].mxu0
        %v589 = vadd.f32 %v397, %v588
        %v590 = vpop.f32.mrb[0].mxu0
        %591 = vmatprep.mubr.bf16.mxu0 0
        %592 = vmatmul.mubr.bf16.gmra.mrb[0].mxu0 %v465
        %v593 = vpop.f32.mrb[0].mxu0
        %v594 = vadd.f32 %v397, %v593
        %v595 = vpop.f32.mrb[0].mxu0
        %v596 = vpop.f32.mrb[0].mxu0
        %v597 = vadd.f32 %v397, %v596
        %v598 = vpop.f32.mrb[0].mxu0
        %599 = vmatprep.mubr.bf16.mxu0 0
        %600 = vmatmul.mubr.bf16.gmra.mrb[0].mxu0 %v466
        %v601 = vpop.f32.mrb[0].mxu0
        %v602 = vadd.f32 %v397, %v601
        %v603 = vpop.f32.mrb[0].mxu0
        %v604 = vpop.f32.mrb[0].mxu0
        %v605 = vadd.f32 %v397, %v604
        %v606 = vpop.f32.mrb[0].mxu0
        %607 = vmatprep.mubr.bf16.mxu0 0
        %608 = vmatmul.mubr.bf16.gmra.mrb[0].mxu0 %v467
        %v609 = vpop.f32.mrb[0].mxu0
        %v610 = vadd.f32 %v397, %v609
        %v611 = vpop.f32.mrb[0].mxu0
        %v612 = vpop.f32.mrb[0].mxu0
        %v613 = vadd.f32 %v397, %v612
        %v614 = vpop.f32.mrb[0].mxu0
        %615 = vmatprep.mubr.bf16.mxu0 0
        %616 = vmatmul.mubr.bf16.gmra.mrb[0].mxu0 %v468
        %v617 = vpop.f32.mrb[0].mxu0
        %v618 = vadd.f32 %v397, %v617
        %v619 = vpop.f32.mrb[0].mxu0
        %v620 = vpop.f32.mrb[0].mxu0
        %v621 = vadd.f32 %v397, %v620
        %v622 = vpop.f32.mrb[0].mxu0
        %623 = vmatprep.mubr.bf16.mxu0 0
        %624 = vmatmul.mubr.bf16.gmra.mrb[0].mxu0 %v469
        %v625 = vpop.f32.mrb[0].mxu0
        %v626 = vadd.f32 %v397, %v625
        %v627 = vpop.f32.mrb[0].mxu0
        %v628 = vpop.f32.mrb[0].mxu0
        %v629 = vadd.f32 %v397, %v628
        %v630 = vpop.f32.mrb[0].mxu0
        %631 = vmatprep.mubr.bf16.mxu0 0
        %632 = vmatmul.mubr.bf16.gmra.mrb[0].mxu0 %v470
        %v633 = vpop.f32.mrb[0].mxu0
        %v634 = vadd.f32 %v397, %v633
        %v635 = vpop.f32.mrb[0].mxu0
        %v636 = vpop.f32.mrb[0].mxu0
        %v637 = vadd.f32 %v397, %v636
        %v638 = vpop.f32.mrb[0].mxu0
        %639 = vmatprep.mubr.bf16.mxu0 0
        %640 = vmatmul.mubr.bf16.gmra.mrb[0].mxu0 %v471
        %v641 = vpop.f32.mrb[0].mxu0
        %v642 = vadd.f32 %v397, %v641
        %v643 = vpop.f32.mrb[0].mxu0
        %v644 = vpop.f32.mrb[0].mxu0
        %v645 = vadd.f32 %v397, %v644
        %v646 = vpop.f32.mrb[0].mxu0
        %647 = vmatprep.mubr.bf16.mxu0 0
        %648 = vmatmul.mubr.bf16.gmra.mrb[0].mxu0 %v472
        %v649 = vpop.f32.mrb[0].mxu0
        %v650 = vadd.f32 %v397, %v649
        %v651 = vpop.f32.mrb[0].mxu0
        %v652 = vpop.f32.mrb[0].mxu0
        %v653 = vadd.f32 %v397, %v652
        %v654 = vpop.f32.mrb[0].mxu0
        %655 = vmatprep.mubr.bf16.mxu0 0
        %656 = vmatmul.mubr.bf16.gmra.mrb[0].mxu0 %v473
        %v657 = vpop.f32.mrb[0].mxu0
        %v658 = vadd.f32 %v397, %v657
        %v659 = vpop.f32.mrb[0].mxu0
        %v660 = vpop.f32.mrb[0].mxu0
        %v661 = vadd.f32 %v397, %v660
        %v662 = vpop.f32.mrb[0].mxu0
        %663 = vmatprep.mubr.bf16.mxu0 0
        %664 = vmatmul.mubr.bf16.gmra.mrb[0].mxu0 %v474
        %v665 = vpop.f32.mrb[0].mxu0
        %v666 = vadd.f32 %v397, %v665
        %v667 = vpop.f32.mrb[0].mxu0
        %v668 = vpop.f32.mrb[0].mxu0
        %v669 = vadd.f32 %v397, %v668
        %v670 = vpop.f32.mrb[0].mxu0
        %671 = vmatprep.mubr.bf16.mxu0 0
        %672 = vmatmul.mubr.bf16.gmra.mrb[0].mxu0 %v475
        %v673 = vpop.f32.mrb[0].mxu0
        %v674 = vadd.f32 %v397, %v673
        %v675 = vpop.f32.mrb[0].mxu0
        %v676 = vpop.f32.mrb[0].mxu0
        %v677 = vadd.f32 %v397, %v676
        %v678 = vpop.f32.mrb[0].mxu0
        %679 = vmatprep.mubr.bf16.mxu0 0
        %680 = vmatmul.mubr.bf16.gmra.mrb[0].mxu0 %v476
        %v681 = vpop.f32.mrb[0].mxu0
        %v682 = vadd.f32 %v397, %v681
        %v683 = vpop.f32.mrb[0].mxu0
        %v684 = vpop.f32.mrb[0].mxu0
        %v685 = vadd.f32 %v397, %v684
        %v686 = vpop.f32.mrb[0].mxu0
        %687 = vmatprep.mubr.bf16.mxu0 0
        %688 = vmatmul.mubr.bf16.gmra.mrb[0].mxu0 %v477
        %v689 = vpop.f32.mrb[0].mxu0
        %v690 = vadd.f32 %v397, %v689
        %v691 = vpop.f32.mrb[0].mxu0
        %v692 = vpop.f32.mrb[0].mxu0
        %v693 = vadd.f32 %v397, %v692
        %v694 = vpop.f32.mrb[0].mxu0
        %695 = vmatprep.mubr.bf16.mxu0 0
        %696 = vmatmul.mubr.bf16.gmra.mrb[0].mxu0 %v478
        %v697 = vpop.f32.mrb[0].mxu0
        %v698 = vadd.f32 %v397, %v697
        %v699 = vpop.f32.mrb[0].mxu0
        %v700 = vpop.f32.mrb[0].mxu0
        %v701 = vadd.f32 %v397, %v700
        %v702 = vpop.f32.mrb[0].mxu0
        %703 = vdwg.mxu0
        %v704 = vmax.f32 %v578, 0.0
        %v705 = vmax.f32 %v581, 0.0
        %v706 = vmax.f32 %v586, 0.0
        %v707 = vmax.f32 %v589, 0.0
        %v708 = vmax.f32 %v594, 0.0
        %v709 = vmax.f32 %v597, 0.0
        %v710 = vmax.f32 %v602, 0.0
        %v711 = vmax.f32 %v605, 0.0
        %v712 = vmax.f32 %v610, 0.0
        %v713 = vmax.f32 %v613, 0.0
        %v714 = vmax.f32 %v618, 0.0
        %v715 = vmax.f32 %v621, 0.0
        %v716 = vmax.f32 %v626, 0.0
        %v717 = vmax.f32 %v629, 0.0
        %v718 = vmax.f32 %v634, 0.0
        %v719 = vmax.f32 %v637, 0.0
        %v720 = vmax.f32 %v642, 0.0
        %v721 = vmax.f32 %v645, 0.0
        %v722 = vmax.f32 %v650, 0.0
        %v723 = vmax.f32 %v653, 0.0
        %v724 = vmax.f32 %v658, 0.0
        %v725 = vmax.f32 %v661, 0.0
        %v726 = vmax.f32 %v666, 0.0
        %v727 = vmax.f32 %v669, 0.0
        %v728 = vmax.f32 %v674, 0.0
        %v729 = vmax.f32 %v677, 0.0
        %v730 = vmax.f32 %v682, 0.0
        %v731 = vmax.f32 %v685, 0.0
        %v732 = vmax.f32 %v690, 0.0
        %v733 = vmax.f32 %v693, 0.0
        %v734 = vmax.f32 %v698, 0.0
        %v735 = vmax.f32 %v701, 0.0
        %736 = vst [vmem:[#allocation2] sm:$0xff] 0
        %737 = vst [vmem:[#allocation2 + $0x8] sm:$0xf] 0
        %738 = vst [vmem:[#allocation2 + $0x88] sm:$0xf0] 0
        %739 = vst [vmem:[#allocation2 + $0x90] sm:$0xff] 0
        %v740 = vpack.c.bf16 %v705, %v704
        %v741 = vpack.c.bf16 %v707, %v706
        %v742 = vpack.c.bf16 %v709, %v708
        %v743 = vpack.c.bf16 %v711, %v710
        %v744 = vpack.c.bf16 %v713, %v712
        %v745 = vpack.c.bf16 %v715, %v714
        %v746 = vpack.c.bf16 %v717, %v716
        %v747 = vpack.c.bf16 %v719, %v718
        %v748 = vpack.c.bf16 %v721, %v720
        %v749 = vpack.c.bf16 %v723, %v722
        %v750 = vpack.c.bf16 %v725, %v724
        %v751 = vpack.c.bf16 %v727, %v726
        %v752 = vpack.c.bf16 %v729, %v728
        %v753 = vpack.c.bf16 %v731, %v730
        %v754 = vpack.c.bf16 %v733, %v732
        %v755 = vpack.c.bf16 %v735, %v734
        %vm772 = vcmask 1043456
        %v773 = vrot.slane %v740, 4
        %v774 = vrot.slane %v741, 4
        %v775 = vsel %vm772, %v773, %v774
        %v776 = vrot.slane %v742, 4
        %v777 = vsel %vm772, %v774, %v776
        %v778 = vrot.slane %v743, 4
        %v779 = vsel %vm772, %v776, %v778
        %v780 = vrot.slane %v744, 4
        %v781 = vsel %vm772, %v778, %v780
        %v782 = vrot.slane %v745, 4
        %v783 = vsel %vm772, %v780, %v782
        %v784 = vrot.slane %v746, 4
        %v785 = vsel %vm772, %v782, %v784
        %v786 = vrot.slane %v747, 4
        %v787 = vsel %vm772, %v784, %v786
        %v788 = vrot.slane %v748, 4
        %v789 = vsel %vm772, %v786, %v788
        %v790 = vrot.slane %v749, 4
        %v791 = vsel %vm772, %v788, %v790
        %v792 = vrot.slane %v750, 4
        %v793 = vsel %vm772, %v790, %v792
        %v794 = vrot.slane %v751, 4
        %v795 = vsel %vm772, %v792, %v794
        %v796 = vrot.slane %v752, 4
        %v797 = vsel %vm772, %v794, %v796
        %v798 = vrot.slane %v753, 4
        %v799 = vsel %vm772, %v796, %v798
        %v800 = vrot.slane %v754, 4
        %v801 = vsel %vm772, %v798, %v800
        %v802 = vrot.slane %v755, 4
        %v803 = vsel %vm772, %v800, %v802
        %821 = vst [vmem:[#allocation2 + $0x8] sm:$0xf0] %v773
        %822 = vst [vmem:[#allocation2 + $0x10] sm:$0xff] %v775
        %823 = vst [vmem:[#allocation2 + $0x18] sm:$0xff] %v777
        %824 = vst [vmem:[#allocation2 + $0x20] sm:$0xff] %v779
        %825 = vst [vmem:[#allocation2 + $0x28] sm:$0xff] %v781
        %826 = vst [vmem:[#allocation2 + $0x30] sm:$0xff] %v783
        %827 = vst [vmem:[#allocation2 + $0x38] sm:$0xff] %v785
        %828 = vst [vmem:[#allocation2 + $0x40] sm:$0xff] %v787
        %829 = vst [vmem:[#allocation2 + $0x48] sm:$0xff] %v789
        %830 = vst [vmem:[#allocation2 + $0x50] sm:$0xff] %v791
        %831 = vst [vmem:[#allocation2 + $0x58] sm:$0xff] %v793
        %832 = vst [vmem:[#allocation2 + $0x60] sm:$0xff] %v795
        %833 = vst [vmem:[#allocation2 + $0x68] sm:$0xff] %v797
        %834 = vst [vmem:[#allocation2 + $0x70] sm:$0xff] %v799
        %835 = vst [vmem:[#allocation2 + $0x78] sm:$0xff] %v801
        %836 = vst [vmem:[#allocation2 + $0x80] sm:$0xff] %v803
        %837 = vst [vmem:[#allocation2 + $0x88] sm:$0xf] %v802
        %v838 = vlaneseq
        %v839 = vshrl.u32 %v838, 7
        %v840 = vadd.s32 %v839, 8
        %v841 = vadd.s32 %v839, 16
        %v842 = vadd.s32 %v839, 24
        %v843 = vadd.s32 %v839, 32
        %v844 = vadd.s32 %v839, 40
        %v845 = vadd.s32 %v839, 48
        %v846 = vadd.s32 %v839, 56
        %v847 = vadd.s32 %v839, 64
        %v848 = vadd.s32 %v839, 72
        %v849 = vadd.s32 %v839, 80
        %v850 = vadd.s32 %v839, 88
        %v851 = vadd.s32 %v839, 96
        %v852 = vadd.s32 %v839, 104
        %v853 = vadd.s32 %v839, 112
        %v854 = vadd.s32 %v839, 120
        %v855 = vadd.s32 %v839, 128
        %v856 = vadd.s32 %v839, 136
        %v857 = vadd.s32 %v839, 144
        %v858 = vadd.s32 %v839, 152
        %v859 = vadd.s32 %v839, 160
        %v860 = vadd.s32 %v839, 168
        %v861 = vadd.s32 %v839, 176
        %v862 = vadd.s32 %v839, 184
        %v863 = vadd.s32 %v839, 192
        %v864 = vadd.s32 %v839, 200
        %v865 = vadd.s32 %v839, 208
        %v866 = vadd.s32 %v839, 216
        %v867 = vadd.s32 %v839, 224
        %v868 = vadd.s32 %v839, 232
        %v869 = vadd.s32 %v839, 240
        %v870 = vadd.s32 %v839, 248
        %vm871 = vcmp.lt.s32.totalorder %v839, 0
        %v872 = vsub.s32 0, %v839
        %v873 = vsel %vm871, %v872, %v839
        %v874 = vshrl.u32 %v873, 4
        %v875 = vand.u32 %v873, 15
        %v876 = vsub.s32 0, %v875
        %v877 = vsel %vm871, %v876, %v875
        %vm878 = vcmp.lt.s32.totalorder %v840, 0
        %v879 = vsub.s32 0, %v840
        %v880 = vsel %vm878, %v879, %v840
        %v881 = vshrl.u32 %v880, 4
        %v882 = vand.u32 %v880, 15
        %v883 = vsub.s32 0, %v882
        %v884 = vsel %vm878, %v883, %v882
        %vm885 = vcmp.lt.s32.totalorder %v841, 0
        %v886 = vsub.s32 0, %v841
        %v887 = vsel %vm885, %v886, %v841
        %v888 = vshrl.u32 %v887, 4
        %v889 = vand.u32 %v887, 15
        %v890 = vsub.s32 0, %v889
        %v891 = vsel %vm885, %v890, %v889
        %vm892 = vcmp.lt.s32.totalorder %v842, 0
        %v893 = vsub.s32 0, %v842
        %v894 = vsel %vm892, %v893, %v842
        %v895 = vshrl.u32 %v894, 4
        %v896 = vand.u32 %v894, 15
        %v897 = vsub.s32 0, %v896
        %v898 = vsel %vm892, %v897, %v896
        %vm899 = vcmp.lt.s32.totalorder %v843, 0
        %v900 = vsub.s32 0, %v843
        %v901 = vsel %vm899, %v900, %v843
        %v902 = vshrl.u32 %v901, 4
        %v903 = vand.u32 %v901, 15
        %v904 = vsub.s32 0, %v903
        %v905 = vsel %vm899, %v904, %v903
        %vm906 = vcmp.lt.s32.totalorder %v844, 0
        %v907 = vsub.s32 0, %v844
        %v908 = vsel %vm906, %v907, %v844
        %v909 = vshrl.u32 %v908, 4
        %v910 = vand.u32 %v908, 15
        %v911 = vsub.s32 0, %v910
        %v912 = vsel %vm906, %v911, %v910
        %vm913 = vcmp.lt.s32.totalorder %v845, 0
        %v914 = vsub.s32 0, %v845
        %v915 = vsel %vm913, %v914, %v845
        %v916 = vshrl.u32 %v915, 4
        %v917 = vand.u32 %v915, 15
        %v918 = vsub.s32 0, %v917
        %v919 = vsel %vm913, %v918, %v917
        %vm920 = vcmp.lt.s32.totalorder %v846, 0
        %v921 = vsub.s32 0, %v846
        %v922 = vsel %vm920, %v921, %v846
        %v923 = vshrl.u32 %v922, 4
        %v924 = vand.u32 %v922, 15
        %v925 = vsub.s32 0, %v924
        %v926 = vsel %vm920, %v925, %v924
        %vm927 = vcmp.lt.s32.totalorder %v847, 0
        %v928 = vsub.s32 0, %v847
        %v929 = vsel %vm927, %v928, %v847
        %v930 = vshrl.u32 %v929, 4
        %v931 = vand.u32 %v929, 15
        %v932 = vsub.s32 0, %v931
        %v933 = vsel %vm927, %v932, %v931
        %vm934 = vcmp.lt.s32.totalorder %v848, 0
        %v935 = vsub.s32 0, %v848
        %v936 = vsel %vm934, %v935, %v848
        %v937 = vshrl.u32 %v936, 4
        %v938 = vand.u32 %v936, 15
        %v939 = vsub.s32 0, %v938
        %v940 = vsel %vm934, %v939, %v938
        %vm941 = vcmp.lt.s32.totalorder %v849, 0
        %v942 = vsub.s32 0, %v849
        %v943 = vsel %vm941, %v942, %v849
        %v944 = vshrl.u32 %v943, 4
        %v945 = vand.u32 %v943, 15
        %v946 = vsub.s32 0, %v945
        %v947 = vsel %vm941, %v946, %v945
        %vm948 = vcmp.lt.s32.totalorder %v850, 0
        %v949 = vsub.s32 0, %v850
        %v950 = vsel %vm948, %v949, %v850
        %v951 = vshrl.u32 %v950, 4
        %v952 = vand.u32 %v950, 15
        %v953 = vsub.s32 0, %v952
        %v954 = vsel %vm948, %v953, %v952
        %vm955 = vcmp.lt.s32.totalorder %v851, 0
        %v956 = vsub.s32 0, %v851
        %v957 = vsel %vm955, %v956, %v851
        %v958 = vshrl.u32 %v957, 4
        %v959 = vand.u32 %v957, 15
        %v960 = vsub.s32 0, %v959
        %v961 = vsel %vm955, %v960, %v959
        %vm962 = vcmp.lt.s32.totalorder %v852, 0
        %v963 = vsub.s32 0, %v852
        %v964 = vsel %vm962, %v963, %v852
        %v965 = vshrl.u32 %v964, 4
        %v966 = vand.u32 %v964, 15
        %v967 = vsub.s32 0, %v966
        %v968 = vsel %vm962, %v967, %v966
        %vm969 = vcmp.lt.s32.totalorder %v853, 0
        %v970 = vsub.s32 0, %v853
        %v971 = vsel %vm969, %v970, %v853
        %v972 = vshrl.u32 %v971, 4
        %v973 = vand.u32 %v971, 15
        %v974 = vsub.s32 0, %v973
        %v975 = vsel %vm969, %v974, %v973
        %vm976 = vcmp.lt.s32.totalorder %v854, 0
        %v977 = vsub.s32 0, %v854
        %v978 = vsel %vm976, %v977, %v854
        %v979 = vshrl.u32 %v978, 4
        %v980 = vand.u32 %v978, 15
        %v981 = vsub.s32 0, %v980
        %v982 = vsel %vm976, %v981, %v980
        %vm983 = vcmp.lt.s32.totalorder %v855, 0
        %v984 = vsub.s32 0, %v855
        %v985 = vsel %vm983, %v984, %v855
        %v986 = vshrl.u32 %v985, 4
        %v987 = vand.u32 %v985, 15
        %v988 = vsub.s32 0, %v987
        %v989 = vsel %vm983, %v988, %v987
        %vm990 = vcmp.lt.s32.totalorder %v856, 0
        %v991 = vsub.s32 0, %v856
        %v992 = vsel %vm990, %v991, %v856
        %v993 = vshrl.u32 %v992, 4
        %v994 = vand.u32 %v992, 15
        %v995 = vsub.s32 0, %v994
        %v996 = vsel %vm990, %v995, %v994
        %vm997 = vcmp.lt.s32.totalorder %v857, 0
        %v998 = vsub.s32 0, %v857
        %v999 = vsel %vm997, %v998, %v857
        %v1000 = vshrl.u32 %v999, 4
        %v1001 = vand.u32 %v999, 15
        %v1002 = vsub.s32 0, %v1001
        %v1003 = vsel %vm997, %v1002, %v1001
        %vm1004 = vcmp.lt.s32.totalorder %v858, 0
        %v1005 = vsub.s32 0, %v858
        %v1006 = vsel %vm1004, %v1005, %v858
        %v1007 = vshrl.u32 %v1006, 4
        %v1008 = vand.u32 %v1006, 15
        %v1009 = vsub.s32 0, %v1008
        %v1010 = vsel %vm1004, %v1009, %v1008
        %vm1011 = vcmp.lt.s32.totalorder %v859, 0
        %v1012 = vsub.s32 0, %v859
        %v1013 = vsel %vm1011, %v1012, %v859
        %v1014 = vshrl.u32 %v1013, 4
        %v1015 = vand.u32 %v1013, 15
        %v1016 = vsub.s32 0, %v1015
        %v1017 = vsel %vm1011, %v1016, %v1015
        %vm1018 = vcmp.lt.s32.totalorder %v860, 0
        %v1019 = vsub.s32 0, %v860
        %v1020 = vsel %vm1018, %v1019, %v860
        %v1021 = vshrl.u32 %v1020, 4
        %v1022 = vand.u32 %v1020, 15
        %v1023 = vsub.s32 0, %v1022
        %v1024 = vsel %vm1018, %v1023, %v1022
        %vm1025 = vcmp.lt.s32.totalorder %v861, 0
        %v1026 = vsub.s32 0, %v861
        %v1027 = vsel %vm1025, %v1026, %v861
        %v1028 = vshrl.u32 %v1027, 4
        %v1029 = vand.u32 %v1027, 15
        %v1030 = vsub.s32 0, %v1029
        %v1031 = vsel %vm1025, %v1030, %v1029
        %vm1032 = vcmp.lt.s32.totalorder %v862, 0
        %v1033 = vsub.s32 0, %v862
        %v1034 = vsel %vm1032, %v1033, %v862
        %v1035 = vshrl.u32 %v1034, 4
        %v1036 = vand.u32 %v1034, 15
        %v1037 = vsub.s32 0, %v1036
        %v1038 = vsel %vm1032, %v1037, %v1036
        %vm1039 = vcmp.lt.s32.totalorder %v863, 0
        %v1040 = vsub.s32 0, %v863
        %v1041 = vsel %vm1039, %v1040, %v863
        %v1042 = vshrl.u32 %v1041, 4
        %v1043 = vand.u32 %v1041, 15
        %v1044 = vsub.s32 0, %v1043
        %v1045 = vsel %vm1039, %v1044, %v1043
        %vm1046 = vcmp.lt.s32.totalorder %v864, 0
        %v1047 = vsub.s32 0, %v864
        %v1048 = vsel %vm1046, %v1047, %v864
        %v1049 = vshrl.u32 %v1048, 4
        %v1050 = vand.u32 %v1048, 15
        %v1051 = vsub.s32 0, %v1050
        %v1052 = vsel %vm1046, %v1051, %v1050
        %vm1053 = vcmp.lt.s32.totalorder %v865, 0
        %v1054 = vsub.s32 0, %v865
        %v1055 = vsel %vm1053, %v1054, %v865
        %v1056 = vshrl.u32 %v1055, 4
        %v1057 = vand.u32 %v1055, 15
        %v1058 = vsub.s32 0, %v1057
        %v1059 = vsel %vm1053, %v1058, %v1057
        %vm1060 = vcmp.lt.s32.totalorder %v866, 0
        %v1061 = vsub.s32 0, %v866
        %v1062 = vsel %vm1060, %v1061, %v866
        %v1063 = vshrl.u32 %v1062, 4
        %v1064 = vand.u32 %v1062, 15
        %v1065 = vsub.s32 0, %v1064
        %v1066 = vsel %vm1060, %v1065, %v1064
        %vm1067 = vcmp.lt.s32.totalorder %v867, 0
        %v1068 = vsub.s32 0, %v867
        %v1069 = vsel %vm1067, %v1068, %v867
        %v1070 = vshrl.u32 %v1069, 4
        %v1071 = vand.u32 %v1069, 15
        %v1072 = vsub.s32 0, %v1071
        %v1073 = vsel %vm1067, %v1072, %v1071
        %vm1074 = vcmp.lt.s32.totalorder %v868, 0
        %v1075 = vsub.s32 0, %v868
        %v1076 = vsel %vm1074, %v1075, %v868
        %v1077 = vshrl.u32 %v1076, 4
        %v1078 = vand.u32 %v1076, 15
        %v1079 = vsub.s32 0, %v1078
        %v1080 = vsel %vm1074, %v1079, %v1078
        %vm1081 = vcmp.lt.s32.totalorder %v869, 0
        %v1082 = vsub.s32 0, %v869
        %v1083 = vsel %vm1081, %v1082, %v869
        %v1084 = vshrl.u32 %v1083, 4
        %v1085 = vand.u32 %v1083, 15
        %v1086 = vsub.s32 0, %v1085
        %v1087 = vsel %vm1081, %v1086, %v1085
        %vm1088 = vcmp.lt.s32.totalorder %v870, 0
        %v1089 = vsub.s32 0, %v870
        %v1090 = vsel %vm1088, %v1089, %v870
        %v1091 = vshrl.u32 %v1090, 4
        %v1092 = vand.u32 %v1090, 15
        %v1093 = vsub.s32 0, %v1092
        %v1094 = vsel %vm1088, %v1093, %v1092
        %vm1095 = vcmp.ne.s32.totalorder %v877, 0
        %vm1096 = vcmp.ne.s32.totalorder %v884, 0
        %vm1097 = vcmp.ne.s32.totalorder %v891, 0
        %vm1098 = vcmp.ne.s32.totalorder %v898, 0
        %vm1099 = vcmp.ne.s32.totalorder %v905, 0
        %vm1100 = vcmp.ne.s32.totalorder %v912, 0
        %vm1101 = vcmp.ne.s32.totalorder %v919, 0
        %vm1102 = vcmp.ne.s32.totalorder %v926, 0
        %vm1103 = vcmp.ne.s32.totalorder %v933, 0
        %vm1104 = vcmp.ne.s32.totalorder %v940, 0
        %vm1105 = vcmp.ne.s32.totalorder %v947, 0
        %vm1106 = vcmp.ne.s32.totalorder %v954, 0
        %vm1107 = vcmp.ne.s32.totalorder %v961, 0
        %vm1108 = vcmp.ne.s32.totalorder %v968, 0
        %vm1109 = vcmp.ne.s32.totalorder %v975, 0
        %vm1110 = vcmp.ne.s32.totalorder %v982, 0
        %vm1111 = vcmp.ne.s32.totalorder %v989, 0
        %vm1112 = vcmp.ne.s32.totalorder %v996, 0
        %vm1113 = vcmp.ne.s32.totalorder %v1003, 0
        %vm1114 = vcmp.ne.s32.totalorder %v1010, 0
        %vm1115 = vcmp.ne.s32.totalorder %v1017, 0
        %vm1116 = vcmp.ne.s32.totalorder %v1024, 0
        %vm1117 = vcmp.ne.s32.totalorder %v1031, 0
        %vm1118 = vcmp.ne.s32.totalorder %v1038, 0
        %vm1119 = vcmp.ne.s32.totalorder %v1045, 0
        %vm1120 = vcmp.ne.s32.totalorder %v1052, 0
        %vm1121 = vcmp.ne.s32.totalorder %v1059, 0
        %vm1122 = vcmp.ne.s32.totalorder %v1066, 0
        %vm1123 = vcmp.ne.s32.totalorder %v1073, 0
        %vm1124 = vcmp.ne.s32.totalorder %v1080, 0
        %vm1125 = vcmp.ne.s32.totalorder %v1087, 0
        %vm1126 = vcmp.ne.s32.totalorder %v1094, 0
        %vm1127 = vcmp.lt.s32.totalorder %v877, 0
        %vm1128 = vcmp.lt.s32.totalorder %v884, 0
        %vm1129 = vcmp.lt.s32.totalorder %v891, 0
        %vm1130 = vcmp.lt.s32.totalorder %v898, 0
        %vm1131 = vcmp.lt.s32.totalorder %v905, 0
        %vm1132 = vcmp.lt.s32.totalorder %v912, 0
        %vm1133 = vcmp.lt.s32.totalorder %v919, 0
        %vm1134 = vcmp.lt.s32.totalorder %v926, 0
        %vm1135 = vcmp.lt.s32.totalorder %v933, 0
        %vm1136 = vcmp.lt.s32.totalorder %v940, 0
        %vm1137 = vcmp.lt.s32.totalorder %v947, 0
        %vm1138 = vcmp.lt.s32.totalorder %v954, 0
        %vm1139 = vcmp.lt.s32.totalorder %v961, 0
        %vm1140 = vcmp.lt.s32.totalorder %v968, 0
        %vm1141 = vcmp.lt.s32.totalorder %v975, 0
        %vm1142 = vcmp.lt.s32.totalorder %v982, 0
        %vm1143 = vcmp.lt.s32.totalorder %v989, 0
        %vm1144 = vcmp.lt.s32.totalorder %v996, 0
        %vm1145 = vcmp.lt.s32.totalorder %v1003, 0
        %vm1146 = vcmp.lt.s32.totalorder %v1010, 0
        %vm1147 = vcmp.lt.s32.totalorder %v1017, 0
        %vm1148 = vcmp.lt.s32.totalorder %v1024, 0
        %vm1149 = vcmp.lt.s32.totalorder %v1031, 0
        %vm1150 = vcmp.lt.s32.totalorder %v1038, 0
        %vm1151 = vcmp.lt.s32.totalorder %v1045, 0
        %vm1152 = vcmp.lt.s32.totalorder %v1052, 0
        %vm1153 = vcmp.lt.s32.totalorder %v1059, 0
        %vm1154 = vcmp.lt.s32.totalorder %v1066, 0
        %vm1155 = vcmp.lt.s32.totalorder %v1073, 0
        %vm1156 = vcmp.lt.s32.totalorder %v1080, 0
        %vm1157 = vcmp.lt.s32.totalorder %v1087, 0
        %vm1158 = vcmp.lt.s32.totalorder %v1094, 0
        %vm1159 = vmand %vm1127, %vm1095
        %vm1160 = vmand %vm1128, %vm1096
        %vm1161 = vmand %vm1129, %vm1097
        %vm1162 = vmand %vm1130, %vm1098
        %vm1163 = vmand %vm1131, %vm1099
        %vm1164 = vmand %vm1132, %vm1100
        %vm1165 = vmand %vm1133, %vm1101
        %vm1166 = vmand %vm1134, %vm1102
        %vm1167 = vmand %vm1135, %vm1103
        %vm1168 = vmand %vm1136, %vm1104
        %vm1169 = vmand %vm1137, %vm1105
        %vm1170 = vmand %vm1138, %vm1106
        %vm1171 = vmand %vm1139, %vm1107
        %vm1172 = vmand %vm1140, %vm1108
        %vm1173 = vmand %vm1141, %vm1109
        %vm1174 = vmand %vm1142, %vm1110
        %vm1175 = vmand %vm1143, %vm1111
        %vm1176 = vmand %vm1144, %vm1112
        %vm1177 = vmand %vm1145, %vm1113
        %vm1178 = vmand %vm1146, %vm1114
        %vm1179 = vmand %vm1147, %vm1115
        %vm1180 = vmand %vm1148, %vm1116
        %vm1181 = vmand %vm1149, %vm1117
        %vm1182 = vmand %vm1150, %vm1118
        %vm1183 = vmand %vm1151, %vm1119
        %vm1184 = vmand %vm1152, %vm1120
        %vm1185 = vmand %vm1153, %vm1121
        %vm1186 = vmand %vm1154, %vm1122
        %vm1187 = vmand %vm1155, %vm1123
        %vm1188 = vmand %vm1156, %vm1124
        %vm1189 = vmand %vm1157, %vm1125
        %vm1190 = vmand %vm1158, %vm1126
        %v1191 = vadd.s32 %v877, 16
        %v1192 = vadd.s32 %v884, 16
        %v1193 = vadd.s32 %v891, 16
        %v1194 = vadd.s32 %v898, 16
        %v1195 = vadd.s32 %v905, 16
        %v1196 = vadd.s32 %v912, 16
        %v1197 = vadd.s32 %v919, 16
        %v1198 = vadd.s32 %v926, 16
        %v1199 = vadd.s32 %v933, 16
        %v1200 = vadd.s32 %v940, 16
        %v1201 = vadd.s32 %v947, 16
        %v1202 = vadd.s32 %v954, 16
        %v1203 = vadd.s32 %v961, 16
        %v1204 = vadd.s32 %v968, 16
        %v1205 = vadd.s32 %v975, 16
        %v1206 = vadd.s32 %v982, 16
        %v1207 = vadd.s32 %v989, 16
        %v1208 = vadd.s32 %v996, 16
        %v1209 = vadd.s32 %v1003, 16
        %v1210 = vadd.s32 %v1010, 16
        %v1211 = vadd.s32 %v1017, 16
        %v1212 = vadd.s32 %v1024, 16
        %v1213 = vadd.s32 %v1031, 16
        %v1214 = vadd.s32 %v1038, 16
        %v1215 = vadd.s32 %v1045, 16
        %v1216 = vadd.s32 %v1052, 16
        %v1217 = vadd.s32 %v1059, 16
        %v1218 = vadd.s32 %v1066, 16
        %v1219 = vadd.s32 %v1073, 16
        %v1220 = vadd.s32 %v1080, 16
        %v1221 = vadd.s32 %v1087, 16
        %v1222 = vadd.s32 %v1094, 16
        %v1223 = vsel %vm1159, %v1191, %v877
        %v1224 = vsel %vm1160, %v1192, %v884
        %v1225 = vsel %vm1161, %v1193, %v891
        %v1226 = vsel %vm1162, %v1194, %v898
        %v1227 = vsel %vm1163, %v1195, %v905
        %v1228 = vsel %vm1164, %v1196, %v912
        %v1229 = vsel %vm1165, %v1197, %v919
        %v1230 = vsel %vm1166, %v1198, %v926
        %v1231 = vsel %vm1167, %v1199, %v933
        %v1232 = vsel %vm1168, %v1200, %v940
        %v1233 = vsel %vm1169, %v1201, %v947
        %v1234 = vsel %vm1170, %v1202, %v954
        %v1235 = vsel %vm1171, %v1203, %v961
        %v1236 = vsel %vm1172, %v1204, %v968
        %v1237 = vsel %vm1173, %v1205, %v975
        %v1238 = vsel %vm1174, %v1206, %v982
        %v1239 = vsel %vm1175, %v1207, %v989
        %v1240 = vsel %vm1176, %v1208, %v996
        %v1241 = vsel %vm1177, %v1209, %v1003
        %v1242 = vsel %vm1178, %v1210, %v1010
        %v1243 = vsel %vm1179, %v1211, %v1017
        %v1244 = vsel %vm1180, %v1212, %v1024
        %v1245 = vsel %vm1181, %v1213, %v1031
        %v1246 = vsel %vm1182, %v1214, %v1038
        %v1247 = vsel %vm1183, %v1215, %v1045
        %v1248 = vsel %vm1184, %v1216, %v1052
        %v1249 = vsel %vm1185, %v1217, %v1059
        %v1250 = vsel %vm1186, %v1218, %v1066
        %v1251 = vsel %vm1187, %v1219, %v1073
        %v1252 = vsel %vm1188, %v1220, %v1080
        %v1253 = vsel %vm1189, %v1221, %v1087
        %v1254 = vsel %vm1190, %v1222, %v1094
        %vm1255 = vcmp.ne.s32.totalorder %v1223, 0
        %vm1256 = vcmp.ne.s32.totalorder %v1224, 0
        %vm1257 = vcmp.ne.s32.totalorder %v1225, 0
        %vm1258 = vcmp.ne.s32.totalorder %v1226, 0
        %vm1259 = vcmp.ne.s32.totalorder %v1227, 0
        %vm1260 = vcmp.ne.s32.totalorder %v1228, 0
        %vm1261 = vcmp.ne.s32.totalorder %v1229, 0
        %vm1262 = vcmp.ne.s32.totalorder %v1230, 0
        %vm1263 = vcmp.ne.s32.totalorder %v1231, 0
        %vm1264 = vcmp.ne.s32.totalorder %v1232, 0
        %vm1265 = vcmp.ne.s32.totalorder %v1233, 0
        %vm1266 = vcmp.ne.s32.totalorder %v1234, 0
        %vm1267 = vcmp.ne.s32.totalorder %v1235, 0
        %vm1268 = vcmp.ne.s32.totalorder %v1236, 0
        %vm1269 = vcmp.ne.s32.totalorder %v1237, 0
        %vm1270 = vcmp.ne.s32.totalorder %v1238, 0
        %vm1271 = vcmp.ne.s32.totalorder %v1239, 0
        %vm1272 = vcmp.ne.s32.totalorder %v1240, 0
        %vm1273 = vcmp.ne.s32.totalorder %v1241, 0
        %vm1274 = vcmp.ne.s32.totalorder %v1242, 0
        %vm1275 = vcmp.ne.s32.totalorder %v1243, 0
        %vm1276 = vcmp.ne.s32.totalorder %v1244, 0
        %vm1277 = vcmp.ne.s32.totalorder %v1245, 0
        %vm1278 = vcmp.ne.s32.totalorder %v1246, 0
        %vm1279 = vcmp.ne.s32.totalorder %v1247, 0
        %vm1280 = vcmp.ne.s32.totalorder %v1248, 0
        %vm1281 = vcmp.ne.s32.totalorder %v1249, 0
        %vm1282 = vcmp.ne.s32.totalorder %v1250, 0
        %vm1283 = vcmp.ne.s32.totalorder %v1251, 0
        %vm1284 = vcmp.ne.s32.totalorder %v1252, 0
        %vm1285 = vcmp.ne.s32.totalorder %v1253, 0
        %vm1286 = vcmp.ne.s32.totalorder %v1254, 0
        %vm1287 = vcmp.ne.s32.totalorder %v1223, 15
        %vm1288 = vcmp.ne.s32.totalorder %v1224, 15
        %vm1289 = vcmp.ne.s32.totalorder %v1225, 15
        %vm1290 = vcmp.ne.s32.totalorder %v1226, 15
        %vm1291 = vcmp.ne.s32.totalorder %v1227, 15
        %vm1292 = vcmp.ne.s32.totalorder %v1228, 15
        %vm1293 = vcmp.ne.s32.totalorder %v1229, 15
        %vm1294 = vcmp.ne.s32.totalorder %v1230, 15
        %vm1295 = vcmp.ne.s32.totalorder %v1231, 15
        %vm1296 = vcmp.ne.s32.totalorder %v1232, 15
        %vm1297 = vcmp.ne.s32.totalorder %v1233, 15
        %vm1298 = vcmp.ne.s32.totalorder %v1234, 15
        %vm1299 = vcmp.ne.s32.totalorder %v1235, 15
        %vm1300 = vcmp.ne.s32.totalorder %v1236, 15
        %vm1301 = vcmp.ne.s32.totalorder %v1237, 15
        %vm1302 = vcmp.ne.s32.totalorder %v1238, 15
        %vm1303 = vcmp.ne.s32.totalorder %v1239, 15
        %vm1304 = vcmp.ne.s32.totalorder %v1240, 15
        %vm1305 = vcmp.ne.s32.totalorder %v1241, 15
        %vm1306 = vcmp.ne.s32.totalorder %v1242, 15
        %vm1307 = vcmp.ne.s32.totalorder %v1243, 15
        %vm1308 = vcmp.ne.s32.totalorder %v1244, 15
        %vm1309 = vcmp.ne.s32.totalorder %v1245, 15
        %vm1310 = vcmp.ne.s32.totalorder %v1246, 15
        %vm1311 = vcmp.ne.s32.totalorder %v1247, 15
        %vm1312 = vcmp.ne.s32.totalorder %v1248, 15
        %vm1313 = vcmp.ne.s32.totalorder %v1249, 15
        %vm1314 = vcmp.ne.s32.totalorder %v1250, 15
        %vm1315 = vcmp.ne.s32.totalorder %v1251, 15
        %vm1316 = vcmp.ne.s32.totalorder %v1252, 15
        %vm1317 = vcmp.ne.s32.totalorder %v1253, 15
        %vm1318 = vcmp.ne.s32.totalorder %v1254, 15
        %v1319 = vld [vmem:[#allocation2] sm:$0xf8]
        %v1320 = vld [vmem:[#allocation2 + $0x8] sm:$0xff]
        %v1321 = vld [vmem:[#allocation2 + $0x10] sm:$0xff]
        %v1322 = vld [vmem:[#allocation2 + $0x18] sm:$0xff]
        %v1323 = vld [vmem:[#allocation2 + $0x20] sm:$0xff]
        %v1324 = vld [vmem:[#allocation2 + $0x28] sm:$0xff]
        %v1325 = vld [vmem:[#allocation2 + $0x30] sm:$0xff]
        %v1326 = vld [vmem:[#allocation2 + $0x38] sm:$0xff]
        %v1327 = vld [vmem:[#allocation2 + $0x40] sm:$0xff]
        %v1328 = vld [vmem:[#allocation2 + $0x48] sm:$0xff]
        %v1329 = vld [vmem:[#allocation2 + $0x50] sm:$0xff]
        %v1330 = vld [vmem:[#allocation2 + $0x58] sm:$0xff]
        %v1331 = vld [vmem:[#allocation2 + $0x60] sm:$0xff]
        %v1332 = vld [vmem:[#allocation2 + $0x68] sm:$0xff]
        %v1333 = vld [vmem:[#allocation2 + $0x70] sm:$0xff]
        %v1334 = vld [vmem:[#allocation2 + $0x78] sm:$0xff]
        %v1335 = vld [vmem:[#allocation2 + $0x80] sm:$0xf]
        %vm1336 = vmpackc.low %vm1255, %vm1255
        %vm1337 = vmpackc.low %vm1256, %vm1256
        %vm1338 = vmpackc.low %vm1257, %vm1257
        %vm1339 = vmpackc.low %vm1258, %vm1258
        %vm1340 = vmpackc.low %vm1259, %vm1259
        %vm1341 = vmpackc.low %vm1260, %vm1260
        %vm1342 = vmpackc.low %vm1261, %vm1261
        %vm1343 = vmpackc.low %vm1262, %vm1262
        %vm1344 = vmpackc.low %vm1263, %vm1263
        %vm1345 = vmpackc.low %vm1264, %vm1264
        %vm1346 = vmpackc.low %vm1265, %vm1265
        %vm1347 = vmpackc.low %vm1266, %vm1266
        %vm1348 = vmpackc.low %vm1267, %vm1267
        %vm1349 = vmpackc.low %vm1268, %vm1268
        %vm1350 = vmpackc.low %vm1269, %vm1269
        %vm1351 = vmpackc.low %vm1270, %vm1270
        %vm1352 = vmpackc.low %vm1271, %vm1271
        %vm1353 = vmpackc.low %vm1272, %vm1272
        %vm1354 = vmpackc.low %vm1273, %vm1273
        %vm1355 = vmpackc.low %vm1274, %vm1274
        %vm1356 = vmpackc.low %vm1275, %vm1275
        %vm1357 = vmpackc.low %vm1276, %vm1276
        %vm1358 = vmpackc.low %vm1277, %vm1277
        %vm1359 = vmpackc.low %vm1278, %vm1278
        %vm1360 = vmpackc.low %vm1279, %vm1279
        %vm1361 = vmpackc.low %vm1280, %vm1280
        %vm1362 = vmpackc.low %vm1281, %vm1281
        %vm1363 = vmpackc.low %vm1282, %vm1282
        %vm1364 = vmpackc.low %vm1283, %vm1283
        %vm1365 = vmpackc.low %vm1284, %vm1284
        %vm1366 = vmpackc.low %vm1285, %vm1285
        %vm1367 = vmpackc.low %vm1286, %vm1286
        %v1368 = vsel %vm1336, 65537, 0
        %v1369 = vsel %vm1337, 65537, 0
        %v1370 = vsel %vm1338, 65537, 0
        %v1371 = vsel %vm1339, 65537, 0
        %v1372 = vsel %vm1340, 65537, 0
        %v1373 = vsel %vm1341, 65537, 0
        %v1374 = vsel %vm1342, 65537, 0
        %v1375 = vsel %vm1343, 65537, 0
        %v1376 = vsel %vm1344, 65537, 0
        %v1377 = vsel %vm1345, 65537, 0
        %v1378 = vsel %vm1346, 65537, 0
        %v1379 = vsel %vm1347, 65537, 0
        %v1380 = vsel %vm1348, 65537, 0
        %v1381 = vsel %vm1349, 65537, 0
        %v1382 = vsel %vm1350, 65537, 0
        %v1383 = vsel %vm1351, 65537, 0
        %v1384 = vsel %vm1352, 65537, 0
        %v1385 = vsel %vm1353, 65537, 0
        %v1386 = vsel %vm1354, 65537, 0
        %v1387 = vsel %vm1355, 65537, 0
        %v1388 = vsel %vm1356, 65537, 0
        %v1389 = vsel %vm1357, 65537, 0
        %v1390 = vsel %vm1358, 65537, 0
        %v1391 = vsel %vm1359, 65537, 0
        %v1392 = vsel %vm1360, 65537, 0
        %v1393 = vsel %vm1361, 65537, 0
        %v1394 = vsel %vm1362, 65537, 0
        %v1395 = vsel %vm1363, 65537, 0
        %v1396 = vsel %vm1364, 65537, 0
        %v1397 = vsel %vm1365, 65537, 0
        %v1398 = vsel %vm1366, 65537, 0
        %v1399 = vsel %vm1367, 65537, 0
        %v1400 = vunpack.c.l.b16 %v1368
        %v1401 = vunpack.c.l.b16 %v1369
        %v1402 = vunpack.c.l.b16 %v1370
        %v1403 = vunpack.c.l.b16 %v1371
        %v1404 = vunpack.c.l.b16 %v1372
        %v1405 = vunpack.c.l.b16 %v1373
        %v1406 = vunpack.c.l.b16 %v1374
        %v1407 = vunpack.c.l.b16 %v1375
        %v1408 = vunpack.c.l.b16 %v1376
        %v1409 = vunpack.c.l.b16 %v1377
        %v1410 = vunpack.c.l.b16 %v1378
        %v1411 = vunpack.c.l.b16 %v1379
        %v1412 = vunpack.c.l.b16 %v1380
        %v1413 = vunpack.c.l.b16 %v1381
        %v1414 = vunpack.c.l.b16 %v1382
        %v1415 = vunpack.c.l.b16 %v1383
        %v1416 = vunpack.c.l.b16 %v1384
        %v1417 = vunpack.c.l.b16 %v1385
        %v1418 = vunpack.c.l.b16 %v1386
        %v1419 = vunpack.c.l.b16 %v1387
        %v1420 = vunpack.c.l.b16 %v1388
        %v1421 = vunpack.c.l.b16 %v1389
        %v1422 = vunpack.c.l.b16 %v1390
        %v1423 = vunpack.c.l.b16 %v1391
        %v1424 = vunpack.c.l.b16 %v1392
        %v1425 = vunpack.c.l.b16 %v1393
        %v1426 = vunpack.c.l.b16 %v1394
        %v1427 = vunpack.c.l.b16 %v1395
        %v1428 = vunpack.c.l.b16 %v1396
        %v1429 = vunpack.c.l.b16 %v1397
        %v1430 = vunpack.c.l.b16 %v1398
        %v1431 = vunpack.c.l.b16 %v1399
        %v1432 = vpack.c.b16 %v1401, %v1400
        %v1433 = vpack.c.b16 %v1403, %v1402
        %v1434 = vpack.c.b16 %v1405, %v1404
        %v1435 = vpack.c.b16 %v1407, %v1406
        %v1436 = vpack.c.b16 %v1409, %v1408
        %v1437 = vpack.c.b16 %v1411, %v1410
        %v1438 = vpack.c.b16 %v1413, %v1412
        %v1439 = vpack.c.b16 %v1415, %v1414
        %v1440 = vpack.c.b16 %v1417, %v1416
        %v1441 = vpack.c.b16 %v1419, %v1418
        %v1442 = vpack.c.b16 %v1421, %v1420
        %v1443 = vpack.c.b16 %v1423, %v1422
        %v1444 = vpack.c.b16 %v1425, %v1424
        %v1445 = vpack.c.b16 %v1427, %v1426
        %v1446 = vpack.c.b16 %v1429, %v1428
        %v1447 = vpack.c.b16 %v1431, %v1430
        %vm1448 = vsmask.f32 3328
        %v1450 = vshrl.u32 %v1432, 16
        %v1452 = vrot.slane %v1450, 4
        %v1453 = vshll.u32 %v1432, 16
        %v1455 = vrot.slane %v1453, 5
        %v1456 = vor.u32 %v1452, %v1455
        %v1458 = vshrl.u32 %v1433, 16
        %v1460 = vrot.slane %v1458, 4
        %v1461 = vshll.u32 %v1433, 16
        %v1463 = vrot.slane %v1461, 5
        %v1464 = vor.u32 %v1460, %v1463
        %v1465 = vsel %vm1448, %v1456, %v1464
        %v1467 = vshrl.u32 %v1434, 16
        %v1469 = vrot.slane %v1467, 4
        %v1470 = vshll.u32 %v1434, 16
        %v1472 = vrot.slane %v1470, 5
        %v1473 = vor.u32 %v1469, %v1472
        %v1474 = vsel %vm1448, %v1464, %v1473
        %v1476 = vshrl.u32 %v1435, 16
        %v1478 = vrot.slane %v1476, 4
        %v1479 = vshll.u32 %v1435, 16
        %v1481 = vrot.slane %v1479, 5
        %v1482 = vor.u32 %v1478, %v1481
        %v1483 = vsel %vm1448, %v1473, %v1482
        %v1485 = vshrl.u32 %v1436, 16
        %v1487 = vrot.slane %v1485, 4
        %v1488 = vshll.u32 %v1436, 16
        %v1490 = vrot.slane %v1488, 5
        %v1491 = vor.u32 %v1487, %v1490
        %v1492 = vsel %vm1448, %v1482, %v1491
        %v1494 = vshrl.u32 %v1437, 16
        %v1496 = vrot.slane %v1494, 4
        %v1497 = vshll.u32 %v1437, 16
        %v1499 = vrot.slane %v1497, 5
        %v1500 = vor.u32 %v1496, %v1499
        %v1501 = vsel %vm1448, %v1491, %v1500
        %v1503 = vshrl.u32 %v1438, 16
        %v1505 = vrot.slane %v1503, 4
        %v1506 = vshll.u32 %v1438, 16
        %v1508 = vrot.slane %v1506, 5
        %v1509 = vor.u32 %v1505, %v1508
        %v1510 = vsel %vm1448, %v1500, %v1509
        %v1512 = vshrl.u32 %v1439, 16
        %v1514 = vrot.slane %v1512, 4
        %v1515 = vshll.u32 %v1439, 16
        %v1517 = vrot.slane %v1515, 5
        %v1518 = vor.u32 %v1514, %v1517
        %v1519 = vsel %vm1448, %v1509, %v1518
        %v1521 = vshrl.u32 %v1440, 16
        %v1523 = vrot.slane %v1521, 4
        %v1524 = vshll.u32 %v1440, 16
        %v1526 = vrot.slane %v1524, 5
        %v1527 = vor.u32 %v1523, %v1526
        %v1528 = vsel %vm1448, %v1518, %v1527
        %v1530 = vshrl.u32 %v1441, 16
        %v1532 = vrot.slane %v1530, 4
        %v1533 = vshll.u32 %v1441, 16
        %v1535 = vrot.slane %v1533, 5
        %v1536 = vor.u32 %v1532, %v1535
        %v1537 = vsel %vm1448, %v1527, %v1536
        %v1539 = vshrl.u32 %v1442, 16
        %v1541 = vrot.slane %v1539, 4
        %v1542 = vshll.u32 %v1442, 16
        %v1544 = vrot.slane %v1542, 5
        %v1545 = vor.u32 %v1541, %v1544
        %v1546 = vsel %vm1448, %v1536, %v1545
        %v1548 = vshrl.u32 %v1443, 16
        %v1550 = vrot.slane %v1548, 4
        %v1551 = vshll.u32 %v1443, 16
        %v1553 = vrot.slane %v1551, 5
        %v1554 = vor.u32 %v1550, %v1553
        %v1555 = vsel %vm1448, %v1545, %v1554
        %v1557 = vshrl.u32 %v1444, 16
        %v1559 = vrot.slane %v1557, 4
        %v1560 = vshll.u32 %v1444, 16
        %v1562 = vrot.slane %v1560, 5
        %v1563 = vor.u32 %v1559, %v1562
        %v1564 = vsel %vm1448, %v1554, %v1563
        %v1566 = vshrl.u32 %v1445, 16
        %v1568 = vrot.slane %v1566, 4
        %v1569 = vshll.u32 %v1445, 16
        %v1571 = vrot.slane %v1569, 5
        %v1572 = vor.u32 %v1568, %v1571
        %v1573 = vsel %vm1448, %v1563, %v1572
        %v1575 = vshrl.u32 %v1446, 16
        %v1577 = vrot.slane %v1575, 4
        %v1578 = vshll.u32 %v1446, 16
        %v1580 = vrot.slane %v1578, 5
        %v1581 = vor.u32 %v1577, %v1580
        %v1582 = vsel %vm1448, %v1572, %v1581
        %v1584 = vshrl.u32 %v1447, 16
        %v1586 = vrot.slane %v1584, 4
        %v1587 = vshll.u32 %v1447, 16
        %v1589 = vrot.slane %v1587, 5
        %v1590 = vor.u32 %v1586, %v1589
        %v1591 = vsel %vm1448, %v1581, %v1590
        %vm1592 = vcmp.ne.s16.totalorder %v1456, 0
        %vm1593 = vcmp.ne.s16.totalorder %v1465, 0
        %vm1594 = vcmp.ne.s16.totalorder %v1474, 0
        %vm1595 = vcmp.ne.s16.totalorder %v1483, 0
        %vm1596 = vcmp.ne.s16.totalorder %v1492, 0
        %vm1597 = vcmp.ne.s16.totalorder %v1501, 0
        %vm1598 = vcmp.ne.s16.totalorder %v1510, 0
        %vm1599 = vcmp.ne.s16.totalorder %v1519, 0
        %vm1600 = vcmp.ne.s16.totalorder %v1528, 0
        %vm1601 = vcmp.ne.s16.totalorder %v1537, 0
        %vm1602 = vcmp.ne.s16.totalorder %v1546, 0
        %vm1603 = vcmp.ne.s16.totalorder %v1555, 0
        %vm1604 = vcmp.ne.s16.totalorder %v1564, 0
        %vm1605 = vcmp.ne.s16.totalorder %v1573, 0
        %vm1606 = vcmp.ne.s16.totalorder %v1582, 0
        %vm1607 = vcmp.ne.s16.totalorder %v1591, 0
        %vm1608 = vcmp.ne.s16.totalorder %v1590, 0
        %v1609 = vsel %vm1592, %v1319, 0
        %v1610 = vsel %vm1593, %v1320, 0
        %v1611 = vsel %vm1594, %v1321, 0
        %v1612 = vsel %vm1595, %v1322, 0
        %v1613 = vsel %vm1596, %v1323, 0
        %v1614 = vsel %vm1597, %v1324, 0
        %v1615 = vsel %vm1598, %v1325, 0
        %v1616 = vsel %vm1599, %v1326, 0
        %v1617 = vsel %vm1600, %v1327, 0
        %v1618 = vsel %vm1601, %v1328, 0
        %v1619 = vsel %vm1602, %v1329, 0
        %v1620 = vsel %vm1603, %v1330, 0
        %v1621 = vsel %vm1604, %v1331, 0
        %v1622 = vsel %vm1605, %v1332, 0
        %v1623 = vsel %vm1606, %v1333, 0
        %v1624 = vsel %vm1607, %v1334, 0
        %v1625 = vsel %vm1608, %v1335, 0
        %v1626 = vld [vmem:[#allocation8] sm:$0xf]
        %v1627 = vld [vmem:[#allocation8 + $0x4] sm:$0xf]
        %v1628 = vld [vmem:[#allocation8 + $0x8] sm:$0xf]
        %v1629 = vld [vmem:[#allocation8 + $0xc] sm:$0xf]
        %v1630 = vld [vmem:[#allocation8 + $0x10] sm:$0xf]
        %v1631 = vld [vmem:[#allocation8 + $0x14] sm:$0xf]
        %v1632 = vld [vmem:[#allocation8 + $0x18] sm:$0xf]
        %v1633 = vld [vmem:[#allocation8 + $0x1c] sm:$0xf]
        %v1634 = vld [vmem:[#allocation8 + $0x20] sm:$0xf]
        %v1635 = vld [vmem:[#allocation8 + $0x24] sm:$0xf]
        %v1636 = vld [vmem:[#allocation8 + $0x28] sm:$0xf]
        %v1637 = vld [vmem:[#allocation8 + $0x2c] sm:$0xf]
        %v1638 = vld [vmem:[#allocation8 + $0x30] sm:$0xf]
        %v1639 = vld [vmem:[#allocation8 + $0x34] sm:$0xf]
        %v1640 = vld [vmem:[#allocation8 + $0x38] sm:$0xf]
        %v1641 = vld [vmem:[#allocation8 + $0x3c] sm:$0xf]
        %v1642 = vld [vmem:[#allocation2] sm:$0xf0]
        %s1643 = scalar_lea.vmem [#allocation8], 64
        %v1644 = vld [vmem:[%s1643] sm:$0xf]
        %v1645 = vld [vmem:[%s1643 + $0x4] sm:$0xf]
        %v1646 = vld [vmem:[%s1643 + $0x8] sm:$0xf]
        %v1647 = vld [vmem:[%s1643 + $0xc] sm:$0xf]
        %v1648 = vld [vmem:[%s1643 + $0x10] sm:$0xf]
        %v1649 = vld [vmem:[%s1643 + $0x14] sm:$0xf]
        %v1650 = vld [vmem:[%s1643 + $0x18] sm:$0xf]
        %v1651 = vld [vmem:[%s1643 + $0x1c] sm:$0xf]
        %v1652 = vld [vmem:[%s1643 + $0x20] sm:$0xf]
        %v1653 = vld [vmem:[%s1643 + $0x24] sm:$0xf]
        %v1654 = vld [vmem:[%s1643 + $0x28] sm:$0xf]
        %v1655 = vld [vmem:[%s1643 + $0x2c] sm:$0xf]
        %v1656 = vld [vmem:[%s1643 + $0x30] sm:$0xf]
        %v1657 = vld [vmem:[%s1643 + $0x34] sm:$0xf]
        %v1658 = vld [vmem:[%s1643 + $0x38] sm:$0xf]
        %v1659 = vld [vmem:[%s1643 + $0x3c] sm:$0xf]
        %v1677 = vrot.slane %v1642, 4
        %v1678 = vrot.slane %v1320, 4
        %v1679 = vsel %vm772, %v1677, %v1678
        %v1680 = vrot.slane %v1321, 4
        %v1681 = vsel %vm772, %v1678, %v1680
        %v1682 = vrot.slane %v1322, 4
        %v1683 = vsel %vm772, %v1680, %v1682
        %v1684 = vrot.slane %v1323, 4
        %v1685 = vsel %vm772, %v1682, %v1684
        %v1686 = vrot.slane %v1324, 4
        %v1687 = vsel %vm772, %v1684, %v1686
        %v1688 = vrot.slane %v1325, 4
        %v1689 = vsel %vm772, %v1686, %v1688
        %v1690 = vrot.slane %v1326, 4
        %v1691 = vsel %vm772, %v1688, %v1690
        %v1692 = vrot.slane %v1327, 4
        %v1693 = vsel %vm772, %v1690, %v1692
        %v1694 = vrot.slane %v1328, 4
        %v1695 = vsel %vm772, %v1692, %v1694
        %v1696 = vrot.slane %v1329, 4
        %v1697 = vsel %vm772, %v1694, %v1696
        %v1698 = vrot.slane %v1330, 4
        %v1699 = vsel %vm772, %v1696, %v1698
        %v1700 = vrot.slane %v1331, 4
        %v1701 = vsel %vm772, %v1698, %v1700
        %v1702 = vrot.slane %v1332, 4
        %v1703 = vsel %vm772, %v1700, %v1702
        %v1704 = vrot.slane %v1333, 4
        %v1705 = vsel %vm772, %v1702, %v1704
        %v1706 = vrot.slane %v1334, 4
        %v1707 = vsel %vm772, %v1704, %v1706
        %v1708 = vrot.slane %v1335, 4
        %v1709 = vsel %vm772, %v1706, %v1708
        %v1742 = vunpack.c.l.b16 %v1644
        %v1743 = vunpack.c.l.b16 %v1645
        %v1744 = vunpack.c.l.b16 %v1646
        %v1745 = vunpack.c.l.b16 %v1647
        %v1746 = vunpack.c.l.b16 %v1648
        %v1747 = vunpack.c.l.b16 %v1649
        %v1748 = vunpack.c.l.b16 %v1650
        %v1749 = vunpack.c.l.b16 %v1651
        %v1750 = vunpack.c.l.b16 %v1652
        %v1751 = vunpack.c.l.b16 %v1653
        %v1752 = vunpack.c.l.b16 %v1654
        %v1753 = vunpack.c.l.b16 %v1655
        %v1754 = vunpack.c.l.b16 %v1656
        %v1755 = vunpack.c.l.b16 %v1657
        %v1756 = vunpack.c.l.b16 %v1658
        %v1757 = vunpack.c.l.b16 %v1659
        %v1758 = vpack.c.b16 %v1743, %v1742
        %v1759 = vpack.c.b16 %v1745, %v1744
        %v1760 = vpack.c.b16 %v1747, %v1746
        %v1761 = vpack.c.b16 %v1749, %v1748
        %v1762 = vpack.c.b16 %v1751, %v1750
        %v1763 = vpack.c.b16 %v1753, %v1752
        %v1764 = vpack.c.b16 %v1755, %v1754
        %v1765 = vpack.c.b16 %v1757, %v1756
        %1774 = vmatprep.subr.bf16.mxu0 0
        %1775 = vmatpush1.bf16.msra.mxu0 %v1758
        %1776 = vmatprep.subr.bf16.mxu0 0
        %1777 = vmatpush1.bf16.msra.mxu0 %v1759
        %1778 = vmatprep.subr.bf16.mxu0 0
        %1779 = vmatpush1.bf16.msra.mxu0 %v1760
        %1780 = vmatprep.subr.bf16.mxu0 0
        %1781 = vmatpush1.bf16.msra.mxu0 %v1761
        %1782 = vmatprep.subr.bf16.mxu0 0
        %1783 = vmatpush1.bf16.msra.mxu0 %v1762
        %1784 = vmatprep.subr.bf16.mxu0 0
        %1785 = vmatpush1.bf16.msra.mxu0 %v1763
        %1786 = vmatprep.subr.bf16.mxu0 0
        %1787 = vmatpush1.bf16.msra.mxu0 %v1764
        %1788 = vmatprep.subr.bf16.mxu0 0
        %1789 = vmatpush1.bf16.msra.mxu0 %v1765
        %1790 = vmatprep.subr.bf16.mxu0 0
        %1791 = vmatpush1.bf16.msra.mxu0 0
        %1792 = vmatprep.subr.bf16.mxu0 0
        %1793 = vmatpush1.bf16.msra.mxu0 0
        %1794 = vmatprep.subr.bf16.mxu0 0
        %1795 = vmatpush1.bf16.msra.mxu0 0
        %1796 = vmatprep.subr.bf16.mxu0 0
        %1797 = vmatpush1.bf16.msra.mxu0 0
        %1798 = vmatprep.subr.bf16.mxu0 0
        %1799 = vmatpush1.bf16.msra.mxu0 0
        %1800 = vmatprep.subr.bf16.mxu0 0
        %1801 = vmatpush1.bf16.msra.mxu0 0
        %1802 = vmatprep.subr.bf16.mxu0 0
        %1803 = vmatpush1.bf16.msra.mxu0 0
        %1804 = vmatprep.subr.bf16.mxu0 0
        %1805 = vmatpush1.bf16.msra.mxu0 0
        %1806 = vmatprep.mubr.bf16.mxu0 0
        %1807 = vmatmul.mubr.bf16.gmra.mrb[0].mxu0 %v1679
        %v1808 = vpop.f32.mrb[0].mxu0
        %v1809 = vadd.f32 0.0, %v1808
        %v1810 = vpop.f32.mrb[0].mxu0
        %v1811 = vpop.f32.mrb[0].mxu0
        %v1812 = vadd.f32 0.0, %v1811
        %v1813 = vpop.f32.mrb[0].mxu0
        %1814 = vmatprep.mubr.bf16.mxu0 0
        %1815 = vmatmul.mubr.bf16.gmra.mrb[0].mxu0 %v1681
        %v1816 = vpop.f32.mrb[0].mxu0
        %v1817 = vadd.f32 0.0, %v1816
        %v1818 = vpop.f32.mrb[0].mxu0
        %v1819 = vpop.f32.mrb[0].mxu0
        %v1820 = vadd.f32 0.0, %v1819
        %v1821 = vpop.f32.mrb[0].mxu0
        %1822 = vmatprep.mubr.bf16.mxu0 0
        %1823 = vmatmul.mubr.bf16.gmra.mrb[0].mxu0 %v1683
        %v1824 = vpop.f32.mrb[0].mxu0
        %v1825 = vadd.f32 0.0, %v1824
        %v1826 = vpop.f32.mrb[0].mxu0
        %v1827 = vpop.f32.mrb[0].mxu0
        %v1828 = vadd.f32 0.0, %v1827
        %v1829 = vpop.f32.mrb[0].mxu0
        %1830 = vmatprep.mubr.bf16.mxu0 0
        %1831 = vmatmul.mubr.bf16.gmra.mrb[0].mxu0 %v1685
        %v1832 = vpop.f32.mrb[0].mxu0
        %v1833 = vadd.f32 0.0, %v1832
        %v1834 = vpop.f32.mrb[0].mxu0
        %v1835 = vpop.f32.mrb[0].mxu0
        %v1836 = vadd.f32 0.0, %v1835
        %v1837 = vpop.f32.mrb[0].mxu0
        %1838 = vmatprep.mubr.bf16.mxu0 0
        %1839 = vmatmul.mubr.bf16.gmra.mrb[0].mxu0 %v1687
        %v1840 = vpop.f32.mrb[0].mxu0
        %v1841 = vadd.f32 0.0, %v1840
        %v1842 = vpop.f32.mrb[0].mxu0
        %v1843 = vpop.f32.mrb[0].mxu0
        %v1844 = vadd.f32 0.0, %v1843
        %v1845 = vpop.f32.mrb[0].mxu0
        %1846 = vmatprep.mubr.bf16.mxu0 0
        %1847 = vmatmul.mubr.bf16.gmra.mrb[0].mxu0 %v1689
        %v1848 = vpop.f32.mrb[0].mxu0
        %v1849 = vadd.f32 0.0, %v1848
        %v1850 = vpop.f32.mrb[0].mxu0
        %v1851 = vpop.f32.mrb[0].mxu0
        %v1852 = vadd.f32 0.0, %v1851
        %v1853 = vpop.f32.mrb[0].mxu0
        %1854 = vmatprep.mubr.bf16.mxu0 0
        %1855 = vmatmul.mubr.bf16.gmra.mrb[0].mxu0 %v1691
        %v1856 = vpop.f32.mrb[0].mxu0
        %v1857 = vadd.f32 0.0, %v1856
        %v1858 = vpop.f32.mrb[0].mxu0
        %v1859 = vpop.f32.mrb[0].mxu0
        %v1860 = vadd.f32 0.0, %v1859
        %v1861 = vpop.f32.mrb[0].mxu0
        %1862 = vmatprep.mubr.bf16.mxu0 0
        %1863 = vmatmul.mubr.bf16.gmra.mrb[0].mxu0 %v1693
        %v1864 = vpop.f32.mrb[0].mxu0
        %v1865 = vadd.f32 0.0, %v1864
        %v1866 = vpop.f32.mrb[0].mxu0
        %v1867 = vpop.f32.mrb[0].mxu0
        %v1868 = vadd.f32 0.0, %v1867
        %v1869 = vpop.f32.mrb[0].mxu0
        %1870 = vmatprep.mubr.bf16.mxu0 0
        %1871 = vmatmul.mubr.bf16.gmra.mrb[0].mxu0 %v1695
        %v1872 = vpop.f32.mrb[0].mxu0
        %v1873 = vadd.f32 0.0, %v1872
        %v1874 = vpop.f32.mrb[0].mxu0
        %v1875 = vpop.f32.mrb[0].mxu0
        %v1876 = vadd.f32 0.0, %v1875
        %v1877 = vpop.f32.mrb[0].mxu0
        %1878 = vmatprep.mubr.bf16.mxu0 0
        %1879 = vmatmul.mubr.bf16.gmra.mrb[0].mxu0 %v1697
        %v1880 = vpop.f32.mrb[0].mxu0
        %v1881 = vadd.f32 0.0, %v1880
        %v1882 = vpop.f32.mrb[0].mxu0
        %v1883 = vpop.f32.mrb[0].mxu0
        %v1884 = vadd.f32 0.0, %v1883
        %v1885 = vpop.f32.mrb[0].mxu0
        %1886 = vmatprep.mubr.bf16.mxu0 0
        %1887 = vmatmul.mubr.bf16.gmra.mrb[0].mxu0 %v1699
        %v1888 = vpop.f32.mrb[0].mxu0
        %v1889 = vadd.f32 0.0, %v1888
        %v1890 = vpop.f32.mrb[0].mxu0
        %v1891 = vpop.f32.mrb[0].mxu0
        %v1892 = vadd.f32 0.0, %v1891
        %v1893 = vpop.f32.mrb[0].mxu0
        %1894 = vmatprep.mubr.bf16.mxu0 0
        %1895 = vmatmul.mubr.bf16.gmra.mrb[0].mxu0 %v1701
        %v1896 = vpop.f32.mrb[0].mxu0
        %v1897 = vadd.f32 0.0, %v1896
        %v1898 = vpop.f32.mrb[0].mxu0
        %v1899 = vpop.f32.mrb[0].mxu0
        %v1900 = vadd.f32 0.0, %v1899
        %v1901 = vpop.f32.mrb[0].mxu0
        %1902 = vmatprep.mubr.bf16.mxu0 0
        %1903 = vmatmul.mubr.bf16.gmra.mrb[0].mxu0 %v1703
        %v1904 = vpop.f32.mrb[0].mxu0
        %v1905 = vadd.f32 0.0, %v1904
        %v1906 = vpop.f32.mrb[0].mxu0
        %v1907 = vpop.f32.mrb[0].mxu0
        %v1908 = vadd.f32 0.0, %v1907
        %v1909 = vpop.f32.mrb[0].mxu0
        %1910 = vmatprep.mubr.bf16.mxu0 0
        %1911 = vmatmul.mubr.bf16.gmra.mrb[0].mxu0 %v1705
        %v1912 = vpop.f32.mrb[0].mxu0
        %v1913 = vadd.f32 0.0, %v1912
        %v1914 = vpop.f32.mrb[0].mxu0
        %v1915 = vpop.f32.mrb[0].mxu0
        %v1916 = vadd.f32 0.0, %v1915
        %v1917 = vpop.f32.mrb[0].mxu0
        %1918 = vmatprep.mubr.bf16.mxu0 0
        %1919 = vmatmul.mubr.bf16.gmra.mrb[0].mxu0 %v1707
        %v1920 = vpop.f32.mrb[0].mxu0
        %v1921 = vadd.f32 0.0, %v1920
        %v1922 = vpop.f32.mrb[0].mxu0
        %v1923 = vpop.f32.mrb[0].mxu0
        %v1924 = vadd.f32 0.0, %v1923
        %v1925 = vpop.f32.mrb[0].mxu0
        %1926 = vmatprep.mubr.bf16.mxu0 0
        %1927 = vmatmul.mubr.bf16.gmra.mrb[0].mxu0 %v1709
        %v1928 = vpop.f32.mrb[0].mxu0
        %v1929 = vadd.f32 0.0, %v1928
        %v1930 = vpop.f32.mrb[0].mxu0
        %v1931 = vpop.f32.mrb[0].mxu0
        %v1932 = vadd.f32 0.0, %v1931
        %v1933 = vpop.f32.mrb[0].mxu0
        %1934 = vdwg.mxu0
        %vm1935 = vsmask.f32 4352
        %v1937 = vshrl.u32 %v1609, 16
        %v1939 = vrot.slane %v1937, 3
        %v1940 = vshll.u32 %v1609, 16
        %v1942 = vrot.slane %v1940, 4
        %v1943 = vor.u32 %v1939, %v1942
        %v1945 = vshrl.u32 %v1610, 16
        %v1947 = vrot.slane %v1945, 3
        %v1948 = vshll.u32 %v1610, 16
        %v1950 = vrot.slane %v1948, 4
        %v1951 = vor.u32 %v1947, %v1950
        %v1952 = vsel %vm1935, %v1943, %v1951
        %v1954 = vshrl.u32 %v1611, 16
        %v1956 = vrot.slane %v1954, 3
        %v1957 = vshll.u32 %v1611, 16
        %v1959 = vrot.slane %v1957, 4
        %v1960 = vor.u32 %v1956, %v1959
        %v1961 = vsel %vm1935, %v1951, %v1960
        %v1963 = vshrl.u32 %v1612, 16
        %v1965 = vrot.slane %v1963, 3
        %v1966 = vshll.u32 %v1612, 16
        %v1968 = vrot.slane %v1966, 4
        %v1969 = vor.u32 %v1965, %v1968
        %v1970 = vsel %vm1935, %v1960, %v1969
        %v1972 = vshrl.u32 %v1613, 16
        %v1974 = vrot.slane %v1972, 3
        %v1975 = vshll.u32 %v1613, 16
        %v1977 = vrot.slane %v1975, 4
        %v1978 = vor.u32 %v1974, %v1977
        %v1979 = vsel %vm1935, %v1969, %v1978
        %v1981 = vshrl.u32 %v1614, 16
        %v1983 = vrot.slane %v1981, 3
        %v1984 = vshll.u32 %v1614, 16
        %v1986 = vrot.slane %v1984, 4
        %v1987 = vor.u32 %v1983, %v1986
        %v1988 = vsel %vm1935, %v1978, %v1987
        %v1990 = vshrl.u32 %v1615, 16
        %v1992 = vrot.slane %v1990, 3
        %v1993 = vshll.u32 %v1615, 16
        %v1995 = vrot.slane %v1993, 4
        %v1996 = vor.u32 %v1992, %v1995
        %v1997 = vsel %vm1935, %v1987, %v1996
        %v1999 = vshrl.u32 %v1616, 16
        %v2001 = vrot.slane %v1999, 3
        %v2002 = vshll.u32 %v1616, 16
        %v2004 = vrot.slane %v2002, 4
        %v2005 = vor.u32 %v2001, %v2004
        %v2006 = vsel %vm1935, %v1996, %v2005
        %v2008 = vshrl.u32 %v1617, 16
        %v2010 = vrot.slane %v2008, 3
        %v2011 = vshll.u32 %v1617, 16
        %v2013 = vrot.slane %v2011, 4
        %v2014 = vor.u32 %v2010, %v2013
        %v2015 = vsel %vm1935, %v2005, %v2014
        %v2017 = vshrl.u32 %v1618, 16
        %v2019 = vrot.slane %v2017, 3
        %v2020 = vshll.u32 %v1618, 16
        %v2022 = vrot.slane %v2020, 4
        %v2023 = vor.u32 %v2019, %v2022
        %v2024 = vsel %vm1935, %v2014, %v2023
        %v2026 = vshrl.u32 %v1619, 16
        %v2028 = vrot.slane %v2026, 3
        %v2029 = vshll.u32 %v1619, 16
        %v2031 = vrot.slane %v2029, 4
        %v2032 = vor.u32 %v2028, %v2031
        %v2033 = vsel %vm1935, %v2023, %v2032
        %v2035 = vshrl.u32 %v1620, 16
        %v2037 = vrot.slane %v2035, 3
        %v2038 = vshll.u32 %v1620, 16
        %v2040 = vrot.slane %v2038, 4
        %v2041 = vor.u32 %v2037, %v2040
        %v2042 = vsel %vm1935, %v2032, %v2041
        %v2044 = vshrl.u32 %v1621, 16
        %v2046 = vrot.slane %v2044, 3
        %v2047 = vshll.u32 %v1621, 16
        %v2049 = vrot.slane %v2047, 4
        %v2050 = vor.u32 %v2046, %v2049
        %v2051 = vsel %vm1935, %v2041, %v2050
        %v2053 = vshrl.u32 %v1622, 16
        %v2055 = vrot.slane %v2053, 3
        %v2056 = vshll.u32 %v1622, 16
        %v2058 = vrot.slane %v2056, 4
        %v2059 = vor.u32 %v2055, %v2058
        %v2060 = vsel %vm1935, %v2050, %v2059
        %v2062 = vshrl.u32 %v1623, 16
        %v2064 = vrot.slane %v2062, 3
        %v2065 = vshll.u32 %v1623, 16
        %v2067 = vrot.slane %v2065, 4
        %v2068 = vor.u32 %v2064, %v2067
        %v2069 = vsel %vm1935, %v2059, %v2068
        %v2071 = vshrl.u32 %v1624, 16
        %v2073 = vrot.slane %v2071, 3
        %v2074 = vshll.u32 %v1624, 16
        %v2076 = vrot.slane %v2074, 4
        %v2077 = vor.u32 %v2073, %v2076
        %v2078 = vsel %vm1935, %v2068, %v2077
        %v2080 = vshrl.u32 %v1625, 16
        %v2082 = vrot.slane %v2080, 3
        %v2083 = vshll.u32 %v1625, 16
        %v2085 = vrot.slane %v2083, 4
        %v2086 = vor.u32 %v2082, %v2085
        %v2087 = vsel %vm1935, %v2077, %v2086
        %v2120 = vunpack.c.l.b16 %v1626
        %v2121 = vunpack.c.l.b16 %v1627
        %v2122 = vunpack.c.l.b16 %v1628
        %v2123 = vunpack.c.l.b16 %v1629
        %v2124 = vunpack.c.l.b16 %v1630
        %v2125 = vunpack.c.l.b16 %v1631
        %v2126 = vunpack.c.l.b16 %v1632
        %v2127 = vunpack.c.l.b16 %v1633
        %v2128 = vunpack.c.l.b16 %v1634
        %v2129 = vunpack.c.l.b16 %v1635
        %v2130 = vunpack.c.l.b16 %v1636
        %v2131 = vunpack.c.l.b16 %v1637
        %v2132 = vunpack.c.l.b16 %v1638
        %v2133 = vunpack.c.l.b16 %v1639
        %v2134 = vunpack.c.l.b16 %v1640
        %v2135 = vunpack.c.l.b16 %v1641
        %v2136 = vpack.c.b16 %v2121, %v2120
        %v2137 = vpack.c.b16 %v2123, %v2122
        %v2138 = vpack.c.b16 %v2125, %v2124
        %v2139 = vpack.c.b16 %v2127, %v2126
        %v2140 = vpack.c.b16 %v2129, %v2128
        %v2141 = vpack.c.b16 %v2131, %v2130
        %v2142 = vpack.c.b16 %v2133, %v2132
        %v2143 = vpack.c.b16 %v2135, %v2134
        %2152 = vmatprep.subr.bf16.mxu0 0
        %2153 = vmatpush1.bf16.msra.mxu0 %v2136
        %2154 = vmatprep.subr.bf16.mxu0 0
        %2155 = vmatpush1.bf16.msra.mxu0 %v2137
        %2156 = vmatprep.subr.bf16.mxu0 0
        %2157 = vmatpush1.bf16.msra.mxu0 %v2138
        %2158 = vmatprep.subr.bf16.mxu0 0
        %2159 = vmatpush1.bf16.msra.mxu0 %v2139
        %2160 = vmatprep.subr.bf16.mxu0 0
        %2161 = vmatpush1.bf16.msra.mxu0 %v2140
        %2162 = vmatprep.subr.bf16.mxu0 0
        %2163 = vmatpush1.bf16.msra.mxu0 %v2141
        %2164 = vmatprep.subr.bf16.mxu0 0
        %2165 = vmatpush1.bf16.msra.mxu0 %v2142
        %2166 = vmatprep.subr.bf16.mxu0 0
        %2167 = vmatpush1.bf16.msra.mxu0 %v2143
        %2168 = vmatprep.subr.bf16.mxu0 0
        %2169 = vmatpush1.bf16.msra.mxu0 0
        %2170 = vmatprep.subr.bf16.mxu0 0
        %2171 = vmatpush1.bf16.msra.mxu0 0
        %2172 = vmatprep.subr.bf16.mxu0 0
        %2173 = vmatpush1.bf16.msra.mxu0 0
        %2174 = vmatprep.subr.bf16.mxu0 0
        %2175 = vmatpush1.bf16.msra.mxu0 0
        %2176 = vmatprep.subr.bf16.mxu0 0
        %2177 = vmatpush1.bf16.msra.mxu0 0
        %2178 = vmatprep.subr.bf16.mxu0 0
        %2179 = vmatpush1.bf16.msra.mxu0 0
        %2180 = vmatprep.subr.bf16.mxu0 0
        %2181 = vmatpush1.bf16.msra.mxu0 0
        %2182 = vmatprep.subr.bf16.mxu0 0
        %2183 = vmatpush1.bf16.msra.mxu0 0
        %2184 = vmatprep.mubr.bf16.mxu0 0
        %2185 = vmatmul.mubr.bf16.gmra.mrb[0].mxu0 %v1952
        %v2186 = vpop.f32.mrb[0].mxu0
        %v2187 = vadd.f32 %v1809, %v2186
        %v2188 = vpop.f32.mrb[0].mxu0
        %v2189 = vpop.f32.mrb[0].mxu0
        %v2190 = vadd.f32 %v1812, %v2189
        %v2191 = vpop.f32.mrb[0].mxu0
        %2192 = vmatprep.mubr.bf16.mxu0 0
        %2193 = vmatmul.mubr.bf16.gmra.mrb[0].mxu0 %v1961
        %v2194 = vpop.f32.mrb[0].mxu0
        %v2195 = vadd.f32 %v1817, %v2194
        %v2196 = vpop.f32.mrb[0].mxu0
        %v2197 = vpop.f32.mrb[0].mxu0
        %v2198 = vadd.f32 %v1820, %v2197
        %v2199 = vpop.f32.mrb[0].mxu0
        %2200 = vmatprep.mubr.bf16.mxu0 0
        %2201 = vmatmul.mubr.bf16.gmra.mrb[0].mxu0 %v1970
        %v2202 = vpop.f32.mrb[0].mxu0
        %v2203 = vadd.f32 %v1825, %v2202
        %v2204 = vpop.f32.mrb[0].mxu0
        %v2205 = vpop.f32.mrb[0].mxu0
        %v2206 = vadd.f32 %v1828, %v2205
        %v2207 = vpop.f32.mrb[0].mxu0
        %2208 = vmatprep.mubr.bf16.mxu0 0
        %2209 = vmatmul.mubr.bf16.gmra.mrb[0].mxu0 %v1979
        %v2210 = vpop.f32.mrb[0].mxu0
        %v2211 = vadd.f32 %v1833, %v2210
        %v2212 = vpop.f32.mrb[0].mxu0
        %v2213 = vpop.f32.mrb[0].mxu0
        %v2214 = vadd.f32 %v1836, %v2213
        %v2215 = vpop.f32.mrb[0].mxu0
        %2216 = vmatprep.mubr.bf16.mxu0 0
        %2217 = vmatmul.mubr.bf16.gmra.mrb[0].mxu0 %v1988
        %v2218 = vpop.f32.mrb[0].mxu0
        %v2219 = vadd.f32 %v1841, %v2218
        %v2220 = vpop.f32.mrb[0].mxu0
        %v2221 = vpop.f32.mrb[0].mxu0
        %v2222 = vadd.f32 %v1844, %v2221
        %v2223 = vpop.f32.mrb[0].mxu0
        %2224 = vmatprep.mubr.bf16.mxu0 0
        %2225 = vmatmul.mubr.bf16.gmra.mrb[0].mxu0 %v1997
        %v2226 = vpop.f32.mrb[0].mxu0
        %v2227 = vadd.f32 %v1849, %v2226
        %v2228 = vpop.f32.mrb[0].mxu0
        %v2229 = vpop.f32.mrb[0].mxu0
        %v2230 = vadd.f32 %v1852, %v2229
        %v2231 = vpop.f32.mrb[0].mxu0
        %2232 = vmatprep.mubr.bf16.mxu0 0
        %2233 = vmatmul.mubr.bf16.gmra.mrb[0].mxu0 %v2006
        %v2234 = vpop.f32.mrb[0].mxu0
        %v2235 = vadd.f32 %v1857, %v2234
        %v2236 = vpop.f32.mrb[0].mxu0
        %v2237 = vpop.f32.mrb[0].mxu0
        %v2238 = vadd.f32 %v1860, %v2237
        %v2239 = vpop.f32.mrb[0].mxu0
        %2240 = vmatprep.mubr.bf16.mxu0 0
        %2241 = vmatmul.mubr.bf16.gmra.mrb[0].mxu0 %v2015
        %v2242 = vpop.f32.mrb[0].mxu0
        %v2243 = vadd.f32 %v1865, %v2242
        %v2244 = vpop.f32.mrb[0].mxu0
        %v2245 = vpop.f32.mrb[0].mxu0
        %v2246 = vadd.f32 %v1868, %v2245
        %v2247 = vpop.f32.mrb[0].mxu0
        %2248 = vmatprep.mubr.bf16.mxu0 0
        %2249 = vmatmul.mubr.bf16.gmra.mrb[0].mxu0 %v2024
        %v2250 = vpop.f32.mrb[0].mxu0
        %v2251 = vadd.f32 %v1873, %v2250
        %v2252 = vpop.f32.mrb[0].mxu0
        %v2253 = vpop.f32.mrb[0].mxu0
        %v2254 = vadd.f32 %v1876, %v2253
        %v2255 = vpop.f32.mrb[0].mxu0
        %2256 = vmatprep.mubr.bf16.mxu0 0
        %2257 = vmatmul.mubr.bf16.gmra.mrb[0].mxu0 %v2033
        %v2258 = vpop.f32.mrb[0].mxu0
        %v2259 = vadd.f32 %v1881, %v2258
        %v2260 = vpop.f32.mrb[0].mxu0
        %v2261 = vpop.f32.mrb[0].mxu0
        %v2262 = vadd.f32 %v1884, %v2261
        %v2263 = vpop.f32.mrb[0].mxu0
        %2264 = vmatprep.mubr.bf16.mxu0 0
        %2265 = vmatmul.mubr.bf16.gmra.mrb[0].mxu0 %v2042
        %v2266 = vpop.f32.mrb[0].mxu0
        %v2267 = vadd.f32 %v1889, %v2266
        %v2268 = vpop.f32.mrb[0].mxu0
        %v2269 = vpop.f32.mrb[0].mxu0
        %v2270 = vadd.f32 %v1892, %v2269
        %v2271 = vpop.f32.mrb[0].mxu0
        %2272 = vmatprep.mubr.bf16.mxu0 0
        %2273 = vmatmul.mubr.bf16.gmra.mrb[0].mxu0 %v2051
        %v2274 = vpop.f32.mrb[0].mxu0
        %v2275 = vadd.f32 %v1897, %v2274
        %v2276 = vpop.f32.mrb[0].mxu0
        %v2277 = vpop.f32.mrb[0].mxu0
        %v2278 = vadd.f32 %v1900, %v2277
        %v2279 = vpop.f32.mrb[0].mxu0
        %2280 = vmatprep.mubr.bf16.mxu0 0
        %2281 = vmatmul.mubr.bf16.gmra.mrb[0].mxu0 %v2060
        %v2282 = vpop.f32.mrb[0].mxu0
        %v2283 = vadd.f32 %v1905, %v2282
        %v2284 = vpop.f32.mrb[0].mxu0
        %v2285 = vpop.f32.mrb[0].mxu0
        %v2286 = vadd.f32 %v1908, %v2285
        %v2287 = vpop.f32.mrb[0].mxu0
        %2288 = vmatprep.mubr.bf16.mxu0 0
        %2289 = vmatmul.mubr.bf16.gmra.mrb[0].mxu0 %v2069
        %v2290 = vpop.f32.mrb[0].mxu0
        %v2291 = vadd.f32 %v1913, %v2290
        %v2292 = vpop.f32.mrb[0].mxu0
        %v2293 = vpop.f32.mrb[0].mxu0
        %v2294 = vadd.f32 %v1916, %v2293
        %v2295 = vpop.f32.mrb[0].mxu0
        %2296 = vmatprep.mubr.bf16.mxu0 0
        %2297 = vmatmul.mubr.bf16.gmra.mrb[0].mxu0 %v2078
        %v2298 = vpop.f32.mrb[0].mxu0
        %v2299 = vadd.f32 %v1921, %v2298
        %v2300 = vpop.f32.mrb[0].mxu0
        %v2301 = vpop.f32.mrb[0].mxu0
        %v2302 = vadd.f32 %v1924, %v2301
        %v2303 = vpop.f32.mrb[0].mxu0
        %2304 = vmatprep.mubr.bf16.mxu0 0
        %2305 = vmatmul.mubr.bf16.gmra.mrb[0].mxu0 %v2087
        %v2306 = vpop.f32.mrb[0].mxu0
        %v2307 = vadd.f32 %v1929, %v2306
        %v2308 = vpop.f32.mrb[0].mxu0
        %v2309 = vpop.f32.mrb[0].mxu0
        %v2310 = vadd.f32 %v1932, %v2309
        %v2311 = vpop.f32.mrb[0].mxu0
        %2312 = vdwg.mxu0
        %v2313 = vld [vmem:[#allocation2 + $0x80] sm:$0x1f]
        %vm2314 = vmpackc.low %vm1287, %vm1287
        %vm2315 = vmpackc.low %vm1288, %vm1288
        %vm2316 = vmpackc.low %vm1289, %vm1289
        %vm2317 = vmpackc.low %vm1290, %vm1290
        %vm2318 = vmpackc.low %vm1291, %vm1291
        %vm2319 = vmpackc.low %vm1292, %vm1292
        %vm2320 = vmpackc.low %vm1293, %vm1293
        %vm2321 = vmpackc.low %vm1294, %vm1294
        %vm2322 = vmpackc.low %vm1295, %vm1295
        %vm2323 = vmpackc.low %vm1296, %vm1296
        %vm2324 = vmpackc.low %vm1297, %vm1297
        %vm2325 = vmpackc.low %vm1298, %vm1298
        %vm2326 = vmpackc.low %vm1299, %vm1299
        %vm2327 = vmpackc.low %vm1300, %vm1300
        %vm2328 = vmpackc.low %vm1301, %vm1301
        %vm2329 = vmpackc.low %vm1302, %vm1302
        %vm2330 = vmpackc.low %vm1303, %vm1303
        %vm2331 = vmpackc.low %vm1304, %vm1304
        %vm2332 = vmpackc.low %vm1305, %vm1305
        %vm2333 = vmpackc.low %vm1306, %vm1306
        %vm2334 = vmpackc.low %vm1307, %vm1307
        %vm2335 = vmpackc.low %vm1308, %vm1308
        %vm2336 = vmpackc.low %vm1309, %vm1309
        %vm2337 = vmpackc.low %vm1310, %vm1310
        %vm2338 = vmpackc.low %vm1311, %vm1311
        %vm2339 = vmpackc.low %vm1312, %vm1312
        %vm2340 = vmpackc.low %vm1313, %vm1313
        %vm2341 = vmpackc.low %vm1314, %vm1314
        %vm2342 = vmpackc.low %vm1315, %vm1315
        %vm2343 = vmpackc.low %vm1316, %vm1316
        %vm2344 = vmpackc.low %vm1317, %vm1317
        %vm2345 = vmpackc.low %vm1318, %vm1318
        %v2346 = vsel %vm2314, 65537, 0
        %v2347 = vsel %vm2315, 65537, 0
        %v2348 = vsel %vm2316, 65537, 0
        %v2349 = vsel %vm2317, 65537, 0
        %v2350 = vsel %vm2318, 65537, 0
        %v2351 = vsel %vm2319, 65537, 0
        %v2352 = vsel %vm2320, 65537, 0
        %v2353 = vsel %vm2321, 65537, 0
        %v2354 = vsel %vm2322, 65537, 0
        %v2355 = vsel %vm2323, 65537, 0
        %v2356 = vsel %vm2324, 65537, 0
        %v2357 = vsel %vm2325, 65537, 0
        %v2358 = vsel %vm2326, 65537, 0
        %v2359 = vsel %vm2327, 65537, 0
        %v2360 = vsel %vm2328, 65537, 0
        %v2361 = vsel %vm2329, 65537, 0
        %v2362 = vsel %vm2330, 65537, 0
        %v2363 = vsel %vm2331, 65537, 0
        %v2364 = vsel %vm2332, 65537, 0
        %v2365 = vsel %vm2333, 65537, 0
        %v2366 = vsel %vm2334, 65537, 0
        %v2367 = vsel %vm2335, 65537, 0
        %v2368 = vsel %vm2336, 65537, 0
        %v2369 = vsel %vm2337, 65537, 0
        %v2370 = vsel %vm2338, 65537, 0
        %v2371 = vsel %vm2339, 65537, 0
        %v2372 = vsel %vm2340, 65537, 0
        %v2373 = vsel %vm2341, 65537, 0
        %v2374 = vsel %vm2342, 65537, 0
        %v2375 = vsel %vm2343, 65537, 0
        %v2376 = vsel %vm2344, 65537, 0
        %v2377 = vsel %vm2345, 65537, 0
        %v2378 = vunpack.c.l.b16 %v2346
        %v2379 = vunpack.c.l.b16 %v2347
        %v2380 = vunpack.c.l.b16 %v2348
        %v2381 = vunpack.c.l.b16 %v2349
        %v2382 = vunpack.c.l.b16 %v2350
        %v2383 = vunpack.c.l.b16 %v2351
        %v2384 = vunpack.c.l.b16 %v2352
        %v2385 = vunpack.c.l.b16 %v2353
        %v2386 = vunpack.c.l.b16 %v2354
        %v2387 = vunpack.c.l.b16 %v2355
        %v2388 = vunpack.c.l.b16 %v2356
        %v2389 = vunpack.c.l.b16 %v2357
        %v2390 = vunpack.c.l.b16 %v2358
        %v2391 = vunpack.c.l.b16 %v2359
        %v2392 = vunpack.c.l.b16 %v2360
        %v2393 = vunpack.c.l.b16 %v2361
        %v2394 = vunpack.c.l.b16 %v2362
        %v2395 = vunpack.c.l.b16 %v2363
        %v2396 = vunpack.c.l.b16 %v2364
        %v2397 = vunpack.c.l.b16 %v2365
        %v2398 = vunpack.c.l.b16 %v2366
        %v2399 = vunpack.c.l.b16 %v2367
        %v2400 = vunpack.c.l.b16 %v2368
        %v2401 = vunpack.c.l.b16 %v2369
        %v2402 = vunpack.c.l.b16 %v2370
        %v2403 = vunpack.c.l.b16 %v2371
        %v2404 = vunpack.c.l.b16 %v2372
        %v2405 = vunpack.c.l.b16 %v2373
        %v2406 = vunpack.c.l.b16 %v2374
        %v2407 = vunpack.c.l.b16 %v2375
        %v2408 = vunpack.c.l.b16 %v2376
        %v2409 = vunpack.c.l.b16 %v2377
        %v2410 = vpack.c.b16 %v2379, %v2378
        %v2411 = vpack.c.b16 %v2381, %v2380
        %v2412 = vpack.c.b16 %v2383, %v2382
        %v2413 = vpack.c.b16 %v2385, %v2384
        %v2414 = vpack.c.b16 %v2387, %v2386
        %v2415 = vpack.c.b16 %v2389, %v2388
        %v2416 = vpack.c.b16 %v2391, %v2390
        %v2417 = vpack.c.b16 %v2393, %v2392
        %v2418 = vpack.c.b16 %v2395, %v2394
        %v2419 = vpack.c.b16 %v2397, %v2396
        %v2420 = vpack.c.b16 %v2399, %v2398
        %v2421 = vpack.c.b16 %v2401, %v2400
        %v2422 = vpack.c.b16 %v2403, %v2402
        %v2423 = vpack.c.b16 %v2405, %v2404
        %v2424 = vpack.c.b16 %v2407, %v2406
        %v2425 = vpack.c.b16 %v2409, %v2408
        %v2427 = vshrl.u32 %v2410, 16
        %v2429 = vrot.slane %v2427, 3
        %v2430 = vshll.u32 %v2410, 16
        %v2432 = vrot.slane %v2430, 4
        %v2433 = vor.u32 %v2429, %v2432
        %v2435 = vshrl.u32 %v2411, 16
        %v2437 = vrot.slane %v2435, 3
        %v2438 = vshll.u32 %v2411, 16
        %v2440 = vrot.slane %v2438, 4
        %v2441 = vor.u32 %v2437, %v2440
        %v2442 = vsel %vm1935, %v2433, %v2441
        %v2444 = vshrl.u32 %v2412, 16
        %v2446 = vrot.slane %v2444, 3
        %v2447 = vshll.u32 %v2412, 16
        %v2449 = vrot.slane %v2447, 4
        %v2450 = vor.u32 %v2446, %v2449
        %v2451 = vsel %vm1935, %v2441, %v2450
        %v2453 = vshrl.u32 %v2413, 16
        %v2455 = vrot.slane %v2453, 3
        %v2456 = vshll.u32 %v2413, 16
        %v2458 = vrot.slane %v2456, 4
        %v2459 = vor.u32 %v2455, %v2458
        %v2460 = vsel %vm1935, %v2450, %v2459
        %v2462 = vshrl.u32 %v2414, 16
        %v2464 = vrot.slane %v2462, 3
        %v2465 = vshll.u32 %v2414, 16
        %v2467 = vrot.slane %v2465, 4
        %v2468 = vor.u32 %v2464, %v2467
        %v2469 = vsel %vm1935, %v2459, %v2468
        %v2471 = vshrl.u32 %v2415, 16
        %v2473 = vrot.slane %v2471, 3
        %v2474 = vshll.u32 %v2415, 16
        %v2476 = vrot.slane %v2474, 4
        %v2477 = vor.u32 %v2473, %v2476
        %v2478 = vsel %vm1935, %v2468, %v2477
        %v2480 = vshrl.u32 %v2416, 16
        %v2482 = vrot.slane %v2480, 3
        %v2483 = vshll.u32 %v2416, 16
        %v2485 = vrot.slane %v2483, 4
        %v2486 = vor.u32 %v2482, %v2485
        %v2487 = vsel %vm1935, %v2477, %v2486
        %v2489 = vshrl.u32 %v2417, 16
        %v2491 = vrot.slane %v2489, 3
        %v2492 = vshll.u32 %v2417, 16
        %v2494 = vrot.slane %v2492, 4
        %v2495 = vor.u32 %v2491, %v2494
        %v2496 = vsel %vm1935, %v2486, %v2495
        %v2498 = vshrl.u32 %v2418, 16
        %v2500 = vrot.slane %v2498, 3
        %v2501 = vshll.u32 %v2418, 16
        %v2503 = vrot.slane %v2501, 4
        %v2504 = vor.u32 %v2500, %v2503
        %v2505 = vsel %vm1935, %v2495, %v2504
        %v2507 = vshrl.u32 %v2419, 16
        %v2509 = vrot.slane %v2507, 3
        %v2510 = vshll.u32 %v2419, 16
        %v2512 = vrot.slane %v2510, 4
        %v2513 = vor.u32 %v2509, %v2512
        %v2514 = vsel %vm1935, %v2504, %v2513
        %v2516 = vshrl.u32 %v2420, 16
        %v2518 = vrot.slane %v2516, 3
        %v2519 = vshll.u32 %v2420, 16
        %v2521 = vrot.slane %v2519, 4
        %v2522 = vor.u32 %v2518, %v2521
        %v2523 = vsel %vm1935, %v2513, %v2522
        %v2525 = vshrl.u32 %v2421, 16
        %v2527 = vrot.slane %v2525, 3
        %v2528 = vshll.u32 %v2421, 16
        %v2530 = vrot.slane %v2528, 4
        %v2531 = vor.u32 %v2527, %v2530
        %v2532 = vsel %vm1935, %v2522, %v2531
        %v2534 = vshrl.u32 %v2422, 16
        %v2536 = vrot.slane %v2534, 3
        %v2537 = vshll.u32 %v2422, 16
        %v2539 = vrot.slane %v2537, 4
        %v2540 = vor.u32 %v2536, %v2539
        %v2541 = vsel %vm1935, %v2531, %v2540
        %v2543 = vshrl.u32 %v2423, 16
        %v2545 = vrot.slane %v2543, 3
        %v2546 = vshll.u32 %v2423, 16
        %v2548 = vrot.slane %v2546, 4
        %v2549 = vor.u32 %v2545, %v2548
        %v2550 = vsel %vm1935, %v2540, %v2549
        %v2552 = vshrl.u32 %v2424, 16
        %v2554 = vrot.slane %v2552, 3
        %v2555 = vshll.u32 %v2424, 16
        %v2557 = vrot.slane %v2555, 4
        %v2558 = vor.u32 %v2554, %v2557
        %v2559 = vsel %vm1935, %v2549, %v2558
        %v2561 = vshrl.u32 %v2425, 16
        %v2563 = vrot.slane %v2561, 3
        %v2564 = vshll.u32 %v2425, 16
        %v2566 = vrot.slane %v2564, 4
        %v2567 = vor.u32 %v2563, %v2566
        %v2568 = vsel %vm1935, %v2558, %v2567
        %vm2569 = vcmp.ne.s16.totalorder %v2433, 0
        %vm2570 = vcmp.ne.s16.totalorder %v2442, 0
        %vm2571 = vcmp.ne.s16.totalorder %v2451, 0
        %vm2572 = vcmp.ne.s16.totalorder %v2460, 0
        %vm2573 = vcmp.ne.s16.totalorder %v2469, 0
        %vm2574 = vcmp.ne.s16.totalorder %v2478, 0
        %vm2575 = vcmp.ne.s16.totalorder %v2487, 0
        %vm2576 = vcmp.ne.s16.totalorder %v2496, 0
        %vm2577 = vcmp.ne.s16.totalorder %v2505, 0
        %vm2578 = vcmp.ne.s16.totalorder %v2514, 0
        %vm2579 = vcmp.ne.s16.totalorder %v2523, 0
        %vm2580 = vcmp.ne.s16.totalorder %v2532, 0
        %vm2581 = vcmp.ne.s16.totalorder %v2541, 0
        %vm2582 = vcmp.ne.s16.totalorder %v2550, 0
        %vm2583 = vcmp.ne.s16.totalorder %v2559, 0
        %vm2584 = vcmp.ne.s16.totalorder %v2568, 0
        %vm2585 = vcmp.ne.s16.totalorder %v2567, 0
        %v2586 = vsel %vm2569, %v1642, 0
        %v2587 = vsel %vm2570, %v1320, 0
        %v2588 = vsel %vm2571, %v1321, 0
        %v2589 = vsel %vm2572, %v1322, 0
        %v2590 = vsel %vm2573, %v1323, 0
        %v2591 = vsel %vm2574, %v1324, 0
        %v2592 = vsel %vm2575, %v1325, 0
        %v2593 = vsel %vm2576, %v1326, 0
        %v2594 = vsel %vm2577, %v1327, 0
        %v2595 = vsel %vm2578, %v1328, 0
        %v2596 = vsel %vm2579, %v1329, 0
        %v2597 = vsel %vm2580, %v1330, 0
        %v2598 = vsel %vm2581, %v1331, 0
        %v2599 = vsel %vm2582, %v1332, 0
        %v2600 = vsel %vm2583, %v1333, 0
        %v2601 = vsel %vm2584, %v1334, 0
        %v2602 = vsel %vm2585, %v2313, 0
        %s2603 = scalar_lea.vmem [#allocation8], 128
        %v2604 = vld [vmem:[%s2603] sm:$0xf]
        %v2605 = vld [vmem:[%s2603 + $0x4] sm:$0xf]
        %v2606 = vld [vmem:[%s2603 + $0x8] sm:$0xf]
        %v2607 = vld [vmem:[%s2603 + $0xc] sm:$0xf]
        %v2608 = vld [vmem:[%s2603 + $0x10] sm:$0xf]
        %v2609 = vld [vmem:[%s2603 + $0x14] sm:$0xf]
        %v2610 = vld [vmem:[%s2603 + $0x18] sm:$0xf]
        %v2611 = vld [vmem:[%s2603 + $0x1c] sm:$0xf]
        %v2612 = vld [vmem:[%s2603 + $0x20] sm:$0xf]
        %v2613 = vld [vmem:[%s2603 + $0x24] sm:$0xf]
        %v2614 = vld [vmem:[%s2603 + $0x28] sm:$0xf]
        %v2615 = vld [vmem:[%s2603 + $0x2c] sm:$0xf]
        %v2616 = vld [vmem:[%s2603 + $0x30] sm:$0xf]
        %v2617 = vld [vmem:[%s2603 + $0x34] sm:$0xf]
        %v2618 = vld [vmem:[%s2603 + $0x38] sm:$0xf]
        %v2619 = vld [vmem:[%s2603 + $0x3c] sm:$0xf]
        %v2621 = vshrl.u32 %v2586, 16
        %v2623 = vrot.slane %v2621, 4
        %v2624 = vshll.u32 %v2586, 16
        %v2626 = vrot.slane %v2624, 5
        %v2627 = vor.u32 %v2623, %v2626
        %v2629 = vshrl.u32 %v2587, 16
        %v2631 = vrot.slane %v2629, 4
        %v2632 = vshll.u32 %v2587, 16
        %v2634 = vrot.slane %v2632, 5
        %v2635 = vor.u32 %v2631, %v2634
        %v2636 = vsel %vm1448, %v2627, %v2635
        %v2638 = vshrl.u32 %v2588, 16
        %v2640 = vrot.slane %v2638, 4
        %v2641 = vshll.u32 %v2588, 16
        %v2643 = vrot.slane %v2641, 5
        %v2644 = vor.u32 %v2640, %v2643
        %v2645 = vsel %vm1448, %v2635, %v2644
        %v2647 = vshrl.u32 %v2589, 16
        %v2649 = vrot.slane %v2647, 4
        %v2650 = vshll.u32 %v2589, 16
        %v2652 = vrot.slane %v2650, 5
        %v2653 = vor.u32 %v2649, %v2652
        %v2654 = vsel %vm1448, %v2644, %v2653
        %v2656 = vshrl.u32 %v2590, 16
        %v2658 = vrot.slane %v2656, 4
        %v2659 = vshll.u32 %v2590, 16
        %v2661 = vrot.slane %v2659, 5
        %v2662 = vor.u32 %v2658, %v2661
        %v2663 = vsel %vm1448, %v2653, %v2662
        %v2665 = vshrl.u32 %v2591, 16
        %v2667 = vrot.slane %v2665, 4
        %v2668 = vshll.u32 %v2591, 16
        %v2670 = vrot.slane %v2668, 5
        %v2671 = vor.u32 %v2667, %v2670
        %v2672 = vsel %vm1448, %v2662, %v2671
        %v2674 = vshrl.u32 %v2592, 16
        %v2676 = vrot.slane %v2674, 4
        %v2677 = vshll.u32 %v2592, 16
        %v2679 = vrot.slane %v2677, 5
        %v2680 = vor.u32 %v2676, %v2679
        %v2681 = vsel %vm1448, %v2671, %v2680
        %v2683 = vshrl.u32 %v2593, 16
        %v2685 = vrot.slane %v2683, 4
        %v2686 = vshll.u32 %v2593, 16
        %v2688 = vrot.slane %v2686, 5
        %v2689 = vor.u32 %v2685, %v2688
        %v2690 = vsel %vm1448, %v2680, %v2689
        %v2692 = vshrl.u32 %v2594, 16
        %v2694 = vrot.slane %v2692, 4
        %v2695 = vshll.u32 %v2594, 16
        %v2697 = vrot.slane %v2695, 5
        %v2698 = vor.u32 %v2694, %v2697
        %v2699 = vsel %vm1448, %v2689, %v2698
        %v2701 = vshrl.u32 %v2595, 16
        %v2703 = vrot.slane %v2701, 4
        %v2704 = vshll.u32 %v2595, 16
        %v2706 = vrot.slane %v2704, 5
        %v2707 = vor.u32 %v2703, %v2706
        %v2708 = vsel %vm1448, %v2698, %v2707
        %v2710 = vshrl.u32 %v2596, 16
        %v2712 = vrot.slane %v2710, 4
        %v2713 = vshll.u32 %v2596, 16
        %v2715 = vrot.slane %v2713, 5
        %v2716 = vor.u32 %v2712, %v2715
        %v2717 = vsel %vm1448, %v2707, %v2716
        %v2719 = vshrl.u32 %v2597, 16
        %v2721 = vrot.slane %v2719, 4
        %v2722 = vshll.u32 %v2597, 16
        %v2724 = vrot.slane %v2722, 5
        %v2725 = vor.u32 %v2721, %v2724
        %v2726 = vsel %vm1448, %v2716, %v2725
        %v2728 = vshrl.u32 %v2598, 16
        %v2730 = vrot.slane %v2728, 4
        %v2731 = vshll.u32 %v2598, 16
        %v2733 = vrot.slane %v2731, 5
        %v2734 = vor.u32 %v2730, %v2733
        %v2735 = vsel %vm1448, %v2725, %v2734
        %v2737 = vshrl.u32 %v2599, 16
        %v2739 = vrot.slane %v2737, 4
        %v2740 = vshll.u32 %v2599, 16
        %v2742 = vrot.slane %v2740, 5
        %v2743 = vor.u32 %v2739, %v2742
        %v2744 = vsel %vm1448, %v2734, %v2743
        %v2746 = vshrl.u32 %v2600, 16
        %v2748 = vrot.slane %v2746, 4
        %v2749 = vshll.u32 %v2600, 16
        %v2751 = vrot.slane %v2749, 5
        %v2752 = vor.u32 %v2748, %v2751
        %v2753 = vsel %vm1448, %v2743, %v2752
        %v2755 = vshrl.u32 %v2601, 16
        %v2757 = vrot.slane %v2755, 4
        %v2758 = vshll.u32 %v2601, 16
        %v2760 = vrot.slane %v2758, 5
        %v2761 = vor.u32 %v2757, %v2760
        %v2762 = vsel %vm1448, %v2752, %v2761
        %v2764 = vshrl.u32 %v2602, 16
        %v2766 = vrot.slane %v2764, 4
        %v2767 = vshll.u32 %v2602, 16
        %v2769 = vrot.slane %v2767, 5
        %v2770 = vor.u32 %v2766, %v2769
        %v2771 = vsel %vm1448, %v2761, %v2770
        %v2804 = vunpack.c.l.b16 %v2604
        %v2805 = vunpack.c.l.b16 %v2605
        %v2806 = vunpack.c.l.b16 %v2606
        %v2807 = vunpack.c.l.b16 %v2607
        %v2808 = vunpack.c.l.b16 %v2608
        %v2809 = vunpack.c.l.b16 %v2609
        %v2810 = vunpack.c.l.b16 %v2610
        %v2811 = vunpack.c.l.b16 %v2611
        %v2812 = vunpack.c.l.b16 %v2612
        %v2813 = vunpack.c.l.b16 %v2613
        %v2814 = vunpack.c.l.b16 %v2614
        %v2815 = vunpack.c.l.b16 %v2615
        %v2816 = vunpack.c.l.b16 %v2616
        %v2817 = vunpack.c.l.b16 %v2617
        %v2818 = vunpack.c.l.b16 %v2618
        %v2819 = vunpack.c.l.b16 %v2619
        %v2820 = vpack.c.b16 %v2805, %v2804
        %v2821 = vpack.c.b16 %v2807, %v2806
        %v2822 = vpack.c.b16 %v2809, %v2808
        %v2823 = vpack.c.b16 %v2811, %v2810
        %v2824 = vpack.c.b16 %v2813, %v2812
        %v2825 = vpack.c.b16 %v2815, %v2814
        %v2826 = vpack.c.b16 %v2817, %v2816
        %v2827 = vpack.c.b16 %v2819, %v2818
        %2836 = vmatprep.subr.bf16.mxu0 0
        %2837 = vmatpush1.bf16.msra.mxu0 %v2820
        %2838 = vmatprep.subr.bf16.mxu0 0
        %2839 = vmatpush1.bf16.msra.mxu0 %v2821
        %2840 = vmatprep.subr.bf16.mxu0 0
        %2841 = vmatpush1.bf16.msra.mxu0 %v2822
        %2842 = vmatprep.subr.bf16.mxu0 0
        %2843 = vmatpush1.bf16.msra.mxu0 %v2823
        %2844 = vmatprep.subr.bf16.mxu0 0
        %2845 = vmatpush1.bf16.msra.mxu0 %v2824
        %2846 = vmatprep.subr.bf16.mxu0 0
        %2847 = vmatpush1.bf16.msra.mxu0 %v2825
        %2848 = vmatprep.subr.bf16.mxu0 0
        %2849 = vmatpush1.bf16.msra.mxu0 %v2826
        %2850 = vmatprep.subr.bf16.mxu0 0
        %2851 = vmatpush1.bf16.msra.mxu0 %v2827
        %2852 = vmatprep.subr.bf16.mxu0 0
        %2853 = vmatpush1.bf16.msra.mxu0 0
        %2854 = vmatprep.subr.bf16.mxu0 0
        %2855 = vmatpush1.bf16.msra.mxu0 0
        %2856 = vmatprep.subr.bf16.mxu0 0
        %2857 = vmatpush1.bf16.msra.mxu0 0
        %2858 = vmatprep.subr.bf16.mxu0 0
        %2859 = vmatpush1.bf16.msra.mxu0 0
        %2860 = vmatprep.subr.bf16.mxu0 0
        %2861 = vmatpush1.bf16.msra.mxu0 0
        %2862 = vmatprep.subr.bf16.mxu0 0
        %2863 = vmatpush1.bf16.msra.mxu0 0
        %2864 = vmatprep.subr.bf16.mxu0 0
        %2865 = vmatpush1.bf16.msra.mxu0 0
        %2866 = vmatprep.subr.bf16.mxu0 0
        %2867 = vmatpush1.bf16.msra.mxu0 0
        %2868 = vmatprep.mubr.bf16.mxu0 0
        %2869 = vmatmul.mubr.bf16.gmra.mrb[0].mxu0 %v2636
        %v2870 = vpop.f32.mrb[0].mxu0
        %v2871 = vadd.f32 0.0, %v2870
        %v2872 = vpop.f32.mrb[0].mxu0
        %v2873 = vpop.f32.mrb[0].mxu0
        %v2874 = vadd.f32 0.0, %v2873
        %v2875 = vpop.f32.mrb[0].mxu0
        %2876 = vmatprep.mubr.bf16.mxu0 0
        %2877 = vmatmul.mubr.bf16.gmra.mrb[0].mxu0 %v2645
        %v2878 = vpop.f32.mrb[0].mxu0
        %v2879 = vadd.f32 0.0, %v2878
        %v2880 = vpop.f32.mrb[0].mxu0
        %v2881 = vpop.f32.mrb[0].mxu0
        %v2882 = vadd.f32 0.0, %v2881
        %v2883 = vpop.f32.mrb[0].mxu0
        %2884 = vmatprep.mubr.bf16.mxu0 0
        %2885 = vmatmul.mubr.bf16.gmra.mrb[0].mxu0 %v2654
        %v2886 = vpop.f32.mrb[0].mxu0
        %v2887 = vadd.f32 0.0, %v2886
        %v2888 = vpop.f32.mrb[0].mxu0
        %v2889 = vpop.f32.mrb[0].mxu0
        %v2890 = vadd.f32 0.0, %v2889
        %v2891 = vpop.f32.mrb[0].mxu0
        %2892 = vmatprep.mubr.bf16.mxu0 0
        %2893 = vmatmul.mubr.bf16.gmra.mrb[0].mxu0 %v2663
        %v2894 = vpop.f32.mrb[0].mxu0
        %v2895 = vadd.f32 0.0, %v2894
        %v2896 = vpop.f32.mrb[0].mxu0
        %v2897 = vpop.f32.mrb[0].mxu0
        %v2898 = vadd.f32 0.0, %v2897
        %v2899 = vpop.f32.mrb[0].mxu0
        %2900 = vmatprep.mubr.bf16.mxu0 0
        %2901 = vmatmul.mubr.bf16.gmra.mrb[0].mxu0 %v2672
        %v2902 = vpop.f32.mrb[0].mxu0
        %v2903 = vadd.f32 0.0, %v2902
        %v2904 = vpop.f32.mrb[0].mxu0
        %v2905 = vpop.f32.mrb[0].mxu0
        %v2906 = vadd.f32 0.0, %v2905
        %v2907 = vpop.f32.mrb[0].mxu0
        %2908 = vmatprep.mubr.bf16.mxu0 0
        %2909 = vmatmul.mubr.bf16.gmra.mrb[0].mxu0 %v2681
        %v2910 = vpop.f32.mrb[0].mxu0
        %v2911 = vadd.f32 0.0, %v2910
        %v2912 = vpop.f32.mrb[0].mxu0
        %v2913 = vpop.f32.mrb[0].mxu0
        %v2914 = vadd.f32 0.0, %v2913
        %v2915 = vpop.f32.mrb[0].mxu0
        %2916 = vmatprep.mubr.bf16.mxu0 0
        %2917 = vmatmul.mubr.bf16.gmra.mrb[0].mxu0 %v2690
        %v2918 = vpop.f32.mrb[0].mxu0
        %v2919 = vadd.f32 0.0, %v2918
        %v2920 = vpop.f32.mrb[0].mxu0
        %v2921 = vpop.f32.mrb[0].mxu0
        %v2922 = vadd.f32 0.0, %v2921
        %v2923 = vpop.f32.mrb[0].mxu0
        %2924 = vmatprep.mubr.bf16.mxu0 0
        %2925 = vmatmul.mubr.bf16.gmra.mrb[0].mxu0 %v2699
        %v2926 = vpop.f32.mrb[0].mxu0
        %v2927 = vadd.f32 0.0, %v2926
        %v2928 = vpop.f32.mrb[0].mxu0
        %v2929 = vpop.f32.mrb[0].mxu0
        %v2930 = vadd.f32 0.0, %v2929
        %v2931 = vpop.f32.mrb[0].mxu0
        %2932 = vmatprep.mubr.bf16.mxu0 0
        %2933 = vmatmul.mubr.bf16.gmra.mrb[0].mxu0 %v2708
        %v2934 = vpop.f32.mrb[0].mxu0
        %v2935 = vadd.f32 0.0, %v2934
        %v2936 = vpop.f32.mrb[0].mxu0
        %v2937 = vpop.f32.mrb[0].mxu0
        %v2938 = vadd.f32 0.0, %v2937
        %v2939 = vpop.f32.mrb[0].mxu0
        %2940 = vmatprep.mubr.bf16.mxu0 0
        %2941 = vmatmul.mubr.bf16.gmra.mrb[0].mxu0 %v2717
        %v2942 = vpop.f32.mrb[0].mxu0
        %v2943 = vadd.f32 0.0, %v2942
        %v2944 = vpop.f32.mrb[0].mxu0
        %v2945 = vpop.f32.mrb[0].mxu0
        %v2946 = vadd.f32 0.0, %v2945
        %v2947 = vpop.f32.mrb[0].mxu0
        %2948 = vmatprep.mubr.bf16.mxu0 0
        %2949 = vmatmul.mubr.bf16.gmra.mrb[0].mxu0 %v2726
        %v2950 = vpop.f32.mrb[0].mxu0
        %v2951 = vadd.f32 0.0, %v2950
        %v2952 = vpop.f32.mrb[0].mxu0
        %v2953 = vpop.f32.mrb[0].mxu0
        %v2954 = vadd.f32 0.0, %v2953
        %v2955 = vpop.f32.mrb[0].mxu0
        %2956 = vmatprep.mubr.bf16.mxu0 0
        %2957 = vmatmul.mubr.bf16.gmra.mrb[0].mxu0 %v2735
        %v2958 = vpop.f32.mrb[0].mxu0
        %v2959 = vadd.f32 0.0, %v2958
        %v2960 = vpop.f32.mrb[0].mxu0
        %v2961 = vpop.f32.mrb[0].mxu0
        %v2962 = vadd.f32 0.0, %v2961
        %v2963 = vpop.f32.mrb[0].mxu0
        %2964 = vmatprep.mubr.bf16.mxu0 0
        %2965 = vmatmul.mubr.bf16.gmra.mrb[0].mxu0 %v2744
        %v2966 = vpop.f32.mrb[0].mxu0
        %v2967 = vadd.f32 0.0, %v2966
        %v2968 = vpop.f32.mrb[0].mxu0
        %v2969 = vpop.f32.mrb[0].mxu0
        %v2970 = vadd.f32 0.0, %v2969
        %v2971 = vpop.f32.mrb[0].mxu0
        %2972 = vmatprep.mubr.bf16.mxu0 0
        %2973 = vmatmul.mubr.bf16.gmra.mrb[0].mxu0 %v2753
        %v2974 = vpop.f32.mrb[0].mxu0
        %v2975 = vadd.f32 0.0, %v2974
        %v2976 = vpop.f32.mrb[0].mxu0
        %v2977 = vpop.f32.mrb[0].mxu0
        %v2978 = vadd.f32 0.0, %v2977
        %v2979 = vpop.f32.mrb[0].mxu0
        %2980 = vmatprep.mubr.bf16.mxu0 0
        %2981 = vmatmul.mubr.bf16.gmra.mrb[0].mxu0 %v2762
        %v2982 = vpop.f32.mrb[0].mxu0
        %v2983 = vadd.f32 0.0, %v2982
        %v2984 = vpop.f32.mrb[0].mxu0
        %v2985 = vpop.f32.mrb[0].mxu0
        %v2986 = vadd.f32 0.0, %v2985
        %v2987 = vpop.f32.mrb[0].mxu0
        %2988 = vmatprep.mubr.bf16.mxu0 0
        %2989 = vmatmul.mubr.bf16.gmra.mrb[0].mxu0 %v2771
        %v2990 = vpop.f32.mrb[0].mxu0
        %v2991 = vadd.f32 0.0, %v2990
        %v2992 = vpop.f32.mrb[0].mxu0
        %v2993 = vpop.f32.mrb[0].mxu0
        %v2994 = vadd.f32 0.0, %v2993
        %v2995 = vpop.f32.mrb[0].mxu0
        %2996 = vdwg.mxu0
        %v2997 = vadd.f32 %v2187, %v2871
        %v2998 = vadd.f32 %v2190, %v2874
        %v2999 = vadd.f32 %v2195, %v2879
        %v3000 = vadd.f32 %v2198, %v2882
        %v3001 = vadd.f32 %v2203, %v2887
        %v3002 = vadd.f32 %v2206, %v2890
        %v3003 = vadd.f32 %v2211, %v2895
        %v3004 = vadd.f32 %v2214, %v2898
        %v3005 = vadd.f32 %v2219, %v2903
        %v3006 = vadd.f32 %v2222, %v2906
        %v3007 = vadd.f32 %v2227, %v2911
        %v3008 = vadd.f32 %v2230, %v2914
        %v3009 = vadd.f32 %v2235, %v2919
        %v3010 = vadd.f32 %v2238, %v2922
        %v3011 = vadd.f32 %v2243, %v2927
        %v3012 = vadd.f32 %v2246, %v2930
        %v3013 = vadd.f32 %v2251, %v2935
        %v3014 = vadd.f32 %v2254, %v2938
        %v3015 = vadd.f32 %v2259, %v2943
        %v3016 = vadd.f32 %v2262, %v2946
        %v3017 = vadd.f32 %v2267, %v2951
        %v3018 = vadd.f32 %v2270, %v2954
        %v3019 = vadd.f32 %v2275, %v2959
        %v3020 = vadd.f32 %v2278, %v2962
        %v3021 = vadd.f32 %v2283, %v2967
        %v3022 = vadd.f32 %v2286, %v2970
        %v3023 = vadd.f32 %v2291, %v2975
        %v3024 = vadd.f32 %v2294, %v2978
        %v3025 = vadd.f32 %v2299, %v2983
        %v3026 = vadd.f32 %v2302, %v2986
        %v3027 = vadd.f32 %v2307, %v2991
        %v3028 = vadd.f32 %v2310, %v2994
        %v3029 = vld [vmem:[#allocation2 + $0x8] sm:$0xf8]
        %v3030 = vld [vmem:[#allocation2 + $0x10] sm:$0xff]
        %v3031 = vld [vmem:[#allocation2 + $0x18] sm:$0xff]
        %v3032 = vld [vmem:[#allocation2 + $0x20] sm:$0xff]
        %v3033 = vld [vmem:[#allocation2 + $0x28] sm:$0xff]
        %v3034 = vld [vmem:[#allocation2 + $0x30] sm:$0xff]
        %v3035 = vld [vmem:[#allocation2 + $0x38] sm:$0xff]
        %v3036 = vld [vmem:[#allocation2 + $0x40] sm:$0xff]
        %v3037 = vld [vmem:[#allocation2 + $0x48] sm:$0xff]
        %v3038 = vld [vmem:[#allocation2 + $0x50] sm:$0xff]
        %v3039 = vld [vmem:[#allocation2 + $0x58] sm:$0xff]
        %v3040 = vld [vmem:[#allocation2 + $0x60] sm:$0xff]
        %v3041 = vld [vmem:[#allocation2 + $0x68] sm:$0xff]
        %v3042 = vld [vmem:[#allocation2 + $0x70] sm:$0xff]
        %v3043 = vld [vmem:[#allocation2 + $0x78] sm:$0xff]
        %v3044 = vld [vmem:[#allocation2 + $0x80] sm:$0xff]
        %v3045 = vld [vmem:[#allocation2 + $0x88] sm:$0xf]
        %v3046 = vsel %vm1592, %v3029, 0
        %v3047 = vsel %vm1593, %v3030, 0
        %v3048 = vsel %vm1594, %v3031, 0
        %v3049 = vsel %vm1595, %v3032, 0
        %v3050 = vsel %vm1596, %v3033, 0
        %v3051 = vsel %vm1597, %v3034, 0
        %v3052 = vsel %vm1598, %v3035, 0
        %v3053 = vsel %vm1599, %v3036, 0
        %v3054 = vsel %vm1600, %v3037, 0
        %v3055 = vsel %vm1601, %v3038, 0
        %v3056 = vsel %vm1602, %v3039, 0
        %v3057 = vsel %vm1603, %v3040, 0
        %v3058 = vsel %vm1604, %v3041, 0
        %v3059 = vsel %vm1605, %v3042, 0
        %v3060 = vsel %vm1606, %v3043, 0
        %v3061 = vsel %vm1607, %v3044, 0
        %v3062 = vsel %vm1608, %v3045, 0
        %s3063 = scalar_lea.vmem [#allocation8], 192
        %v3064 = vld [vmem:[%s3063] sm:$0xf]
        %v3065 = vld [vmem:[%s3063 + $0x4] sm:$0xf]
        %v3066 = vld [vmem:[%s3063 + $0x8] sm:$0xf]
        %v3067 = vld [vmem:[%s3063 + $0xc] sm:$0xf]
        %v3068 = vld [vmem:[%s3063 + $0x10] sm:$0xf]
        %v3069 = vld [vmem:[%s3063 + $0x14] sm:$0xf]
        %v3070 = vld [vmem:[%s3063 + $0x18] sm:$0xf]
        %v3071 = vld [vmem:[%s3063 + $0x1c] sm:$0xf]
        %v3072 = vld [vmem:[%s3063 + $0x20] sm:$0xf]
        %v3073 = vld [vmem:[%s3063 + $0x24] sm:$0xf]
        %v3074 = vld [vmem:[%s3063 + $0x28] sm:$0xf]
        %v3075 = vld [vmem:[%s3063 + $0x2c] sm:$0xf]
        %v3076 = vld [vmem:[%s3063 + $0x30] sm:$0xf]
        %v3077 = vld [vmem:[%s3063 + $0x34] sm:$0xf]
        %v3078 = vld [vmem:[%s3063 + $0x38] sm:$0xf]
        %v3079 = vld [vmem:[%s3063 + $0x3c] sm:$0xf]
        %v3081 = vshrl.u32 %v3046, 16
        %v3083 = vrot.slane %v3081, 3
        %v3084 = vshll.u32 %v3046, 16
        %v3086 = vrot.slane %v3084, 4
        %v3087 = vor.u32 %v3083, %v3086
        %v3089 = vshrl.u32 %v3047, 16
        %v3091 = vrot.slane %v3089, 3
        %v3092 = vshll.u32 %v3047, 16
        %v3094 = vrot.slane %v3092, 4
        %v3095 = vor.u32 %v3091, %v3094
        %v3096 = vsel %vm1935, %v3087, %v3095
        %v3098 = vshrl.u32 %v3048, 16
        %v3100 = vrot.slane %v3098, 3
        %v3101 = vshll.u32 %v3048, 16
        %v3103 = vrot.slane %v3101, 4
        %v3104 = vor.u32 %v3100, %v3103
        %v3105 = vsel %vm1935, %v3095, %v3104
        %v3107 = vshrl.u32 %v3049, 16
        %v3109 = vrot.slane %v3107, 3
        %v3110 = vshll.u32 %v3049, 16
        %v3112 = vrot.slane %v3110, 4
        %v3113 = vor.u32 %v3109, %v3112
        %v3114 = vsel %vm1935, %v3104, %v3113
        %v3116 = vshrl.u32 %v3050, 16
        %v3118 = vrot.slane %v3116, 3
        %v3119 = vshll.u32 %v3050, 16
        %v3121 = vrot.slane %v3119, 4
        %v3122 = vor.u32 %v3118, %v3121
        %v3123 = vsel %vm1935, %v3113, %v3122
        %v3125 = vshrl.u32 %v3051, 16
        %v3127 = vrot.slane %v3125, 3
        %v3128 = vshll.u32 %v3051, 16
        %v3130 = vrot.slane %v3128, 4
        %v3131 = vor.u32 %v3127, %v3130
        %v3132 = vsel %vm1935, %v3122, %v3131
        %v3134 = vshrl.u32 %v3052, 16
        %v3136 = vrot.slane %v3134, 3
        %v3137 = vshll.u32 %v3052, 16
        %v3139 = vrot.slane %v3137, 4
        %v3140 = vor.u32 %v3136, %v3139
        %v3141 = vsel %vm1935, %v3131, %v3140
        %v3143 = vshrl.u32 %v3053, 16
        %v3145 = vrot.slane %v3143, 3
        %v3146 = vshll.u32 %v3053, 16
        %v3148 = vrot.slane %v3146, 4
        %v3149 = vor.u32 %v3145, %v3148
        %v3150 = vsel %vm1935, %v3140, %v3149
        %v3152 = vshrl.u32 %v3054, 16
        %v3154 = vrot.slane %v3152, 3
        %v3155 = vshll.u32 %v3054, 16
        %v3157 = vrot.slane %v3155, 4
        %v3158 = vor.u32 %v3154, %v3157
        %v3159 = vsel %vm1935, %v3149, %v3158
        %v3161 = vshrl.u32 %v3055, 16
        %v3163 = vrot.slane %v3161, 3
        %v3164 = vshll.u32 %v3055, 16
        %v3166 = vrot.slane %v3164, 4
        %v3167 = vor.u32 %v3163, %v3166
        %v3168 = vsel %vm1935, %v3158, %v3167
        %v3170 = vshrl.u32 %v3056, 16
        %v3172 = vrot.slane %v3170, 3
        %v3173 = vshll.u32 %v3056, 16
        %v3175 = vrot.slane %v3173, 4
        %v3176 = vor.u32 %v3172, %v3175
        %v3177 = vsel %vm1935, %v3167, %v3176
        %v3179 = vshrl.u32 %v3057, 16
        %v3181 = vrot.slane %v3179, 3
        %v3182 = vshll.u32 %v3057, 16
        %v3184 = vrot.slane %v3182, 4
        %v3185 = vor.u32 %v3181, %v3184
        %v3186 = vsel %vm1935, %v3176, %v3185
        %v3188 = vshrl.u32 %v3058, 16
        %v3190 = vrot.slane %v3188, 3
        %v3191 = vshll.u32 %v3058, 16
        %v3193 = vrot.slane %v3191, 4
        %v3194 = vor.u32 %v3190, %v3193
        %v3195 = vsel %vm1935, %v3185, %v3194
        %v3197 = vshrl.u32 %v3059, 16
        %v3199 = vrot.slane %v3197, 3
        %v3200 = vshll.u32 %v3059, 16
        %v3202 = vrot.slane %v3200, 4
        %v3203 = vor.u32 %v3199, %v3202
        %v3204 = vsel %vm1935, %v3194, %v3203
        %v3206 = vshrl.u32 %v3060, 16
        %v3208 = vrot.slane %v3206, 3
        %v3209 = vshll.u32 %v3060, 16
        %v3211 = vrot.slane %v3209, 4
        %v3212 = vor.u32 %v3208, %v3211
        %v3213 = vsel %vm1935, %v3203, %v3212
        %v3215 = vshrl.u32 %v3061, 16
        %v3217 = vrot.slane %v3215, 3
        %v3218 = vshll.u32 %v3061, 16
        %v3220 = vrot.slane %v3218, 4
        %v3221 = vor.u32 %v3217, %v3220
        %v3222 = vsel %vm1935, %v3212, %v3221
        %v3224 = vshrl.u32 %v3062, 16
        %v3226 = vrot.slane %v3224, 3
        %v3227 = vshll.u32 %v3062, 16
        %v3229 = vrot.slane %v3227, 4
        %v3230 = vor.u32 %v3226, %v3229
        %v3231 = vsel %vm1935, %v3221, %v3230
        %v3264 = vunpack.c.l.b16 %v3064
        %v3265 = vunpack.c.l.b16 %v3065
        %v3266 = vunpack.c.l.b16 %v3066
        %v3267 = vunpack.c.l.b16 %v3067
        %v3268 = vunpack.c.l.b16 %v3068
        %v3269 = vunpack.c.l.b16 %v3069
        %v3270 = vunpack.c.l.b16 %v3070
        %v3271 = vunpack.c.l.b16 %v3071
        %v3272 = vunpack.c.l.b16 %v3072
        %v3273 = vunpack.c.l.b16 %v3073
        %v3274 = vunpack.c.l.b16 %v3074
        %v3275 = vunpack.c.l.b16 %v3075
        %v3276 = vunpack.c.l.b16 %v3076
        %v3277 = vunpack.c.l.b16 %v3077
        %v3278 = vunpack.c.l.b16 %v3078
        %v3279 = vunpack.c.l.b16 %v3079
        %v3280 = vpack.c.b16 %v3265, %v3264
        %v3281 = vpack.c.b16 %v3267, %v3266
        %v3282 = vpack.c.b16 %v3269, %v3268
        %v3283 = vpack.c.b16 %v3271, %v3270
        %v3284 = vpack.c.b16 %v3273, %v3272
        %v3285 = vpack.c.b16 %v3275, %v3274
        %v3286 = vpack.c.b16 %v3277, %v3276
        %v3287 = vpack.c.b16 %v3279, %v3278
        %3296 = vmatprep.subr.bf16.mxu0 0
        %3297 = vmatpush1.bf16.msra.mxu0 %v3280
        %3298 = vmatprep.subr.bf16.mxu0 0
        %3299 = vmatpush1.bf16.msra.mxu0 %v3281
        %3300 = vmatprep.subr.bf16.mxu0 0
        %3301 = vmatpush1.bf16.msra.mxu0 %v3282
        %3302 = vmatprep.subr.bf16.mxu0 0
        %3303 = vmatpush1.bf16.msra.mxu0 %v3283
        %3304 = vmatprep.subr.bf16.mxu0 0
        %3305 = vmatpush1.bf16.msra.mxu0 %v3284
        %3306 = vmatprep.subr.bf16.mxu0 0
        %3307 = vmatpush1.bf16.msra.mxu0 %v3285
        %3308 = vmatprep.subr.bf16.mxu0 0
        %3309 = vmatpush1.bf16.msra.mxu0 %v3286
        %3310 = vmatprep.subr.bf16.mxu0 0
        %3311 = vmatpush1.bf16.msra.mxu0 %v3287
        %3312 = vmatprep.subr.bf16.mxu0 0
        %3313 = vmatpush1.bf16.msra.mxu0 0
        %3314 = vmatprep.subr.bf16.mxu0 0
        %3315 = vmatpush1.bf16.msra.mxu0 0
        %3316 = vmatprep.subr.bf16.mxu0 0
        %3317 = vmatpush1.bf16.msra.mxu0 0
        %3318 = vmatprep.subr.bf16.mxu0 0
        %3319 = vmatpush1.bf16.msra.mxu0 0
        %3320 = vmatprep.subr.bf16.mxu0 0
        %3321 = vmatpush1.bf16.msra.mxu0 0
        %3322 = vmatprep.subr.bf16.mxu0 0
        %3323 = vmatpush1.bf16.msra.mxu0 0
        %3324 = vmatprep.subr.bf16.mxu0 0
        %3325 = vmatpush1.bf16.msra.mxu0 0
        %3326 = vmatprep.subr.bf16.mxu0 0
        %3327 = vmatpush1.bf16.msra.mxu0 0
        %3328 = vmatprep.mubr.bf16.mxu0 0
        %3329 = vmatmul.mubr.bf16.gmra.mrb[0].mxu0 %v3096
        %v3330 = vpop.f32.mrb[0].mxu0
        %v3331 = vadd.f32 0.0, %v3330
        %v3332 = vpop.f32.mrb[0].mxu0
        %v3333 = vpop.f32.mrb[0].mxu0
        %v3334 = vadd.f32 0.0, %v3333
        %v3335 = vpop.f32.mrb[0].mxu0
        %3336 = vmatprep.mubr.bf16.mxu0 0
        %3337 = vmatmul.mubr.bf16.gmra.mrb[0].mxu0 %v3105
        %v3338 = vpop.f32.mrb[0].mxu0
        %v3339 = vadd.f32 0.0, %v3338
        %v3340 = vpop.f32.mrb[0].mxu0
        %v3341 = vpop.f32.mrb[0].mxu0
        %v3342 = vadd.f32 0.0, %v3341
        %v3343 = vpop.f32.mrb[0].mxu0
        %3344 = vmatprep.mubr.bf16.mxu0 0
        %3345 = vmatmul.mubr.bf16.gmra.mrb[0].mxu0 %v3114
        %v3346 = vpop.f32.mrb[0].mxu0
        %v3347 = vadd.f32 0.0, %v3346
        %v3348 = vpop.f32.mrb[0].mxu0
        %v3349 = vpop.f32.mrb[0].mxu0
        %v3350 = vadd.f32 0.0, %v3349
        %v3351 = vpop.f32.mrb[0].mxu0
        %3352 = vmatprep.mubr.bf16.mxu0 0
        %3353 = vmatmul.mubr.bf16.gmra.mrb[0].mxu0 %v3123
        %v3354 = vpop.f32.mrb[0].mxu0
        %v3355 = vadd.f32 0.0, %v3354
        %v3356 = vpop.f32.mrb[0].mxu0
        %v3357 = vpop.f32.mrb[0].mxu0
        %v3358 = vadd.f32 0.0, %v3357
        %v3359 = vpop.f32.mrb[0].mxu0
        %3360 = vmatprep.mubr.bf16.mxu0 0
        %3361 = vmatmul.mubr.bf16.gmra.mrb[0].mxu0 %v3132
        %v3362 = vpop.f32.mrb[0].mxu0
        %v3363 = vadd.f32 0.0, %v3362
        %v3364 = vpop.f32.mrb[0].mxu0
        %v3365 = vpop.f32.mrb[0].mxu0
        %v3366 = vadd.f32 0.0, %v3365
        %v3367 = vpop.f32.mrb[0].mxu0
        %3368 = vmatprep.mubr.bf16.mxu0 0
        %3369 = vmatmul.mubr.bf16.gmra.mrb[0].mxu0 %v3141
        %v3370 = vpop.f32.mrb[0].mxu0
        %v3371 = vadd.f32 0.0, %v3370
        %v3372 = vpop.f32.mrb[0].mxu0
        %v3373 = vpop.f32.mrb[0].mxu0
        %v3374 = vadd.f32 0.0, %v3373
        %v3375 = vpop.f32.mrb[0].mxu0
        %3376 = vmatprep.mubr.bf16.mxu0 0
        %3377 = vmatmul.mubr.bf16.gmra.mrb[0].mxu0 %v3150
        %v3378 = vpop.f32.mrb[0].mxu0
        %v3379 = vadd.f32 0.0, %v3378
        %v3380 = vpop.f32.mrb[0].mxu0
        %v3381 = vpop.f32.mrb[0].mxu0
        %v3382 = vadd.f32 0.0, %v3381
        %v3383 = vpop.f32.mrb[0].mxu0
        %3384 = vmatprep.mubr.bf16.mxu0 0
        %3385 = vmatmul.mubr.bf16.gmra.mrb[0].mxu0 %v3159
        %v3386 = vpop.f32.mrb[0].mxu0
        %v3387 = vadd.f32 0.0, %v3386
        %v3388 = vpop.f32.mrb[0].mxu0
        %v3389 = vpop.f32.mrb[0].mxu0
        %v3390 = vadd.f32 0.0, %v3389
        %v3391 = vpop.f32.mrb[0].mxu0
        %3392 = vmatprep.mubr.bf16.mxu0 0
        %3393 = vmatmul.mubr.bf16.gmra.mrb[0].mxu0 %v3168
        %v3394 = vpop.f32.mrb[0].mxu0
        %v3395 = vadd.f32 0.0, %v3394
        %v3396 = vpop.f32.mrb[0].mxu0
        %v3397 = vpop.f32.mrb[0].mxu0
        %v3398 = vadd.f32 0.0, %v3397
        %v3399 = vpop.f32.mrb[0].mxu0
        %3400 = vmatprep.mubr.bf16.mxu0 0
        %3401 = vmatmul.mubr.bf16.gmra.mrb[0].mxu0 %v3177
        %v3402 = vpop.f32.mrb[0].mxu0
        %v3403 = vadd.f32 0.0, %v3402
        %v3404 = vpop.f32.mrb[0].mxu0
        %v3405 = vpop.f32.mrb[0].mxu0
        %v3406 = vadd.f32 0.0, %v3405
        %v3407 = vpop.f32.mrb[0].mxu0
        %3408 = vmatprep.mubr.bf16.mxu0 0
        %3409 = vmatmul.mubr.bf16.gmra.mrb[0].mxu0 %v3186
        %v3410 = vpop.f32.mrb[0].mxu0
        %v3411 = vadd.f32 0.0, %v3410
        %v3412 = vpop.f32.mrb[0].mxu0
        %v3413 = vpop.f32.mrb[0].mxu0
        %v3414 = vadd.f32 0.0, %v3413
        %v3415 = vpop.f32.mrb[0].mxu0
        %3416 = vmatprep.mubr.bf16.mxu0 0
        %3417 = vmatmul.mubr.bf16.gmra.mrb[0].mxu0 %v3195
        %v3418 = vpop.f32.mrb[0].mxu0
        %v3419 = vadd.f32 0.0, %v3418
        %v3420 = vpop.f32.mrb[0].mxu0
        %v3421 = vpop.f32.mrb[0].mxu0
        %v3422 = vadd.f32 0.0, %v3421
        %v3423 = vpop.f32.mrb[0].mxu0
        %3424 = vmatprep.mubr.bf16.mxu0 0
        %3425 = vmatmul.mubr.bf16.gmra.mrb[0].mxu0 %v3204
        %v3426 = vpop.f32.mrb[0].mxu0
        %v3427 = vadd.f32 0.0, %v3426
        %v3428 = vpop.f32.mrb[0].mxu0
        %v3429 = vpop.f32.mrb[0].mxu0
        %v3430 = vadd.f32 0.0, %v3429
        %v3431 = vpop.f32.mrb[0].mxu0
        %3432 = vmatprep.mubr.bf16.mxu0 0
        %3433 = vmatmul.mubr.bf16.gmra.mrb[0].mxu0 %v3213
        %v3434 = vpop.f32.mrb[0].mxu0
        %v3435 = vadd.f32 0.0, %v3434
        %v3436 = vpop.f32.mrb[0].mxu0
        %v3437 = vpop.f32.mrb[0].mxu0
        %v3438 = vadd.f32 0.0, %v3437
        %v3439 = vpop.f32.mrb[0].mxu0
        %3440 = vmatprep.mubr.bf16.mxu0 0
        %3441 = vmatmul.mubr.bf16.gmra.mrb[0].mxu0 %v3222
        %v3442 = vpop.f32.mrb[0].mxu0
        %v3443 = vadd.f32 0.0, %v3442
        %v3444 = vpop.f32.mrb[0].mxu0
        %v3445 = vpop.f32.mrb[0].mxu0
        %v3446 = vadd.f32 0.0, %v3445
        %v3447 = vpop.f32.mrb[0].mxu0
        %3448 = vmatprep.mubr.bf16.mxu0 0
        %3449 = vmatmul.mubr.bf16.gmra.mrb[0].mxu0 %v3231
        %v3450 = vpop.f32.mrb[0].mxu0
        %v3451 = vadd.f32 0.0, %v3450
        %v3452 = vpop.f32.mrb[0].mxu0
        %v3453 = vpop.f32.mrb[0].mxu0
        %v3454 = vadd.f32 0.0, %v3453
        %v3455 = vpop.f32.mrb[0].mxu0
        %3456 = vdwg.mxu0
        %v3457 = vadd.f32 %v2997, %v3331
        %v3458 = vadd.f32 %v2998, %v3334
        %v3459 = vadd.f32 %v2999, %v3339
        %v3460 = vadd.f32 %v3000, %v3342
        %v3461 = vadd.f32 %v3001, %v3347
        %v3462 = vadd.f32 %v3002, %v3350
        %v3463 = vadd.f32 %v3003, %v3355
        %v3464 = vadd.f32 %v3004, %v3358
        %v3465 = vadd.f32 %v3005, %v3363
        %v3466 = vadd.f32 %v3006, %v3366
        %v3467 = vadd.f32 %v3007, %v3371
        %v3468 = vadd.f32 %v3008, %v3374
        %v3469 = vadd.f32 %v3009, %v3379
        %v3470 = vadd.f32 %v3010, %v3382
        %v3471 = vadd.f32 %v3011, %v3387
        %v3472 = vadd.f32 %v3012, %v3390
        %v3473 = vadd.f32 %v3013, %v3395
        %v3474 = vadd.f32 %v3014, %v3398
        %v3475 = vadd.f32 %v3015, %v3403
        %v3476 = vadd.f32 %v3016, %v3406
        %v3477 = vadd.f32 %v3017, %v3411
        %v3478 = vadd.f32 %v3018, %v3414
        %v3479 = vadd.f32 %v3019, %v3419
        %v3480 = vadd.f32 %v3020, %v3422
        %v3481 = vadd.f32 %v3021, %v3427
        %v3482 = vadd.f32 %v3022, %v3430
        %v3483 = vadd.f32 %v3023, %v3435
        %v3484 = vadd.f32 %v3024, %v3438
        %v3485 = vadd.f32 %v3025, %v3443
        %v3486 = vadd.f32 %v3026, %v3446
        %v3487 = vadd.f32 %v3027, %v3451
        %v3488 = vadd.f32 %v3028, %v3454
        %v3489 = vld [vmem:[#allocation2 + $0x8] sm:$0xf0]
        %s3490 = scalar_lea.vmem [#allocation8], 256
        %v3491 = vld [vmem:[%s3490] sm:$0xf]
        %v3492 = vld [vmem:[%s3490 + $0x4] sm:$0xf]
        %v3493 = vld [vmem:[%s3490 + $0x8] sm:$0xf]
        %v3494 = vld [vmem:[%s3490 + $0xc] sm:$0xf]
        %v3495 = vld [vmem:[%s3490 + $0x10] sm:$0xf]
        %v3496 = vld [vmem:[%s3490 + $0x14] sm:$0xf]
        %v3497 = vld [vmem:[%s3490 + $0x18] sm:$0xf]
        %v3498 = vld [vmem:[%s3490 + $0x1c] sm:$0xf]
        %v3499 = vld [vmem:[%s3490 + $0x20] sm:$0xf]
        %v3500 = vld [vmem:[%s3490 + $0x24] sm:$0xf]
        %v3501 = vld [vmem:[%s3490 + $0x28] sm:$0xf]
        %v3502 = vld [vmem:[%s3490 + $0x2c] sm:$0xf]
        %v3503 = vld [vmem:[%s3490 + $0x30] sm:$0xf]
        %v3504 = vld [vmem:[%s3490 + $0x34] sm:$0xf]
        %v3505 = vld [vmem:[%s3490 + $0x38] sm:$0xf]
        %v3506 = vld [vmem:[%s3490 + $0x3c] sm:$0xf]
        %v3524 = vrot.slane %v3489, 4
        %v3525 = vrot.slane %v3030, 4
        %v3526 = vsel %vm772, %v3524, %v3525
        %v3527 = vrot.slane %v3031, 4
        %v3528 = vsel %vm772, %v3525, %v3527
        %v3529 = vrot.slane %v3032, 4
        %v3530 = vsel %vm772, %v3527, %v3529
        %v3531 = vrot.slane %v3033, 4
        %v3532 = vsel %vm772, %v3529, %v3531
        %v3533 = vrot.slane %v3034, 4
        %v3534 = vsel %vm772, %v3531, %v3533
        %v3535 = vrot.slane %v3035, 4
        %v3536 = vsel %vm772, %v3533, %v3535
        %v3537 = vrot.slane %v3036, 4
        %v3538 = vsel %vm772, %v3535, %v3537
        %v3539 = vrot.slane %v3037, 4
        %v3540 = vsel %vm772, %v3537, %v3539
        %v3541 = vrot.slane %v3038, 4
        %v3542 = vsel %vm772, %v3539, %v3541
        %v3543 = vrot.slane %v3039, 4
        %v3544 = vsel %vm772, %v3541, %v3543
        %v3545 = vrot.slane %v3040, 4
        %v3546 = vsel %vm772, %v3543, %v3545
        %v3547 = vrot.slane %v3041, 4
        %v3548 = vsel %vm772, %v3545, %v3547
        %v3549 = vrot.slane %v3042, 4
        %v3550 = vsel %vm772, %v3547, %v3549
        %v3551 = vrot.slane %v3043, 4
        %v3552 = vsel %vm772, %v3549, %v3551
        %v3553 = vrot.slane %v3044, 4
        %v3554 = vsel %vm772, %v3551, %v3553
        %v3555 = vrot.slane %v3045, 4
        %v3556 = vsel %vm772, %v3553, %v3555
        %v3589 = vunpack.c.l.b16 %v3491
        %v3590 = vunpack.c.l.b16 %v3492
        %v3591 = vunpack.c.l.b16 %v3493
        %v3592 = vunpack.c.l.b16 %v3494
        %v3593 = vunpack.c.l.b16 %v3495
        %v3594 = vunpack.c.l.b16 %v3496
        %v3595 = vunpack.c.l.b16 %v3497
        %v3596 = vunpack.c.l.b16 %v3498
        %v3597 = vunpack.c.l.b16 %v3499
        %v3598 = vunpack.c.l.b16 %v3500
        %v3599 = vunpack.c.l.b16 %v3501
        %v3600 = vunpack.c.l.b16 %v3502
        %v3601 = vunpack.c.l.b16 %v3503
        %v3602 = vunpack.c.l.b16 %v3504
        %v3603 = vunpack.c.l.b16 %v3505
        %v3604 = vunpack.c.l.b16 %v3506
        %v3605 = vpack.c.b16 %v3590, %v3589
        %v3606 = vpack.c.b16 %v3592, %v3591
        %v3607 = vpack.c.b16 %v3594, %v3593
        %v3608 = vpack.c.b16 %v3596, %v3595
        %v3609 = vpack.c.b16 %v3598, %v3597
        %v3610 = vpack.c.b16 %v3600, %v3599
        %v3611 = vpack.c.b16 %v3602, %v3601
        %v3612 = vpack.c.b16 %v3604, %v3603
        %3621 = vmatprep.subr.bf16.mxu0 0
        %3622 = vmatpush1.bf16.msra.mxu0 %v3605
        %3623 = vmatprep.subr.bf16.mxu0 0
        %3624 = vmatpush1.bf16.msra.mxu0 %v3606
        %3625 = vmatprep.subr.bf16.mxu0 0
        %3626 = vmatpush1.bf16.msra.mxu0 %v3607
        %3627 = vmatprep.subr.bf16.mxu0 0
        %3628 = vmatpush1.bf16.msra.mxu0 %v3608
        %3629 = vmatprep.subr.bf16.mxu0 0
        %3630 = vmatpush1.bf16.msra.mxu0 %v3609
        %3631 = vmatprep.subr.bf16.mxu0 0
        %3632 = vmatpush1.bf16.msra.mxu0 %v3610
        %3633 = vmatprep.subr.bf16.mxu0 0
        %3634 = vmatpush1.bf16.msra.mxu0 %v3611
        %3635 = vmatprep.subr.bf16.mxu0 0
        %3636 = vmatpush1.bf16.msra.mxu0 %v3612
        %3637 = vmatprep.subr.bf16.mxu0 0
        %3638 = vmatpush1.bf16.msra.mxu0 0
        %3639 = vmatprep.subr.bf16.mxu0 0
        %3640 = vmatpush1.bf16.msra.mxu0 0
        %3641 = vmatprep.subr.bf16.mxu0 0
        %3642 = vmatpush1.bf16.msra.mxu0 0
        %3643 = vmatprep.subr.bf16.mxu0 0
        %3644 = vmatpush1.bf16.msra.mxu0 0
        %3645 = vmatprep.subr.bf16.mxu0 0
        %3646 = vmatpush1.bf16.msra.mxu0 0
        %3647 = vmatprep.subr.bf16.mxu0 0
        %3648 = vmatpush1.bf16.msra.mxu0 0
        %3649 = vmatprep.subr.bf16.mxu0 0
        %3650 = vmatpush1.bf16.msra.mxu0 0
        %3651 = vmatprep.subr.bf16.mxu0 0
        %3652 = vmatpush1.bf16.msra.mxu0 0
        %3653 = vmatprep.mubr.bf16.mxu0 0
        %3654 = vmatmul.mubr.bf16.gmra.mrb[0].mxu0 %v3526
        %v3655 = vpop.f32.mrb[0].mxu0
        %v3656 = vadd.f32 0.0, %v3655
        %v3657 = vpop.f32.mrb[0].mxu0
        %v3658 = vpop.f32.mrb[0].mxu0
        %v3659 = vadd.f32 0.0, %v3658
        %v3660 = vpop.f32.mrb[0].mxu0
        %3661 = vmatprep.mubr.bf16.mxu0 0
        %3662 = vmatmul.mubr.bf16.gmra.mrb[0].mxu0 %v3528
        %v3663 = vpop.f32.mrb[0].mxu0
        %v3664 = vadd.f32 0.0, %v3663
        %v3665 = vpop.f32.mrb[0].mxu0
        %v3666 = vpop.f32.mrb[0].mxu0
        %v3667 = vadd.f32 0.0, %v3666
        %v3668 = vpop.f32.mrb[0].mxu0
        %3669 = vmatprep.mubr.bf16.mxu0 0
        %3670 = vmatmul.mubr.bf16.gmra.mrb[0].mxu0 %v3530
        %v3671 = vpop.f32.mrb[0].mxu0
        %v3672 = vadd.f32 0.0, %v3671
        %v3673 = vpop.f32.mrb[0].mxu0
        %v3674 = vpop.f32.mrb[0].mxu0
        %v3675 = vadd.f32 0.0, %v3674
        %v3676 = vpop.f32.mrb[0].mxu0
        %3677 = vmatprep.mubr.bf16.mxu0 0
        %3678 = vmatmul.mubr.bf16.gmra.mrb[0].mxu0 %v3532
        %v3679 = vpop.f32.mrb[0].mxu0
        %v3680 = vadd.f32 0.0, %v3679
        %v3681 = vpop.f32.mrb[0].mxu0
        %v3682 = vpop.f32.mrb[0].mxu0
        %v3683 = vadd.f32 0.0, %v3682
        %v3684 = vpop.f32.mrb[0].mxu0
        %3685 = vmatprep.mubr.bf16.mxu0 0
        %3686 = vmatmul.mubr.bf16.gmra.mrb[0].mxu0 %v3534
        %v3687 = vpop.f32.mrb[0].mxu0
        %v3688 = vadd.f32 0.0, %v3687
        %v3689 = vpop.f32.mrb[0].mxu0
        %v3690 = vpop.f32.mrb[0].mxu0
        %v3691 = vadd.f32 0.0, %v3690
        %v3692 = vpop.f32.mrb[0].mxu0
        %3693 = vmatprep.mubr.bf16.mxu0 0
        %3694 = vmatmul.mubr.bf16.gmra.mrb[0].mxu0 %v3536
        %v3695 = vpop.f32.mrb[0].mxu0
        %v3696 = vadd.f32 0.0, %v3695
        %v3697 = vpop.f32.mrb[0].mxu0
        %v3698 = vpop.f32.mrb[0].mxu0
        %v3699 = vadd.f32 0.0, %v3698
        %v3700 = vpop.f32.mrb[0].mxu0
        %3701 = vmatprep.mubr.bf16.mxu0 0
        %3702 = vmatmul.mubr.bf16.gmra.mrb[0].mxu0 %v3538
        %v3703 = vpop.f32.mrb[0].mxu0
        %v3704 = vadd.f32 0.0, %v3703
        %v3705 = vpop.f32.mrb[0].mxu0
        %v3706 = vpop.f32.mrb[0].mxu0
        %v3707 = vadd.f32 0.0, %v3706
        %v3708 = vpop.f32.mrb[0].mxu0
        %3709 = vmatprep.mubr.bf16.mxu0 0
        %3710 = vmatmul.mubr.bf16.gmra.mrb[0].mxu0 %v3540
        %v3711 = vpop.f32.mrb[0].mxu0
        %v3712 = vadd.f32 0.0, %v3711
        %v3713 = vpop.f32.mrb[0].mxu0
        %v3714 = vpop.f32.mrb[0].mxu0
        %v3715 = vadd.f32 0.0, %v3714
        %v3716 = vpop.f32.mrb[0].mxu0
        %3717 = vmatprep.mubr.bf16.mxu0 0
        %3718 = vmatmul.mubr.bf16.gmra.mrb[0].mxu0 %v3542
        %v3719 = vpop.f32.mrb[0].mxu0
        %v3720 = vadd.f32 0.0, %v3719
        %v3721 = vpop.f32.mrb[0].mxu0
        %v3722 = vpop.f32.mrb[0].mxu0
        %v3723 = vadd.f32 0.0, %v3722
        %v3724 = vpop.f32.mrb[0].mxu0
        %3725 = vmatprep.mubr.bf16.mxu0 0
        %3726 = vmatmul.mubr.bf16.gmra.mrb[0].mxu0 %v3544
        %v3727 = vpop.f32.mrb[0].mxu0
        %v3728 = vadd.f32 0.0, %v3727
        %v3729 = vpop.f32.mrb[0].mxu0
        %v3730 = vpop.f32.mrb[0].mxu0
        %v3731 = vadd.f32 0.0, %v3730
        %v3732 = vpop.f32.mrb[0].mxu0
        %3733 = vmatprep.mubr.bf16.mxu0 0
        %3734 = vmatmul.mubr.bf16.gmra.mrb[0].mxu0 %v3546
        %v3735 = vpop.f32.mrb[0].mxu0
        %v3736 = vadd.f32 0.0, %v3735
        %v3737 = vpop.f32.mrb[0].mxu0
        %v3738 = vpop.f32.mrb[0].mxu0
        %v3739 = vadd.f32 0.0, %v3738
        %v3740 = vpop.f32.mrb[0].mxu0
        %3741 = vmatprep.mubr.bf16.mxu0 0
        %3742 = vmatmul.mubr.bf16.gmra.mrb[0].mxu0 %v3548
        %v3743 = vpop.f32.mrb[0].mxu0
        %v3744 = vadd.f32 0.0, %v3743
        %v3745 = vpop.f32.mrb[0].mxu0
        %v3746 = vpop.f32.mrb[0].mxu0
        %v3747 = vadd.f32 0.0, %v3746
        %v3748 = vpop.f32.mrb[0].mxu0
        %3749 = vmatprep.mubr.bf16.mxu0 0
        %3750 = vmatmul.mubr.bf16.gmra.mrb[0].mxu0 %v3550
        %v3751 = vpop.f32.mrb[0].mxu0
        %v3752 = vadd.f32 0.0, %v3751
        %v3753 = vpop.f32.mrb[0].mxu0
        %v3754 = vpop.f32.mrb[0].mxu0
        %v3755 = vadd.f32 0.0, %v3754
        %v3756 = vpop.f32.mrb[0].mxu0
        %3757 = vmatprep.mubr.bf16.mxu0 0
        %3758 = vmatmul.mubr.bf16.gmra.mrb[0].mxu0 %v3552
        %v3759 = vpop.f32.mrb[0].mxu0
        %v3760 = vadd.f32 0.0, %v3759
        %v3761 = vpop.f32.mrb[0].mxu0
        %v3762 = vpop.f32.mrb[0].mxu0
        %v3763 = vadd.f32 0.0, %v3762
        %v3764 = vpop.f32.mrb[0].mxu0
        %3765 = vmatprep.mubr.bf16.mxu0 0
        %3766 = vmatmul.mubr.bf16.gmra.mrb[0].mxu0 %v3554
        %v3767 = vpop.f32.mrb[0].mxu0
        %v3768 = vadd.f32 0.0, %v3767
        %v3769 = vpop.f32.mrb[0].mxu0
        %v3770 = vpop.f32.mrb[0].mxu0
        %v3771 = vadd.f32 0.0, %v3770
        %v3772 = vpop.f32.mrb[0].mxu0
        %3773 = vmatprep.mubr.bf16.mxu0 0
        %3774 = vmatmul.mubr.bf16.gmra.mrb[0].mxu0 %v3556
        %v3775 = vpop.f32.mrb[0].mxu0
        %v3776 = vadd.f32 0.0, %v3775
        %v3777 = vpop.f32.mrb[0].mxu0
        %v3778 = vpop.f32.mrb[0].mxu0
        %v3779 = vadd.f32 0.0, %v3778
        %v3780 = vpop.f32.mrb[0].mxu0
        %3781 = vdwg.mxu0
        %v3782 = vadd.f32 %v3457, %v3656
        %v3783 = vadd.f32 %v3458, %v3659
        %v3784 = vadd.f32 %v3459, %v3664
        %v3785 = vadd.f32 %v3460, %v3667
        %v3786 = vadd.f32 %v3461, %v3672
        %v3787 = vadd.f32 %v3462, %v3675
        %v3788 = vadd.f32 %v3463, %v3680
        %v3789 = vadd.f32 %v3464, %v3683
        %v3790 = vadd.f32 %v3465, %v3688
        %v3791 = vadd.f32 %v3466, %v3691
        %v3792 = vadd.f32 %v3467, %v3696
        %v3793 = vadd.f32 %v3468, %v3699
        %v3794 = vadd.f32 %v3469, %v3704
        %v3795 = vadd.f32 %v3470, %v3707
        %v3796 = vadd.f32 %v3471, %v3712
        %v3797 = vadd.f32 %v3472, %v3715
        %v3798 = vadd.f32 %v3473, %v3720
        %v3799 = vadd.f32 %v3474, %v3723
        %v3800 = vadd.f32 %v3475, %v3728
        %v3801 = vadd.f32 %v3476, %v3731
        %v3802 = vadd.f32 %v3477, %v3736
        %v3803 = vadd.f32 %v3478, %v3739
        %v3804 = vadd.f32 %v3479, %v3744
        %v3805 = vadd.f32 %v3480, %v3747
        %v3806 = vadd.f32 %v3481, %v3752
        %v3807 = vadd.f32 %v3482, %v3755
        %v3808 = vadd.f32 %v3483, %v3760
        %v3809 = vadd.f32 %v3484, %v3763
        %v3810 = vadd.f32 %v3485, %v3768
        %v3811 = vadd.f32 %v3486, %v3771
        %v3812 = vadd.f32 %v3487, %v3776
        %v3813 = vadd.f32 %v3488, %v3779
        %v3814 = vld [vmem:[#allocation2 + $0x88] sm:$0x1f]
        %v3815 = vsel %vm2569, %v3489, 0
        %v3816 = vsel %vm2570, %v3030, 0
        %v3817 = vsel %vm2571, %v3031, 0
        %v3818 = vsel %vm2572, %v3032, 0
        %v3819 = vsel %vm2573, %v3033, 0
        %v3820 = vsel %vm2574, %v3034, 0
        %v3821 = vsel %vm2575, %v3035, 0
        %v3822 = vsel %vm2576, %v3036, 0
        %v3823 = vsel %vm2577, %v3037, 0
        %v3824 = vsel %vm2578, %v3038, 0
        %v3825 = vsel %vm2579, %v3039, 0
        %v3826 = vsel %vm2580, %v3040, 0
        %v3827 = vsel %vm2581, %v3041, 0
        %v3828 = vsel %vm2582, %v3042, 0
        %v3829 = vsel %vm2583, %v3043, 0
        %v3830 = vsel %vm2584, %v3044, 0
        %v3831 = vsel %vm2585, %v3814, 0
        %s3832 = scalar_lea.vmem [#allocation8], 320
        %v3833 = vld [vmem:[%s3832] sm:$0xf]
        %v3834 = vld [vmem:[%s3832 + $0x4] sm:$0xf]
        %v3835 = vld [vmem:[%s3832 + $0x8] sm:$0xf]
        %v3836 = vld [vmem:[%s3832 + $0xc] sm:$0xf]
        %v3837 = vld [vmem:[%s3832 + $0x10] sm:$0xf]
        %v3838 = vld [vmem:[%s3832 + $0x14] sm:$0xf]
        %v3839 = vld [vmem:[%s3832 + $0x18] sm:$0xf]
        %v3840 = vld [vmem:[%s3832 + $0x1c] sm:$0xf]
        %v3841 = vld [vmem:[%s3832 + $0x20] sm:$0xf]
        %v3842 = vld [vmem:[%s3832 + $0x24] sm:$0xf]
        %v3843 = vld [vmem:[%s3832 + $0x28] sm:$0xf]
        %v3844 = vld [vmem:[%s3832 + $0x2c] sm:$0xf]
        %v3845 = vld [vmem:[%s3832 + $0x30] sm:$0xf]
        %v3846 = vld [vmem:[%s3832 + $0x34] sm:$0xf]
        %v3847 = vld [vmem:[%s3832 + $0x38] sm:$0xf]
        %v3848 = vld [vmem:[%s3832 + $0x3c] sm:$0xf]
        %v3850 = vshrl.u32 %v3815, 16
        %v3852 = vrot.slane %v3850, 4
        %v3853 = vshll.u32 %v3815, 16
        %v3855 = vrot.slane %v3853, 5
        %v3856 = vor.u32 %v3852, %v3855
        %v3858 = vshrl.u32 %v3816, 16
        %v3860 = vrot.slane %v3858, 4
        %v3861 = vshll.u32 %v3816, 16
        %v3863 = vrot.slane %v3861, 5
        %v3864 = vor.u32 %v3860, %v3863
        %v3865 = vsel %vm1448, %v3856, %v3864
        %v3867 = vshrl.u32 %v3817, 16
        %v3869 = vrot.slane %v3867, 4
        %v3870 = vshll.u32 %v3817, 16
        %v3872 = vrot.slane %v3870, 5
        %v3873 = vor.u32 %v3869, %v3872
        %v3874 = vsel %vm1448, %v3864, %v3873
        %v3876 = vshrl.u32 %v3818, 16
        %v3878 = vrot.slane %v3876, 4
        %v3879 = vshll.u32 %v3818, 16
        %v3881 = vrot.slane %v3879, 5
        %v3882 = vor.u32 %v3878, %v3881
        %v3883 = vsel %vm1448, %v3873, %v3882
        %v3885 = vshrl.u32 %v3819, 16
        %v3887 = vrot.slane %v3885, 4
        %v3888 = vshll.u32 %v3819, 16
        %v3890 = vrot.slane %v3888, 5
        %v3891 = vor.u32 %v3887, %v3890
        %v3892 = vsel %vm1448, %v3882, %v3891
        %v3894 = vshrl.u32 %v3820, 16
        %v3896 = vrot.slane %v3894, 4
        %v3897 = vshll.u32 %v3820, 16
        %v3899 = vrot.slane %v3897, 5
        %v3900 = vor.u32 %v3896, %v3899
        %v3901 = vsel %vm1448, %v3891, %v3900
        %v3903 = vshrl.u32 %v3821, 16
        %v3905 = vrot.slane %v3903, 4
        %v3906 = vshll.u32 %v3821, 16
        %v3908 = vrot.slane %v3906, 5
        %v3909 = vor.u32 %v3905, %v3908
        %v3910 = vsel %vm1448, %v3900, %v3909
        %v3912 = vshrl.u32 %v3822, 16
        %v3914 = vrot.slane %v3912, 4
        %v3915 = vshll.u32 %v3822, 16
        %v3917 = vrot.slane %v3915, 5
        %v3918 = vor.u32 %v3914, %v3917
        %v3919 = vsel %vm1448, %v3909, %v3918
        %v3921 = vshrl.u32 %v3823, 16
        %v3923 = vrot.slane %v3921, 4
        %v3924 = vshll.u32 %v3823, 16
        %v3926 = vrot.slane %v3924, 5
        %v3927 = vor.u32 %v3923, %v3926
        %v3928 = vsel %vm1448, %v3918, %v3927
        %v3930 = vshrl.u32 %v3824, 16
        %v3932 = vrot.slane %v3930, 4
        %v3933 = vshll.u32 %v3824, 16
        %v3935 = vrot.slane %v3933, 5
        %v3936 = vor.u32 %v3932, %v3935
        %v3937 = vsel %vm1448, %v3927, %v3936
        %v3939 = vshrl.u32 %v3825, 16
        %v3941 = vrot.slane %v3939, 4
        %v3942 = vshll.u32 %v3825, 16
        %v3944 = vrot.slane %v3942, 5
        %v3945 = vor.u32 %v3941, %v3944
        %v3946 = vsel %vm1448, %v3936, %v3945
        %v3948 = vshrl.u32 %v3826, 16
        %v3950 = vrot.slane %v3948, 4
        %v3951 = vshll.u32 %v3826, 16
        %v3953 = vrot.slane %v3951, 5
        %v3954 = vor.u32 %v3950, %v3953
        %v3955 = vsel %vm1448, %v3945, %v3954
        %v3957 = vshrl.u32 %v3827, 16
        %v3959 = vrot.slane %v3957, 4
        %v3960 = vshll.u32 %v3827, 16
        %v3962 = vrot.slane %v3960, 5
        %v3963 = vor.u32 %v3959, %v3962
        %v3964 = vsel %vm1448, %v3954, %v3963
        %v3966 = vshrl.u32 %v3828, 16
        %v3968 = vrot.slane %v3966, 4
        %v3969 = vshll.u32 %v3828, 16
        %v3971 = vrot.slane %v3969, 5
        %v3972 = vor.u32 %v3968, %v3971
        %v3973 = vsel %vm1448, %v3963, %v3972
        %v3975 = vshrl.u32 %v3829, 16
        %v3977 = vrot.slane %v3975, 4
        %v3978 = vshll.u32 %v3829, 16
        %v3980 = vrot.slane %v3978, 5
        %v3981 = vor.u32 %v3977, %v3980
        %v3982 = vsel %vm1448, %v3972, %v3981
        %v3984 = vshrl.u32 %v3830, 16
        %v3986 = vrot.slane %v3984, 4
        %v3987 = vshll.u32 %v3830, 16
        %v3989 = vrot.slane %v3987, 5
        %v3990 = vor.u32 %v3986, %v3989
        %v3991 = vsel %vm1448, %v3981, %v3990
        %v3993 = vshrl.u32 %v3831, 16
        %v3995 = vrot.slane %v3993, 4
        %v3996 = vshll.u32 %v3831, 16
        %v3998 = vrot.slane %v3996, 5
        %v3999 = vor.u32 %v3995, %v3998
        %v4000 = vsel %vm1448, %v3990, %v3999
        %v4033 = vunpack.c.l.b16 %v3833
        %v4034 = vunpack.c.l.b16 %v3834
        %v4035 = vunpack.c.l.b16 %v3835
        %v4036 = vunpack.c.l.b16 %v3836
        %v4037 = vunpack.c.l.b16 %v3837
        %v4038 = vunpack.c.l.b16 %v3838
        %v4039 = vunpack.c.l.b16 %v3839
        %v4040 = vunpack.c.l.b16 %v3840
        %v4041 = vunpack.c.l.b16 %v3841
        %v4042 = vunpack.c.l.b16 %v3842
        %v4043 = vunpack.c.l.b16 %v3843
        %v4044 = vunpack.c.l.b16 %v3844
        %v4045 = vunpack.c.l.b16 %v3845
        %v4046 = vunpack.c.l.b16 %v3846
        %v4047 = vunpack.c.l.b16 %v3847
        %v4048 = vunpack.c.l.b16 %v3848
        %v4049 = vpack.c.b16 %v4034, %v4033
        %v4050 = vpack.c.b16 %v4036, %v4035
        %v4051 = vpack.c.b16 %v4038, %v4037
        %v4052 = vpack.c.b16 %v4040, %v4039
        %v4053 = vpack.c.b16 %v4042, %v4041
        %v4054 = vpack.c.b16 %v4044, %v4043
        %v4055 = vpack.c.b16 %v4046, %v4045
        %v4056 = vpack.c.b16 %v4048, %v4047
        %4065 = vmatprep.subr.bf16.mxu0 0
        %4066 = vmatpush1.bf16.msra.mxu0 %v4049
        %4067 = vmatprep.subr.bf16.mxu0 0
        %4068 = vmatpush1.bf16.msra.mxu0 %v4050
        %4069 = vmatprep.subr.bf16.mxu0 0
        %4070 = vmatpush1.bf16.msra.mxu0 %v4051
        %4071 = vmatprep.subr.bf16.mxu0 0
        %4072 = vmatpush1.bf16.msra.mxu0 %v4052
        %4073 = vmatprep.subr.bf16.mxu0 0
        %4074 = vmatpush1.bf16.msra.mxu0 %v4053
        %4075 = vmatprep.subr.bf16.mxu0 0
        %4076 = vmatpush1.bf16.msra.mxu0 %v4054
        %4077 = vmatprep.subr.bf16.mxu0 0
        %4078 = vmatpush1.bf16.msra.mxu0 %v4055
        %4079 = vmatprep.subr.bf16.mxu0 0
        %4080 = vmatpush1.bf16.msra.mxu0 %v4056
        %4081 = vmatprep.subr.bf16.mxu0 0
        %4082 = vmatpush1.bf16.msra.mxu0 0
        %4083 = vmatprep.subr.bf16.mxu0 0
        %4084 = vmatpush1.bf16.msra.mxu0 0
        %4085 = vmatprep.subr.bf16.mxu0 0
        %4086 = vmatpush1.bf16.msra.mxu0 0
        %4087 = vmatprep.subr.bf16.mxu0 0
        %4088 = vmatpush1.bf16.msra.mxu0 0
        %4089 = vmatprep.subr.bf16.mxu0 0
        %4090 = vmatpush1.bf16.msra.mxu0 0
        %4091 = vmatprep.subr.bf16.mxu0 0
        %4092 = vmatpush1.bf16.msra.mxu0 0
        %4093 = vmatprep.subr.bf16.mxu0 0
        %4094 = vmatpush1.bf16.msra.mxu0 0
        %4095 = vmatprep.subr.bf16.mxu0 0
        %4096 = vmatpush1.bf16.msra.mxu0 0
        %4097 = vmatprep.mubr.bf16.mxu0 0
        %4098 = vmatmul.mubr.bf16.gmra.mrb[0].mxu0 %v3865
        %v4099 = vpop.f32.mrb[0].mxu0
        %v4100 = vadd.f32 0.0, %v4099
        %v4101 = vpop.f32.mrb[0].mxu0
        %v4102 = vpop.f32.mrb[0].mxu0
        %v4103 = vadd.f32 0.0, %v4102
        %v4104 = vpop.f32.mrb[0].mxu0
        %4105 = vmatprep.mubr.bf16.mxu0 0
        %4106 = vmatmul.mubr.bf16.gmra.mrb[0].mxu0 %v3874
        %v4107 = vpop.f32.mrb[0].mxu0
        %v4108 = vadd.f32 0.0, %v4107
        %v4109 = vpop.f32.mrb[0].mxu0
        %v4110 = vpop.f32.mrb[0].mxu0
        %v4111 = vadd.f32 0.0, %v4110
        %v4112 = vpop.f32.mrb[0].mxu0
        %4113 = vmatprep.mubr.bf16.mxu0 0
        %4114 = vmatmul.mubr.bf16.gmra.mrb[0].mxu0 %v3883
        %v4115 = vpop.f32.mrb[0].mxu0
        %v4116 = vadd.f32 0.0, %v4115
        %v4117 = vpop.f32.mrb[0].mxu0
        %v4118 = vpop.f32.mrb[0].mxu0
        %v4119 = vadd.f32 0.0, %v4118
        %v4120 = vpop.f32.mrb[0].mxu0
        %4121 = vmatprep.mubr.bf16.mxu0 0
        %4122 = vmatmul.mubr.bf16.gmra.mrb[0].mxu0 %v3892
        %v4123 = vpop.f32.mrb[0].mxu0
        %v4124 = vadd.f32 0.0, %v4123
        %v4125 = vpop.f32.mrb[0].mxu0
        %v4126 = vpop.f32.mrb[0].mxu0
        %v4127 = vadd.f32 0.0, %v4126
        %v4128 = vpop.f32.mrb[0].mxu0
        %4129 = vmatprep.mubr.bf16.mxu0 0
        %4130 = vmatmul.mubr.bf16.gmra.mrb[0].mxu0 %v3901
        %v4131 = vpop.f32.mrb[0].mxu0
        %v4132 = vadd.f32 0.0, %v4131
        %v4133 = vpop.f32.mrb[0].mxu0
        %v4134 = vpop.f32.mrb[0].mxu0
        %v4135 = vadd.f32 0.0, %v4134
        %v4136 = vpop.f32.mrb[0].mxu0
        %4137 = vmatprep.mubr.bf16.mxu0 0
        %4138 = vmatmul.mubr.bf16.gmra.mrb[0].mxu0 %v3910
        %v4139 = vpop.f32.mrb[0].mxu0
        %v4140 = vadd.f32 0.0, %v4139
        %v4141 = vpop.f32.mrb[0].mxu0
        %v4142 = vpop.f32.mrb[0].mxu0
        %v4143 = vadd.f32 0.0, %v4142
        %v4144 = vpop.f32.mrb[0].mxu0
        %4145 = vmatprep.mubr.bf16.mxu0 0
        %4146 = vmatmul.mubr.bf16.gmra.mrb[0].mxu0 %v3919
        %v4147 = vpop.f32.mrb[0].mxu0
        %v4148 = vadd.f32 0.0, %v4147
        %v4149 = vpop.f32.mrb[0].mxu0
        %v4150 = vpop.f32.mrb[0].mxu0
        %v4151 = vadd.f32 0.0, %v4150
        %v4152 = vpop.f32.mrb[0].mxu0
        %4153 = vmatprep.mubr.bf16.mxu0 0
        %4154 = vmatmul.mubr.bf16.gmra.mrb[0].mxu0 %v3928
        %v4155 = vpop.f32.mrb[0].mxu0
        %v4156 = vadd.f32 0.0, %v4155
        %v4157 = vpop.f32.mrb[0].mxu0
        %v4158 = vpop.f32.mrb[0].mxu0
        %v4159 = vadd.f32 0.0, %v4158
        %v4160 = vpop.f32.mrb[0].mxu0
        %4161 = vmatprep.mubr.bf16.mxu0 0
        %4162 = vmatmul.mubr.bf16.gmra.mrb[0].mxu0 %v3937
        %v4163 = vpop.f32.mrb[0].mxu0
        %v4164 = vadd.f32 0.0, %v4163
        %v4165 = vpop.f32.mrb[0].mxu0
        %v4166 = vpop.f32.mrb[0].mxu0
        %v4167 = vadd.f32 0.0, %v4166
        %v4168 = vpop.f32.mrb[0].mxu0
        %4169 = vmatprep.mubr.bf16.mxu0 0
        %4170 = vmatmul.mubr.bf16.gmra.mrb[0].mxu0 %v3946
        %v4171 = vpop.f32.mrb[0].mxu0
        %v4172 = vadd.f32 0.0, %v4171
        %v4173 = vpop.f32.mrb[0].mxu0
        %v4174 = vpop.f32.mrb[0].mxu0
        %v4175 = vadd.f32 0.0, %v4174
        %v4176 = vpop.f32.mrb[0].mxu0
        %4177 = vmatprep.mubr.bf16.mxu0 0
        %4178 = vmatmul.mubr.bf16.gmra.mrb[0].mxu0 %v3955
        %v4179 = vpop.f32.mrb[0].mxu0
        %v4180 = vadd.f32 0.0, %v4179
        %v4181 = vpop.f32.mrb[0].mxu0
        %v4182 = vpop.f32.mrb[0].mxu0
        %v4183 = vadd.f32 0.0, %v4182
        %v4184 = vpop.f32.mrb[0].mxu0
        %4185 = vmatprep.mubr.bf16.mxu0 0
        %4186 = vmatmul.mubr.bf16.gmra.mrb[0].mxu0 %v3964
        %v4187 = vpop.f32.mrb[0].mxu0
        %v4188 = vadd.f32 0.0, %v4187
        %v4189 = vpop.f32.mrb[0].mxu0
        %v4190 = vpop.f32.mrb[0].mxu0
        %v4191 = vadd.f32 0.0, %v4190
        %v4192 = vpop.f32.mrb[0].mxu0
        %4193 = vmatprep.mubr.bf16.mxu0 0
        %4194 = vmatmul.mubr.bf16.gmra.mrb[0].mxu0 %v3973
        %v4195 = vpop.f32.mrb[0].mxu0
        %v4196 = vadd.f32 0.0, %v4195
        %v4197 = vpop.f32.mrb[0].mxu0
        %v4198 = vpop.f32.mrb[0].mxu0
        %v4199 = vadd.f32 0.0, %v4198
        %v4200 = vpop.f32.mrb[0].mxu0
        %4201 = vmatprep.mubr.bf16.mxu0 0
        %4202 = vmatmul.mubr.bf16.gmra.mrb[0].mxu0 %v3982
        %v4203 = vpop.f32.mrb[0].mxu0
        %v4204 = vadd.f32 0.0, %v4203
        %v4205 = vpop.f32.mrb[0].mxu0
        %v4206 = vpop.f32.mrb[0].mxu0
        %v4207 = vadd.f32 0.0, %v4206
        %v4208 = vpop.f32.mrb[0].mxu0
        %4209 = vmatprep.mubr.bf16.mxu0 0
        %4210 = vmatmul.mubr.bf16.gmra.mrb[0].mxu0 %v3991
        %v4211 = vpop.f32.mrb[0].mxu0
        %v4212 = vadd.f32 0.0, %v4211
        %v4213 = vpop.f32.mrb[0].mxu0
        %v4214 = vpop.f32.mrb[0].mxu0
        %v4215 = vadd.f32 0.0, %v4214
        %v4216 = vpop.f32.mrb[0].mxu0
        %4217 = vmatprep.mubr.bf16.mxu0 0
        %4218 = vmatmul.mubr.bf16.gmra.mrb[0].mxu0 %v4000
        %v4219 = vpop.f32.mrb[0].mxu0
        %v4220 = vadd.f32 0.0, %v4219
        %v4221 = vpop.f32.mrb[0].mxu0
        %v4222 = vpop.f32.mrb[0].mxu0
        %v4223 = vadd.f32 0.0, %v4222
        %v4224 = vpop.f32.mrb[0].mxu0
        %4225 = vdwg.mxu0
        %v4226 = vadd.f32 %v3782, %v4100
        %v4227 = vadd.f32 %v3783, %v4103
        %v4228 = vadd.f32 %v3784, %v4108
        %v4229 = vadd.f32 %v3785, %v4111
        %v4230 = vadd.f32 %v3786, %v4116
        %v4231 = vadd.f32 %v3787, %v4119
        %v4232 = vadd.f32 %v3788, %v4124
        %v4233 = vadd.f32 %v3789, %v4127
        %v4234 = vadd.f32 %v3790, %v4132
        %v4235 = vadd.f32 %v3791, %v4135
        %v4236 = vadd.f32 %v3792, %v4140
        %v4237 = vadd.f32 %v3793, %v4143
        %v4238 = vadd.f32 %v3794, %v4148
        %v4239 = vadd.f32 %v3795, %v4151
        %v4240 = vadd.f32 %v3796, %v4156
        %v4241 = vadd.f32 %v3797, %v4159
        %v4242 = vadd.f32 %v3798, %v4164
        %v4243 = vadd.f32 %v3799, %v4167
        %v4244 = vadd.f32 %v3800, %v4172
        %v4245 = vadd.f32 %v3801, %v4175
        %v4246 = vadd.f32 %v3802, %v4180
        %v4247 = vadd.f32 %v3803, %v4183
        %v4248 = vadd.f32 %v3804, %v4188
        %v4249 = vadd.f32 %v3805, %v4191
        %v4250 = vadd.f32 %v3806, %v4196
        %v4251 = vadd.f32 %v3807, %v4199
        %v4252 = vadd.f32 %v3808, %v4204
        %v4253 = vadd.f32 %v3809, %v4207
        %v4254 = vadd.f32 %v3810, %v4212
        %v4255 = vadd.f32 %v3811, %v4215
        %v4256 = vadd.f32 %v3812, %v4220
        %v4257 = vadd.f32 %v3813, %v4223
        %v4258 = vld [vmem:[#allocation2 + $0x10] sm:$0xf8]
        %v4259 = vld [vmem:[#allocation2 + $0x18] sm:$0xff]
        %v4260 = vld [vmem:[#allocation2 + $0x20] sm:$0xff]
        %v4261 = vld [vmem:[#allocation2 + $0x28] sm:$0xff]
        %v4262 = vld [vmem:[#allocation2 + $0x30] sm:$0xff]
        %v4263 = vld [vmem:[#allocation2 + $0x38] sm:$0xff]
        %v4264 = vld [vmem:[#allocation2 + $0x40] sm:$0xff]
        %v4265 = vld [vmem:[#allocation2 + $0x48] sm:$0xff]
        %v4266 = vld [vmem:[#allocation2 + $0x50] sm:$0xff]
        %v4267 = vld [vmem:[#allocation2 + $0x58] sm:$0xff]
        %v4268 = vld [vmem:[#allocation2 + $0x60] sm:$0xff]
        %v4269 = vld [vmem:[#allocation2 + $0x68] sm:$0xff]
        %v4270 = vld [vmem:[#allocation2 + $0x70] sm:$0xff]
        %v4271 = vld [vmem:[#allocation2 + $0x78] sm:$0xff]
        %v4272 = vld [vmem:[#allocation2 + $0x80] sm:$0xff]
        %v4273 = vld [vmem:[#allocation2 + $0x88] sm:$0xff]
        %v4274 = vld [vmem:[#allocation2 + $0x90] sm:$0xf]
        %v4275 = vsel %vm1592, %v4258, 0
        %v4276 = vsel %vm1593, %v4259, 0
        %v4277 = vsel %vm1594, %v4260, 0
        %v4278 = vsel %vm1595, %v4261, 0
        %v4279 = vsel %vm1596, %v4262, 0
        %v4280 = vsel %vm1597, %v4263, 0
        %v4281 = vsel %vm1598, %v4264, 0
        %v4282 = vsel %vm1599, %v4265, 0
        %v4283 = vsel %vm1600, %v4266, 0
        %v4284 = vsel %vm1601, %v4267, 0
        %v4285 = vsel %vm1602, %v4268, 0
        %v4286 = vsel %vm1603, %v4269, 0
        %v4287 = vsel %vm1604, %v4270, 0
        %v4288 = vsel %vm1605, %v4271, 0
        %v4289 = vsel %vm1606, %v4272, 0
        %v4290 = vsel %vm1607, %v4273, 0
        %v4291 = vsel %vm1608, %v4274, 0
        %s4292 = scalar_lea.vmem [#allocation8], 384
        %v4293 = vld [vmem:[%s4292] sm:$0xf]
        %v4294 = vld [vmem:[%s4292 + $0x4] sm:$0xf]
        %v4295 = vld [vmem:[%s4292 + $0x8] sm:$0xf]
        %v4296 = vld [vmem:[%s4292 + $0xc] sm:$0xf]
        %v4297 = vld [vmem:[%s4292 + $0x10] sm:$0xf]
        %v4298 = vld [vmem:[%s4292 + $0x14] sm:$0xf]
        %v4299 = vld [vmem:[%s4292 + $0x18] sm:$0xf]
        %v4300 = vld [vmem:[%s4292 + $0x1c] sm:$0xf]
        %v4301 = vld [vmem:[%s4292 + $0x20] sm:$0xf]
        %v4302 = vld [vmem:[%s4292 + $0x24] sm:$0xf]
        %v4303 = vld [vmem:[%s4292 + $0x28] sm:$0xf]
        %v4304 = vld [vmem:[%s4292 + $0x2c] sm:$0xf]
        %v4305 = vld [vmem:[%s4292 + $0x30] sm:$0xf]
        %v4306 = vld [vmem:[%s4292 + $0x34] sm:$0xf]
        %v4307 = vld [vmem:[%s4292 + $0x38] sm:$0xf]
        %v4308 = vld [vmem:[%s4292 + $0x3c] sm:$0xf]
        %v4310 = vshrl.u32 %v4275, 16
        %v4312 = vrot.slane %v4310, 3
        %v4313 = vshll.u32 %v4275, 16
        %v4315 = vrot.slane %v4313, 4
        %v4316 = vor.u32 %v4312, %v4315
        %v4318 = vshrl.u32 %v4276, 16
        %v4320 = vrot.slane %v4318, 3
        %v4321 = vshll.u32 %v4276, 16
        %v4323 = vrot.slane %v4321, 4
        %v4324 = vor.u32 %v4320, %v4323
        %v4325 = vsel %vm1935, %v4316, %v4324
        %v4327 = vshrl.u32 %v4277, 16
        %v4329 = vrot.slane %v4327, 3
        %v4330 = vshll.u32 %v4277, 16
        %v4332 = vrot.slane %v4330, 4
        %v4333 = vor.u32 %v4329, %v4332
        %v4334 = vsel %vm1935, %v4324, %v4333
        %v4336 = vshrl.u32 %v4278, 16
        %v4338 = vrot.slane %v4336, 3
        %v4339 = vshll.u32 %v4278, 16
        %v4341 = vrot.slane %v4339, 4
        %v4342 = vor.u32 %v4338, %v4341
        %v4343 = vsel %vm1935, %v4333, %v4342
        %v4345 = vshrl.u32 %v4279, 16
        %v4347 = vrot.slane %v4345, 3
        %v4348 = vshll.u32 %v4279, 16
        %v4350 = vrot.slane %v4348, 4
        %v4351 = vor.u32 %v4347, %v4350
        %v4352 = vsel %vm1935, %v4342, %v4351
        %v4354 = vshrl.u32 %v4280, 16
        %v4356 = vrot.slane %v4354, 3
        %v4357 = vshll.u32 %v4280, 16
        %v4359 = vrot.slane %v4357, 4
        %v4360 = vor.u32 %v4356, %v4359
        %v4361 = vsel %vm1935, %v4351, %v4360
        %v4363 = vshrl.u32 %v4281, 16
        %v4365 = vrot.slane %v4363, 3
        %v4366 = vshll.u32 %v4281, 16
        %v4368 = vrot.slane %v4366, 4
        %v4369 = vor.u32 %v4365, %v4368
        %v4370 = vsel %vm1935, %v4360, %v4369
        %v4372 = vshrl.u32 %v4282, 16
        %v4374 = vrot.slane %v4372, 3
        %v4375 = vshll.u32 %v4282, 16
        %v4377 = vrot.slane %v4375, 4
        %v4378 = vor.u32 %v4374, %v4377
        %v4379 = vsel %vm1935, %v4369, %v4378
        %v4381 = vshrl.u32 %v4283, 16
        %v4383 = vrot.slane %v4381, 3
        %v4384 = vshll.u32 %v4283, 16
        %v4386 = vrot.slane %v4384, 4
        %v4387 = vor.u32 %v4383, %v4386
        %v4388 = vsel %vm1935, %v4378, %v4387
        %v4390 = vshrl.u32 %v4284, 16
        %v4392 = vrot.slane %v4390, 3
        %v4393 = vshll.u32 %v4284, 16
        %v4395 = vrot.slane %v4393, 4
        %v4396 = vor.u32 %v4392, %v4395
        %v4397 = vsel %vm1935, %v4387, %v4396
        %v4399 = vshrl.u32 %v4285, 16
        %v4401 = vrot.slane %v4399, 3
        %v4402 = vshll.u32 %v4285, 16
        %v4404 = vrot.slane %v4402, 4
        %v4405 = vor.u32 %v4401, %v4404
        %v4406 = vsel %vm1935, %v4396, %v4405
        %v4408 = vshrl.u32 %v4286, 16
        %v4410 = vrot.slane %v4408, 3
        %v4411 = vshll.u32 %v4286, 16
        %v4413 = vrot.slane %v4411, 4
        %v4414 = vor.u32 %v4410, %v4413
        %v4415 = vsel %vm1935, %v4405, %v4414
        %v4417 = vshrl.u32 %v4287, 16
        %v4419 = vrot.slane %v4417, 3
        %v4420 = vshll.u32 %v4287, 16
        %v4422 = vrot.slane %v4420, 4
        %v4423 = vor.u32 %v4419, %v4422
        %v4424 = vsel %vm1935, %v4414, %v4423
        %v4426 = vshrl.u32 %v4288, 16
        %v4428 = vrot.slane %v4426, 3
        %v4429 = vshll.u32 %v4288, 16
        %v4431 = vrot.slane %v4429, 4
        %v4432 = vor.u32 %v4428, %v4431
        %v4433 = vsel %vm1935, %v4423, %v4432
        %v4435 = vshrl.u32 %v4289, 16
        %v4437 = vrot.slane %v4435, 3
        %v4438 = vshll.u32 %v4289, 16
        %v4440 = vrot.slane %v4438, 4
        %v4441 = vor.u32 %v4437, %v4440
        %v4442 = vsel %vm1935, %v4432, %v4441
        %v4444 = vshrl.u32 %v4290, 16
        %v4446 = vrot.slane %v4444, 3
        %v4447 = vshll.u32 %v4290, 16
        %v4449 = vrot.slane %v4447, 4
        %v4450 = vor.u32 %v4446, %v4449
        %v4451 = vsel %vm1935, %v4441, %v4450
        %v4453 = vshrl.u32 %v4291, 16
        %v4455 = vrot.slane %v4453, 3
        %v4456 = vshll.u32 %v4291, 16
        %v4458 = vrot.slane %v4456, 4
        %v4459 = vor.u32 %v4455, %v4458
        %v4460 = vsel %vm1935, %v4450, %v4459
        %v4493 = vunpack.c.l.b16 %v4293
        %v4494 = vunpack.c.l.b16 %v4294
        %v4495 = vunpack.c.l.b16 %v4295
        %v4496 = vunpack.c.l.b16 %v4296
        %v4497 = vunpack.c.l.b16 %v4297
        %v4498 = vunpack.c.l.b16 %v4298
        %v4499 = vunpack.c.l.b16 %v4299
        %v4500 = vunpack.c.l.b16 %v4300
        %v4501 = vunpack.c.l.b16 %v4301
        %v4502 = vunpack.c.l.b16 %v4302
        %v4503 = vunpack.c.l.b16 %v4303
        %v4504 = vunpack.c.l.b16 %v4304
        %v4505 = vunpack.c.l.b16 %v4305
        %v4506 = vunpack.c.l.b16 %v4306
        %v4507 = vunpack.c.l.b16 %v4307
        %v4508 = vunpack.c.l.b16 %v4308
        %v4509 = vpack.c.b16 %v4494, %v4493
        %v4510 = vpack.c.b16 %v4496, %v4495
        %v4511 = vpack.c.b16 %v4498, %v4497
        %v4512 = vpack.c.b16 %v4500, %v4499
        %v4513 = vpack.c.b16 %v4502, %v4501
        %v4514 = vpack.c.b16 %v4504, %v4503
        %v4515 = vpack.c.b16 %v4506, %v4505
        %v4516 = vpack.c.b16 %v4508, %v4507
        %4525 = vmatprep.subr.bf16.mxu0 0
        %4526 = vmatpush1.bf16.msra.mxu0 %v4509
        %4527 = vmatprep.subr.bf16.mxu0 0
        %4528 = vmatpush1.bf16.msra.mxu0 %v4510
        %4529 = vmatprep.subr.bf16.mxu0 0
        %4530 = vmatpush1.bf16.msra.mxu0 %v4511
        %4531 = vmatprep.subr.bf16.mxu0 0
        %4532 = vmatpush1.bf16.msra.mxu0 %v4512
        %4533 = vmatprep.subr.bf16.mxu0 0
        %4534 = vmatpush1.bf16.msra.mxu0 %v4513
        %4535 = vmatprep.subr.bf16.mxu0 0
        %4536 = vmatpush1.bf16.msra.mxu0 %v4514
        %4537 = vmatprep.subr.bf16.mxu0 0
        %4538 = vmatpush1.bf16.msra.mxu0 %v4515
        %4539 = vmatprep.subr.bf16.mxu0 0
        %4540 = vmatpush1.bf16.msra.mxu0 %v4516
        %4541 = vmatprep.subr.bf16.mxu0 0
        %4542 = vmatpush1.bf16.msra.mxu0 0
        %4543 = vmatprep.subr.bf16.mxu0 0
        %4544 = vmatpush1.bf16.msra.mxu0 0
        %4545 = vmatprep.subr.bf16.mxu0 0
        %4546 = vmatpush1.bf16.msra.mxu0 0
        %4547 = vmatprep.subr.bf16.mxu0 0
        %4548 = vmatpush1.bf16.msra.mxu0 0
        %4549 = vmatprep.subr.bf16.mxu0 0
        %4550 = vmatpush1.bf16.msra.mxu0 0
        %4551 = vmatprep.subr.bf16.mxu0 0
        %4552 = vmatpush1.bf16.msra.mxu0 0
        %4553 = vmatprep.subr.bf16.mxu0 0
        %4554 = vmatpush1.bf16.msra.mxu0 0
        %4555 = vmatprep.subr.bf16.mxu0 0
        %4556 = vmatpush1.bf16.msra.mxu0 0
        %4557 = vmatprep.mubr.bf16.mxu0 0
        %4558 = vmatmul.mubr.bf16.gmra.mrb[0].mxu0 %v4325
        %v4559 = vpop.f32.mrb[0].mxu0
        %v4560 = vadd.f32 0.0, %v4559
        %v4561 = vpop.f32.mrb[0].mxu0
        %v4562 = vpop.f32.mrb[0].mxu0
        %v4563 = vadd.f32 0.0, %v4562
        %v4564 = vpop.f32.mrb[0].mxu0
        %4565 = vmatprep.mubr.bf16.mxu0 0
        %4566 = vmatmul.mubr.bf16.gmra.mrb[0].mxu0 %v4334
        %v4567 = vpop.f32.mrb[0].mxu0
        %v4568 = vadd.f32 0.0, %v4567
        %v4569 = vpop.f32.mrb[0].mxu0
        %v4570 = vpop.f32.mrb[0].mxu0
        %v4571 = vadd.f32 0.0, %v4570
        %v4572 = vpop.f32.mrb[0].mxu0
        %4573 = vmatprep.mubr.bf16.mxu0 0
        %4574 = vmatmul.mubr.bf16.gmra.mrb[0].mxu0 %v4343
        %v4575 = vpop.f32.mrb[0].mxu0
        %v4576 = vadd.f32 0.0, %v4575
        %v4577 = vpop.f32.mrb[0].mxu0
        %v4578 = vpop.f32.mrb[0].mxu0
        %v4579 = vadd.f32 0.0, %v4578
        %v4580 = vpop.f32.mrb[0].mxu0
        %4581 = vmatprep.mubr.bf16.mxu0 0
        %4582 = vmatmul.mubr.bf16.gmra.mrb[0].mxu0 %v4352
        %v4583 = vpop.f32.mrb[0].mxu0
        %v4584 = vadd.f32 0.0, %v4583
        %v4585 = vpop.f32.mrb[0].mxu0
        %v4586 = vpop.f32.mrb[0].mxu0
        %v4587 = vadd.f32 0.0, %v4586
        %v4588 = vpop.f32.mrb[0].mxu0
        %4589 = vmatprep.mubr.bf16.mxu0 0
        %4590 = vmatmul.mubr.bf16.gmra.mrb[0].mxu0 %v4361
        %v4591 = vpop.f32.mrb[0].mxu0
        %v4592 = vadd.f32 0.0, %v4591
        %v4593 = vpop.f32.mrb[0].mxu0
        %v4594 = vpop.f32.mrb[0].mxu0
        %v4595 = vadd.f32 0.0, %v4594
        %v4596 = vpop.f32.mrb[0].mxu0
        %4597 = vmatprep.mubr.bf16.mxu0 0
        %4598 = vmatmul.mubr.bf16.gmra.mrb[0].mxu0 %v4370
        %v4599 = vpop.f32.mrb[0].mxu0
        %v4600 = vadd.f32 0.0, %v4599
        %v4601 = vpop.f32.mrb[0].mxu0
        %v4602 = vpop.f32.mrb[0].mxu0
        %v4603 = vadd.f32 0.0, %v4602
        %v4604 = vpop.f32.mrb[0].mxu0
        %4605 = vmatprep.mubr.bf16.mxu0 0
        %4606 = vmatmul.mubr.bf16.gmra.mrb[0].mxu0 %v4379
        %v4607 = vpop.f32.mrb[0].mxu0
        %v4608 = vadd.f32 0.0, %v4607
        %v4609 = vpop.f32.mrb[0].mxu0
        %v4610 = vpop.f32.mrb[0].mxu0
        %v4611 = vadd.f32 0.0, %v4610
        %v4612 = vpop.f32.mrb[0].mxu0
        %4613 = vmatprep.mubr.bf16.mxu0 0
        %4614 = vmatmul.mubr.bf16.gmra.mrb[0].mxu0 %v4388
        %v4615 = vpop.f32.mrb[0].mxu0
        %v4616 = vadd.f32 0.0, %v4615
        %v4617 = vpop.f32.mrb[0].mxu0
        %v4618 = vpop.f32.mrb[0].mxu0
        %v4619 = vadd.f32 0.0, %v4618
        %v4620 = vpop.f32.mrb[0].mxu0
        %4621 = vmatprep.mubr.bf16.mxu0 0
        %4622 = vmatmul.mubr.bf16.gmra.mrb[0].mxu0 %v4397
        %v4623 = vpop.f32.mrb[0].mxu0
        %v4624 = vadd.f32 0.0, %v4623
        %v4625 = vpop.f32.mrb[0].mxu0
        %v4626 = vpop.f32.mrb[0].mxu0
        %v4627 = vadd.f32 0.0, %v4626
        %v4628 = vpop.f32.mrb[0].mxu0
        %4629 = vmatprep.mubr.bf16.mxu0 0
        %4630 = vmatmul.mubr.bf16.gmra.mrb[0].mxu0 %v4406
        %v4631 = vpop.f32.mrb[0].mxu0
        %v4632 = vadd.f32 0.0, %v4631
        %v4633 = vpop.f32.mrb[0].mxu0
        %v4634 = vpop.f32.mrb[0].mxu0
        %v4635 = vadd.f32 0.0, %v4634
        %v4636 = vpop.f32.mrb[0].mxu0
        %4637 = vmatprep.mubr.bf16.mxu0 0
        %4638 = vmatmul.mubr.bf16.gmra.mrb[0].mxu0 %v4415
        %v4639 = vpop.f32.mrb[0].mxu0
        %v4640 = vadd.f32 0.0, %v4639
        %v4641 = vpop.f32.mrb[0].mxu0
        %v4642 = vpop.f32.mrb[0].mxu0
        %v4643 = vadd.f32 0.0, %v4642
        %v4644 = vpop.f32.mrb[0].mxu0
        %4645 = vmatprep.mubr.bf16.mxu0 0
        %4646 = vmatmul.mubr.bf16.gmra.mrb[0].mxu0 %v4424
        %v4647 = vpop.f32.mrb[0].mxu0
        %v4648 = vadd.f32 0.0, %v4647
        %v4649 = vpop.f32.mrb[0].mxu0
        %v4650 = vpop.f32.mrb[0].mxu0
        %v4651 = vadd.f32 0.0, %v4650
        %v4652 = vpop.f32.mrb[0].mxu0
        %4653 = vmatprep.mubr.bf16.mxu0 0
        %4654 = vmatmul.mubr.bf16.gmra.mrb[0].mxu0 %v4433
        %v4655 = vpop.f32.mrb[0].mxu0
        %v4656 = vadd.f32 0.0, %v4655
        %v4657 = vpop.f32.mrb[0].mxu0
        %v4658 = vpop.f32.mrb[0].mxu0
        %v4659 = vadd.f32 0.0, %v4658
        %v4660 = vpop.f32.mrb[0].mxu0
        %4661 = vmatprep.mubr.bf16.mxu0 0
        %4662 = vmatmul.mubr.bf16.gmra.mrb[0].mxu0 %v4442
        %v4663 = vpop.f32.mrb[0].mxu0
        %v4664 = vadd.f32 0.0, %v4663
        %v4665 = vpop.f32.mrb[0].mxu0
        %v4666 = vpop.f32.mrb[0].mxu0
        %v4667 = vadd.f32 0.0, %v4666
        %v4668 = vpop.f32.mrb[0].mxu0
        %4669 = vmatprep.mubr.bf16.mxu0 0
        %4670 = vmatmul.mubr.bf16.gmra.mrb[0].mxu0 %v4451
        %v4671 = vpop.f32.mrb[0].mxu0
        %v4672 = vadd.f32 0.0, %v4671
        %v4673 = vpop.f32.mrb[0].mxu0
        %v4674 = vpop.f32.mrb[0].mxu0
        %v4675 = vadd.f32 0.0, %v4674
        %v4676 = vpop.f32.mrb[0].mxu0
        %4677 = vmatprep.mubr.bf16.mxu0 0
        %4678 = vmatmul.mubr.bf16.gmra.mrb[0].mxu0 %v4460
        %v4679 = vpop.f32.mrb[0].mxu0
        %v4680 = vadd.f32 0.0, %v4679
        %v4681 = vpop.f32.mrb[0].mxu0
        %v4682 = vpop.f32.mrb[0].mxu0
        %v4683 = vadd.f32 0.0, %v4682
        %v4684 = vpop.f32.mrb[0].mxu0
        %4685 = vdwg.mxu0
        %v4686 = vadd.f32 %v4226, %v4560
        %v4687 = vadd.f32 %v4227, %v4563
        %v4688 = vadd.f32 %v4228, %v4568
        %v4689 = vadd.f32 %v4229, %v4571
        %v4690 = vadd.f32 %v4230, %v4576
        %v4691 = vadd.f32 %v4231, %v4579
        %v4692 = vadd.f32 %v4232, %v4584
        %v4693 = vadd.f32 %v4233, %v4587
        %v4694 = vadd.f32 %v4234, %v4592
        %v4695 = vadd.f32 %v4235, %v4595
        %v4696 = vadd.f32 %v4236, %v4600
        %v4697 = vadd.f32 %v4237, %v4603
        %v4698 = vadd.f32 %v4238, %v4608
        %v4699 = vadd.f32 %v4239, %v4611
        %v4700 = vadd.f32 %v4240, %v4616
        %v4701 = vadd.f32 %v4241, %v4619
        %v4702 = vadd.f32 %v4242, %v4624
        %v4703 = vadd.f32 %v4243, %v4627
        %v4704 = vadd.f32 %v4244, %v4632
        %v4705 = vadd.f32 %v4245, %v4635
        %v4706 = vadd.f32 %v4246, %v4640
        %v4707 = vadd.f32 %v4247, %v4643
        %v4708 = vadd.f32 %v4248, %v4648
        %v4709 = vadd.f32 %v4249, %v4651
        %v4710 = vadd.f32 %v4250, %v4656
        %v4711 = vadd.f32 %v4251, %v4659
        %v4712 = vadd.f32 %v4252, %v4664
        %v4713 = vadd.f32 %v4253, %v4667
        %v4714 = vadd.f32 %v4254, %v4672
        %v4715 = vadd.f32 %v4255, %v4675
        %v4716 = vadd.f32 %v4256, %v4680
        %v4717 = vadd.f32 %v4257, %v4683
        %v4718 = vld [vmem:[#allocation2 + $0x10] sm:$0xf0]
        %s4719 = scalar_lea.vmem [#allocation8], 448
        %v4720 = vld [vmem:[%s4719] sm:$0xf]
        %v4721 = vld [vmem:[%s4719 + $0x4] sm:$0xf]
        %v4722 = vld [vmem:[%s4719 + $0x8] sm:$0xf]
        %v4723 = vld [vmem:[%s4719 + $0xc] sm:$0xf]
        %v4724 = vld [vmem:[%s4719 + $0x10] sm:$0xf]
        %v4725 = vld [vmem:[%s4719 + $0x14] sm:$0xf]
        %v4726 = vld [vmem:[%s4719 + $0x18] sm:$0xf]
        %v4727 = vld [vmem:[%s4719 + $0x1c] sm:$0xf]
        %v4728 = vld [vmem:[%s4719 + $0x20] sm:$0xf]
        %v4729 = vld [vmem:[%s4719 + $0x24] sm:$0xf]
        %v4730 = vld [vmem:[%s4719 + $0x28] sm:$0xf]
        %v4731 = vld [vmem:[%s4719 + $0x2c] sm:$0xf]
        %v4732 = vld [vmem:[%s4719 + $0x30] sm:$0xf]
        %v4733 = vld [vmem:[%s4719 + $0x34] sm:$0xf]
        %v4734 = vld [vmem:[%s4719 + $0x38] sm:$0xf]
        %v4735 = vld [vmem:[%s4719 + $0x3c] sm:$0xf]
        %v4753 = vrot.slane %v4718, 4
        %v4754 = vrot.slane %v4259, 4
        %v4755 = vsel %vm772, %v4753, %v4754
        %v4756 = vrot.slane %v4260, 4
        %v4757 = vsel %vm772, %v4754, %v4756
        %v4758 = vrot.slane %v4261, 4
        %v4759 = vsel %vm772, %v4756, %v4758
        %v4760 = vrot.slane %v4262, 4
        %v4761 = vsel %vm772, %v4758, %v4760
        %v4762 = vrot.slane %v4263, 4
        %v4763 = vsel %vm772, %v4760, %v4762
        %v4764 = vrot.slane %v4264, 4
        %v4765 = vsel %vm772, %v4762, %v4764
        %v4766 = vrot.slane %v4265, 4
        %v4767 = vsel %vm772, %v4764, %v4766
        %v4768 = vrot.slane %v4266, 4
        %v4769 = vsel %vm772, %v4766, %v4768
        %v4770 = vrot.slane %v4267, 4
        %v4771 = vsel %vm772, %v4768, %v4770
        %v4772 = vrot.slane %v4268, 4
        %v4773 = vsel %vm772, %v4770, %v4772
        %v4774 = vrot.slane %v4269, 4
        %v4775 = vsel %vm772, %v4772, %v4774
        %v4776 = vrot.slane %v4270, 4
        %v4777 = vsel %vm772, %v4774, %v4776
        %v4778 = vrot.slane %v4271, 4
        %v4779 = vsel %vm772, %v4776, %v4778
        %v4780 = vrot.slane %v4272, 4
        %v4781 = vsel %vm772, %v4778, %v4780
        %v4782 = vrot.slane %v4273, 4
        %v4783 = vsel %vm772, %v4780, %v4782
        %v4784 = vrot.slane %v4274, 4
        %v4785 = vsel %vm772, %v4782, %v4784
        %v4818 = vunpack.c.l.b16 %v4720
        %v4819 = vunpack.c.l.b16 %v4721
        %v4820 = vunpack.c.l.b16 %v4722
        %v4821 = vunpack.c.l.b16 %v4723
        %v4822 = vunpack.c.l.b16 %v4724
        %v4823 = vunpack.c.l.b16 %v4725
        %v4824 = vunpack.c.l.b16 %v4726
        %v4825 = vunpack.c.l.b16 %v4727
        %v4826 = vunpack.c.l.b16 %v4728
        %v4827 = vunpack.c.l.b16 %v4729
        %v4828 = vunpack.c.l.b16 %v4730
        %v4829 = vunpack.c.l.b16 %v4731
        %v4830 = vunpack.c.l.b16 %v4732
        %v4831 = vunpack.c.l.b16 %v4733
        %v4832 = vunpack.c.l.b16 %v4734
        %v4833 = vunpack.c.l.b16 %v4735
        %v4834 = vpack.c.b16 %v4819, %v4818
        %v4835 = vpack.c.b16 %v4821, %v4820
        %v4836 = vpack.c.b16 %v4823, %v4822
        %v4837 = vpack.c.b16 %v4825, %v4824
        %v4838 = vpack.c.b16 %v4827, %v4826
        %v4839 = vpack.c.b16 %v4829, %v4828
        %v4840 = vpack.c.b16 %v4831, %v4830
        %v4841 = vpack.c.b16 %v4833, %v4832
        %4850 = vmatprep.subr.bf16.mxu0 0
        %4851 = vmatpush1.bf16.msra.mxu0 %v4834
        %4852 = vmatprep.subr.bf16.mxu0 0
        %4853 = vmatpush1.bf16.msra.mxu0 %v4835
        %4854 = vmatprep.subr.bf16.mxu0 0
        %4855 = vmatpush1.bf16.msra.mxu0 %v4836
        %4856 = vmatprep.subr.bf16.mxu0 0
        %4857 = vmatpush1.bf16.msra.mxu0 %v4837
        %4858 = vmatprep.subr.bf16.mxu0 0
        %4859 = vmatpush1.bf16.msra.mxu0 %v4838
        %4860 = vmatprep.subr.bf16.mxu0 0
        %4861 = vmatpush1.bf16.msra.mxu0 %v4839
        %4862 = vmatprep.subr.bf16.mxu0 0
        %4863 = vmatpush1.bf16.msra.mxu0 %v4840
        %4864 = vmatprep.subr.bf16.mxu0 0
        %4865 = vmatpush1.bf16.msra.mxu0 %v4841
        %4866 = vmatprep.subr.bf16.mxu0 0
        %4867 = vmatpush1.bf16.msra.mxu0 0
        %4868 = vmatprep.subr.bf16.mxu0 0
        %4869 = vmatpush1.bf16.msra.mxu0 0
        %4870 = vmatprep.subr.bf16.mxu0 0
        %4871 = vmatpush1.bf16.msra.mxu0 0
        %4872 = vmatprep.subr.bf16.mxu0 0
        %4873 = vmatpush1.bf16.msra.mxu0 0
        %4874 = vmatprep.subr.bf16.mxu0 0
        %4875 = vmatpush1.bf16.msra.mxu0 0
        %4876 = vmatprep.subr.bf16.mxu0 0
        %4877 = vmatpush1.bf16.msra.mxu0 0
        %4878 = vmatprep.subr.bf16.mxu0 0
        %4879 = vmatpush1.bf16.msra.mxu0 0
        %4880 = vmatprep.subr.bf16.mxu0 0
        %4881 = vmatpush1.bf16.msra.mxu0 0
        %4882 = vmatprep.mubr.bf16.mxu0 0
        %4883 = vmatmul.mubr.bf16.gmra.mrb[0].mxu0 %v4755
        %v4884 = vpop.f32.mrb[0].mxu0
        %v4885 = vadd.f32 0.0, %v4884
        %v4886 = vpop.f32.mrb[0].mxu0
        %v4887 = vpop.f32.mrb[0].mxu0
        %v4888 = vadd.f32 0.0, %v4887
        %v4889 = vpop.f32.mrb[0].mxu0
        %4890 = vmatprep.mubr.bf16.mxu0 0
        %4891 = vmatmul.mubr.bf16.gmra.mrb[0].mxu0 %v4757
        %v4892 = vpop.f32.mrb[0].mxu0
        %v4893 = vadd.f32 0.0, %v4892
        %v4894 = vpop.f32.mrb[0].mxu0
        %v4895 = vpop.f32.mrb[0].mxu0
        %v4896 = vadd.f32 0.0, %v4895
        %v4897 = vpop.f32.mrb[0].mxu0
        %4898 = vmatprep.mubr.bf16.mxu0 0
        %4899 = vmatmul.mubr.bf16.gmra.mrb[0].mxu0 %v4759
        %v4900 = vpop.f32.mrb[0].mxu0
        %v4901 = vadd.f32 0.0, %v4900
        %v4902 = vpop.f32.mrb[0].mxu0
        %v4903 = vpop.f32.mrb[0].mxu0
        %v4904 = vadd.f32 0.0, %v4903
        %v4905 = vpop.f32.mrb[0].mxu0
        %4906 = vmatprep.mubr.bf16.mxu0 0
        %4907 = vmatmul.mubr.bf16.gmra.mrb[0].mxu0 %v4761
        %v4908 = vpop.f32.mrb[0].mxu0
        %v4909 = vadd.f32 0.0, %v4908
        %v4910 = vpop.f32.mrb[0].mxu0
        %v4911 = vpop.f32.mrb[0].mxu0
        %v4912 = vadd.f32 0.0, %v4911
        %v4913 = vpop.f32.mrb[0].mxu0
        %4914 = vmatprep.mubr.bf16.mxu0 0
        %4915 = vmatmul.mubr.bf16.gmra.mrb[0].mxu0 %v4763
        %v4916 = vpop.f32.mrb[0].mxu0
        %v4917 = vadd.f32 0.0, %v4916
        %v4918 = vpop.f32.mrb[0].mxu0
        %v4919 = vpop.f32.mrb[0].mxu0
        %v4920 = vadd.f32 0.0, %v4919
        %v4921 = vpop.f32.mrb[0].mxu0
        %4922 = vmatprep.mubr.bf16.mxu0 0
        %4923 = vmatmul.mubr.bf16.gmra.mrb[0].mxu0 %v4765
        %v4924 = vpop.f32.mrb[0].mxu0
        %v4925 = vadd.f32 0.0, %v4924
        %v4926 = vpop.f32.mrb[0].mxu0
        %v4927 = vpop.f32.mrb[0].mxu0
        %v4928 = vadd.f32 0.0, %v4927
        %v4929 = vpop.f32.mrb[0].mxu0
        %4930 = vmatprep.mubr.bf16.mxu0 0
        %4931 = vmatmul.mubr.bf16.gmra.mrb[0].mxu0 %v4767
        %v4932 = vpop.f32.mrb[0].mxu0
        %v4933 = vadd.f32 0.0, %v4932
        %v4934 = vpop.f32.mrb[0].mxu0
        %v4935 = vpop.f32.mrb[0].mxu0
        %v4936 = vadd.f32 0.0, %v4935
        %v4937 = vpop.f32.mrb[0].mxu0
        %4938 = vmatprep.mubr.bf16.mxu0 0
        %4939 = vmatmul.mubr.bf16.gmra.mrb[0].mxu0 %v4769
        %v4940 = vpop.f32.mrb[0].mxu0
        %v4941 = vadd.f32 0.0, %v4940
        %v4942 = vpop.f32.mrb[0].mxu0
        %v4943 = vpop.f32.mrb[0].mxu0
        %v4944 = vadd.f32 0.0, %v4943
        %v4945 = vpop.f32.mrb[0].mxu0
        %4946 = vmatprep.mubr.bf16.mxu0 0
        %4947 = vmatmul.mubr.bf16.gmra.mrb[0].mxu0 %v4771
        %v4948 = vpop.f32.mrb[0].mxu0
        %v4949 = vadd.f32 0.0, %v4948
        %v4950 = vpop.f32.mrb[0].mxu0
        %v4951 = vpop.f32.mrb[0].mxu0
        %v4952 = vadd.f32 0.0, %v4951
        %v4953 = vpop.f32.mrb[0].mxu0
        %4954 = vmatprep.mubr.bf16.mxu0 0
        %4955 = vmatmul.mubr.bf16.gmra.mrb[0].mxu0 %v4773
        %v4956 = vpop.f32.mrb[0].mxu0
        %v4957 = vadd.f32 0.0, %v4956
        %v4958 = vpop.f32.mrb[0].mxu0
        %v4959 = vpop.f32.mrb[0].mxu0
        %v4960 = vadd.f32 0.0, %v4959
        %v4961 = vpop.f32.mrb[0].mxu0
        %4962 = vmatprep.mubr.bf16.mxu0 0
        %4963 = vmatmul.mubr.bf16.gmra.mrb[0].mxu0 %v4775
        %v4964 = vpop.f32.mrb[0].mxu0
        %v4965 = vadd.f32 0.0, %v4964
        %v4966 = vpop.f32.mrb[0].mxu0
        %v4967 = vpop.f32.mrb[0].mxu0
        %v4968 = vadd.f32 0.0, %v4967
        %v4969 = vpop.f32.mrb[0].mxu0
        %4970 = vmatprep.mubr.bf16.mxu0 0
        %4971 = vmatmul.mubr.bf16.gmra.mrb[0].mxu0 %v4777
        %v4972 = vpop.f32.mrb[0].mxu0
        %v4973 = vadd.f32 0.0, %v4972
        %v4974 = vpop.f32.mrb[0].mxu0
        %v4975 = vpop.f32.mrb[0].mxu0
        %v4976 = vadd.f32 0.0, %v4975
        %v4977 = vpop.f32.mrb[0].mxu0
        %4978 = vmatprep.mubr.bf16.mxu0 0
        %4979 = vmatmul.mubr.bf16.gmra.mrb[0].mxu0 %v4779
        %v4980 = vpop.f32.mrb[0].mxu0
        %v4981 = vadd.f32 0.0, %v4980
        %v4982 = vpop.f32.mrb[0].mxu0
        %v4983 = vpop.f32.mrb[0].mxu0
        %v4984 = vadd.f32 0.0, %v4983
        %v4985 = vpop.f32.mrb[0].mxu0
        %4986 = vmatprep.mubr.bf16.mxu0 0
        %4987 = vmatmul.mubr.bf16.gmra.mrb[0].mxu0 %v4781
        %v4988 = vpop.f32.mrb[0].mxu0
        %v4989 = vadd.f32 0.0, %v4988
        %v4990 = vpop.f32.mrb[0].mxu0
        %v4991 = vpop.f32.mrb[0].mxu0
        %v4992 = vadd.f32 0.0, %v4991
        %v4993 = vpop.f32.mrb[0].mxu0
        %4994 = vmatprep.mubr.bf16.mxu0 0
        %4995 = vmatmul.mubr.bf16.gmra.mrb[0].mxu0 %v4783
        %v4996 = vpop.f32.mrb[0].mxu0
        %v4997 = vadd.f32 0.0, %v4996
        %v4998 = vpop.f32.mrb[0].mxu0
        %v4999 = vpop.f32.mrb[0].mxu0
        %v5000 = vadd.f32 0.0, %v4999
        %v5001 = vpop.f32.mrb[0].mxu0
        %5002 = vmatprep.mubr.bf16.mxu0 0
        %5003 = vmatmul.mubr.bf16.gmra.mrb[0].mxu0 %v4785
        %v5004 = vpop.f32.mrb[0].mxu0
        %v5005 = vadd.f32 0.0, %v5004
        %v5006 = vpop.f32.mrb[0].mxu0
        %v5007 = vpop.f32.mrb[0].mxu0
        %v5008 = vadd.f32 0.0, %v5007
        %v5009 = vpop.f32.mrb[0].mxu0
        %5010 = vdwg.mxu0
        %v5011 = vadd.f32 %v4686, %v4885
        %v5012 = vadd.f32 %v4687, %v4888
        %v5013 = vadd.f32 %v4688, %v4893
        %v5014 = vadd.f32 %v4689, %v4896
        %v5015 = vadd.f32 %v4690, %v4901
        %v5016 = vadd.f32 %v4691, %v4904
        %v5017 = vadd.f32 %v4692, %v4909
        %v5018 = vadd.f32 %v4693, %v4912
        %v5019 = vadd.f32 %v4694, %v4917
        %v5020 = vadd.f32 %v4695, %v4920
        %v5021 = vadd.f32 %v4696, %v4925
        %v5022 = vadd.f32 %v4697, %v4928
        %v5023 = vadd.f32 %v4698, %v4933
        %v5024 = vadd.f32 %v4699, %v4936
        %v5025 = vadd.f32 %v4700, %v4941
        %v5026 = vadd.f32 %v4701, %v4944
        %v5027 = vadd.f32 %v4702, %v4949
        %v5028 = vadd.f32 %v4703, %v4952
        %v5029 = vadd.f32 %v4704, %v4957
        %v5030 = vadd.f32 %v4705, %v4960
        %v5031 = vadd.f32 %v4706, %v4965
        %v5032 = vadd.f32 %v4707, %v4968
        %v5033 = vadd.f32 %v4708, %v4973
        %v5034 = vadd.f32 %v4709, %v4976
        %v5035 = vadd.f32 %v4710, %v4981
        %v5036 = vadd.f32 %v4711, %v4984
        %v5037 = vadd.f32 %v4712, %v4989
        %v5038 = vadd.f32 %v4713, %v4992
        %v5039 = vadd.f32 %v4714, %v4997
        %v5040 = vadd.f32 %v4715, %v5000
        %v5041 = vadd.f32 %v4716, %v5005
        %v5042 = vadd.f32 %v4717, %v5008
        %v5043 = vld [vmem:[#allocation2 + $0x90] sm:$0x1f]
        %v5044 = vsel %vm2569, %v4718, 0
        %v5045 = vsel %vm2570, %v4259, 0
        %v5046 = vsel %vm2571, %v4260, 0
        %v5047 = vsel %vm2572, %v4261, 0
        %v5048 = vsel %vm2573, %v4262, 0
        %v5049 = vsel %vm2574, %v4263, 0
        %v5050 = vsel %vm2575, %v4264, 0
        %v5051 = vsel %vm2576, %v4265, 0
        %v5052 = vsel %vm2577, %v4266, 0
        %v5053 = vsel %vm2578, %v4267, 0
        %v5054 = vsel %vm2579, %v4268, 0
        %v5055 = vsel %vm2580, %v4269, 0
        %v5056 = vsel %vm2581, %v4270, 0
        %v5057 = vsel %vm2582, %v4271, 0
        %v5058 = vsel %vm2583, %v4272, 0
        %v5059 = vsel %vm2584, %v4273, 0
        %v5060 = vsel %vm2585, %v5043, 0
        %s5061 = scalar_lea.vmem [#allocation8], 512
        %v5062 = vld [vmem:[%s5061] sm:$0xf]
        %v5063 = vld [vmem:[%s5061 + $0x4] sm:$0xf]
        %v5064 = vld [vmem:[%s5061 + $0x8] sm:$0xf]
        %v5065 = vld [vmem:[%s5061 + $0xc] sm:$0xf]
        %v5066 = vld [vmem:[%s5061 + $0x10] sm:$0xf]
        %v5067 = vld [vmem:[%s5061 + $0x14] sm:$0xf]
        %v5068 = vld [vmem:[%s5061 + $0x18] sm:$0xf]
        %v5069 = vld [vmem:[%s5061 + $0x1c] sm:$0xf]
        %v5070 = vld [vmem:[%s5061 + $0x20] sm:$0xf]
        %v5071 = vld [vmem:[%s5061 + $0x24] sm:$0xf]
        %v5072 = vld [vmem:[%s5061 + $0x28] sm:$0xf]
        %v5073 = vld [vmem:[%s5061 + $0x2c] sm:$0xf]
        %v5074 = vld [vmem:[%s5061 + $0x30] sm:$0xf]
        %v5075 = vld [vmem:[%s5061 + $0x34] sm:$0xf]
        %v5076 = vld [vmem:[%s5061 + $0x38] sm:$0xf]
        %v5077 = vld [vmem:[%s5061 + $0x3c] sm:$0xf]
        %v5079 = vshrl.u32 %v5044, 16
        %v5081 = vrot.slane %v5079, 4
        %v5082 = vshll.u32 %v5044, 16
        %v5084 = vrot.slane %v5082, 5
        %v5085 = vor.u32 %v5081, %v5084
        %v5087 = vshrl.u32 %v5045, 16
        %v5089 = vrot.slane %v5087, 4
        %v5090 = vshll.u32 %v5045, 16
        %v5092 = vrot.slane %v5090, 5
        %v5093 = vor.u32 %v5089, %v5092
        %v5094 = vsel %vm1448, %v5085, %v5093
        %v5096 = vshrl.u32 %v5046, 16
        %v5098 = vrot.slane %v5096, 4
        %v5099 = vshll.u32 %v5046, 16
        %v5101 = vrot.slane %v5099, 5
        %v5102 = vor.u32 %v5098, %v5101
        %v5103 = vsel %vm1448, %v5093, %v5102
        %v5105 = vshrl.u32 %v5047, 16
        %v5107 = vrot.slane %v5105, 4
        %v5108 = vshll.u32 %v5047, 16
        %v5110 = vrot.slane %v5108, 5
        %v5111 = vor.u32 %v5107, %v5110
        %v5112 = vsel %vm1448, %v5102, %v5111
        %v5114 = vshrl.u32 %v5048, 16
        %v5116 = vrot.slane %v5114, 4
        %v5117 = vshll.u32 %v5048, 16
        %v5119 = vrot.slane %v5117, 5
        %v5120 = vor.u32 %v5116, %v5119
        %v5121 = vsel %vm1448, %v5111, %v5120
        %v5123 = vshrl.u32 %v5049, 16
        %v5125 = vrot.slane %v5123, 4
        %v5126 = vshll.u32 %v5049, 16
        %v5128 = vrot.slane %v5126, 5
        %v5129 = vor.u32 %v5125, %v5128
        %v5130 = vsel %vm1448, %v5120, %v5129
        %v5132 = vshrl.u32 %v5050, 16
        %v5134 = vrot.slane %v5132, 4
        %v5135 = vshll.u32 %v5050, 16
        %v5137 = vrot.slane %v5135, 5
        %v5138 = vor.u32 %v5134, %v5137
        %v5139 = vsel %vm1448, %v5129, %v5138
        %v5141 = vshrl.u32 %v5051, 16
        %v5143 = vrot.slane %v5141, 4
        %v5144 = vshll.u32 %v5051, 16
        %v5146 = vrot.slane %v5144, 5
        %v5147 = vor.u32 %v5143, %v5146
        %v5148 = vsel %vm1448, %v5138, %v5147
        %v5150 = vshrl.u32 %v5052, 16
        %v5152 = vrot.slane %v5150, 4
        %v5153 = vshll.u32 %v5052, 16
        %v5155 = vrot.slane %v5153, 5
        %v5156 = vor.u32 %v5152, %v5155
        %v5157 = vsel %vm1448, %v5147, %v5156
        %v5159 = vshrl.u32 %v5053, 16
        %v5161 = vrot.slane %v5159, 4
        %v5162 = vshll.u32 %v5053, 16
        %v5164 = vrot.slane %v5162, 5
        %v5165 = vor.u32 %v5161, %v5164
        %v5166 = vsel %vm1448, %v5156, %v5165
        %v5168 = vshrl.u32 %v5054, 16
        %v5170 = vrot.slane %v5168, 4
        %v5171 = vshll.u32 %v5054, 16
        %v5173 = vrot.slane %v5171, 5
        %v5174 = vor.u32 %v5170, %v5173
        %v5175 = vsel %vm1448, %v5165, %v5174
        %v5177 = vshrl.u32 %v5055, 16
        %v5179 = vrot.slane %v5177, 4
        %v5180 = vshll.u32 %v5055, 16
        %v5182 = vrot.slane %v5180, 5
        %v5183 = vor.u32 %v5179, %v5182
        %v5184 = vsel %vm1448, %v5174, %v5183
        %v5186 = vshrl.u32 %v5056, 16
        %v5188 = vrot.slane %v5186, 4
        %v5189 = vshll.u32 %v5056, 16
        %v5191 = vrot.slane %v5189, 5
        %v5192 = vor.u32 %v5188, %v5191
        %v5193 = vsel %vm1448, %v5183, %v5192
        %v5195 = vshrl.u32 %v5057, 16
        %v5197 = vrot.slane %v5195, 4
        %v5198 = vshll.u32 %v5057, 16
        %v5200 = vrot.slane %v5198, 5
        %v5201 = vor.u32 %v5197, %v5200
        %v5202 = vsel %vm1448, %v5192, %v5201
        %v5204 = vshrl.u32 %v5058, 16
        %v5206 = vrot.slane %v5204, 4
        %v5207 = vshll.u32 %v5058, 16
        %v5209 = vrot.slane %v5207, 5
        %v5210 = vor.u32 %v5206, %v5209
        %v5211 = vsel %vm1448, %v5201, %v5210
        %v5213 = vshrl.u32 %v5059, 16
        %v5215 = vrot.slane %v5213, 4
        %v5216 = vshll.u32 %v5059, 16
        %v5218 = vrot.slane %v5216, 5
        %v5219 = vor.u32 %v5215, %v5218
        %v5220 = vsel %vm1448, %v5210, %v5219
        %v5222 = vshrl.u32 %v5060, 16
        %v5224 = vrot.slane %v5222, 4
        %v5225 = vshll.u32 %v5060, 16
        %v5227 = vrot.slane %v5225, 5
        %v5228 = vor.u32 %v5224, %v5227
        %v5229 = vsel %vm1448, %v5219, %v5228
        %v5262 = vunpack.c.l.b16 %v5062
        %v5263 = vunpack.c.l.b16 %v5063
        %v5264 = vunpack.c.l.b16 %v5064
        %v5265 = vunpack.c.l.b16 %v5065
        %v5266 = vunpack.c.l.b16 %v5066
        %v5267 = vunpack.c.l.b16 %v5067
        %v5268 = vunpack.c.l.b16 %v5068
        %v5269 = vunpack.c.l.b16 %v5069
        %v5270 = vunpack.c.l.b16 %v5070
        %v5271 = vunpack.c.l.b16 %v5071
        %v5272 = vunpack.c.l.b16 %v5072
        %v5273 = vunpack.c.l.b16 %v5073
        %v5274 = vunpack.c.l.b16 %v5074
        %v5275 = vunpack.c.l.b16 %v5075
        %v5276 = vunpack.c.l.b16 %v5076
        %v5277 = vunpack.c.l.b16 %v5077
        %v5278 = vpack.c.b16 %v5263, %v5262
        %v5279 = vpack.c.b16 %v5265, %v5264
        %v5280 = vpack.c.b16 %v5267, %v5266
        %v5281 = vpack.c.b16 %v5269, %v5268
        %v5282 = vpack.c.b16 %v5271, %v5270
        %v5283 = vpack.c.b16 %v5273, %v5272
        %v5284 = vpack.c.b16 %v5275, %v5274
        %v5285 = vpack.c.b16 %v5277, %v5276
        %5294 = vmatprep.subr.bf16.mxu0 0
        %5295 = vmatpush1.bf16.msra.mxu0 %v5278
        %5296 = vmatprep.subr.bf16.mxu0 0
        %5297 = vmatpush1.bf16.msra.mxu0 %v5279
        %5298 = vmatprep.subr.bf16.mxu0 0
        %5299 = vmatpush1.bf16.msra.mxu0 %v5280
        %5300 = vmatprep.subr.bf16.mxu0 0
        %5301 = vmatpush1.bf16.msra.mxu0 %v5281
        %5302 = vmatprep.subr.bf16.mxu0 0
        %5303 = vmatpush1.bf16.msra.mxu0 %v5282
        %5304 = vmatprep.subr.bf16.mxu0 0
        %5305 = vmatpush1.bf16.msra.mxu0 %v5283
        %5306 = vmatprep.subr.bf16.mxu0 0
        %5307 = vmatpush1.bf16.msra.mxu0 %v5284
        %5308 = vmatprep.subr.bf16.mxu0 0
        %5309 = vmatpush1.bf16.msra.mxu0 %v5285
        %5310 = vmatprep.subr.bf16.mxu0 0
        %5311 = vmatpush1.bf16.msra.mxu0 0
        %5312 = vmatprep.subr.bf16.mxu0 0
        %5313 = vmatpush1.bf16.msra.mxu0 0
        %5314 = vmatprep.subr.bf16.mxu0 0
        %5315 = vmatpush1.bf16.msra.mxu0 0
        %5316 = vmatprep.subr.bf16.mxu0 0
        %5317 = vmatpush1.bf16.msra.mxu0 0
        %5318 = vmatprep.subr.bf16.mxu0 0
        %5319 = vmatpush1.bf16.msra.mxu0 0
        %5320 = vmatprep.subr.bf16.mxu0 0
        %5321 = vmatpush1.bf16.msra.mxu0 0
        %5322 = vmatprep.subr.bf16.mxu0 0
        %5323 = vmatpush1.bf16.msra.mxu0 0
        %5324 = vmatprep.subr.bf16.mxu0 0
        %5325 = vmatpush1.bf16.msra.mxu0 0
        %5326 = vmatprep.mubr.bf16.mxu0 0
        %5327 = vmatmul.mubr.bf16.gmra.mrb[0].mxu0 %v5094
        %v5328 = vpop.f32.mrb[0].mxu0
        %v5329 = vadd.f32 0.0, %v5328
        %v5330 = vpop.f32.mrb[0].mxu0
        %v5331 = vpop.f32.mrb[0].mxu0
        %v5332 = vadd.f32 0.0, %v5331
        %v5333 = vpop.f32.mrb[0].mxu0
        %5334 = vmatprep.mubr.bf16.mxu0 0
        %5335 = vmatmul.mubr.bf16.gmra.mrb[0].mxu0 %v5103
        %v5336 = vpop.f32.mrb[0].mxu0
        %v5337 = vadd.f32 0.0, %v5336
        %v5338 = vpop.f32.mrb[0].mxu0
        %v5339 = vpop.f32.mrb[0].mxu0
        %v5340 = vadd.f32 0.0, %v5339
        %v5341 = vpop.f32.mrb[0].mxu0
        %5342 = vmatprep.mubr.bf16.mxu0 0
        %5343 = vmatmul.mubr.bf16.gmra.mrb[0].mxu0 %v5112
        %v5344 = vpop.f32.mrb[0].mxu0
        %v5345 = vadd.f32 0.0, %v5344
        %v5346 = vpop.f32.mrb[0].mxu0
        %v5347 = vpop.f32.mrb[0].mxu0
        %v5348 = vadd.f32 0.0, %v5347
        %v5349 = vpop.f32.mrb[0].mxu0
        %5350 = vmatprep.mubr.bf16.mxu0 0
        %5351 = vmatmul.mubr.bf16.gmra.mrb[0].mxu0 %v5121
        %v5352 = vpop.f32.mrb[0].mxu0
        %v5353 = vadd.f32 0.0, %v5352
        %v5354 = vpop.f32.mrb[0].mxu0
        %v5355 = vpop.f32.mrb[0].mxu0
        %v5356 = vadd.f32 0.0, %v5355
        %v5357 = vpop.f32.mrb[0].mxu0
        %5358 = vmatprep.mubr.bf16.mxu0 0
        %5359 = vmatmul.mubr.bf16.gmra.mrb[0].mxu0 %v5130
        %v5360 = vpop.f32.mrb[0].mxu0
        %v5361 = vadd.f32 0.0, %v5360
        %v5362 = vpop.f32.mrb[0].mxu0
        %v5363 = vpop.f32.mrb[0].mxu0
        %v5364 = vadd.f32 0.0, %v5363
        %v5365 = vpop.f32.mrb[0].mxu0
        %5366 = vmatprep.mubr.bf16.mxu0 0
        %5367 = vmatmul.mubr.bf16.gmra.mrb[0].mxu0 %v5139
        %v5368 = vpop.f32.mrb[0].mxu0
        %v5369 = vadd.f32 0.0, %v5368
        %v5370 = vpop.f32.mrb[0].mxu0
        %v5371 = vpop.f32.mrb[0].mxu0
        %v5372 = vadd.f32 0.0, %v5371
        %v5373 = vpop.f32.mrb[0].mxu0
        %5374 = vmatprep.mubr.bf16.mxu0 0
        %5375 = vmatmul.mubr.bf16.gmra.mrb[0].mxu0 %v5148
        %v5376 = vpop.f32.mrb[0].mxu0
        %v5377 = vadd.f32 0.0, %v5376
        %v5378 = vpop.f32.mrb[0].mxu0
        %v5379 = vpop.f32.mrb[0].mxu0
        %v5380 = vadd.f32 0.0, %v5379
        %v5381 = vpop.f32.mrb[0].mxu0
        %5382 = vmatprep.mubr.bf16.mxu0 0
        %5383 = vmatmul.mubr.bf16.gmra.mrb[0].mxu0 %v5157
        %v5384 = vpop.f32.mrb[0].mxu0
        %v5385 = vadd.f32 0.0, %v5384
        %v5386 = vpop.f32.mrb[0].mxu0
        %v5387 = vpop.f32.mrb[0].mxu0
        %v5388 = vadd.f32 0.0, %v5387
        %v5389 = vpop.f32.mrb[0].mxu0
        %5390 = vmatprep.mubr.bf16.mxu0 0
        %5391 = vmatmul.mubr.bf16.gmra.mrb[0].mxu0 %v5166
        %v5392 = vpop.f32.mrb[0].mxu0
        %v5393 = vadd.f32 0.0, %v5392
        %v5394 = vpop.f32.mrb[0].mxu0
        %v5395 = vpop.f32.mrb[0].mxu0
        %v5396 = vadd.f32 0.0, %v5395
        %v5397 = vpop.f32.mrb[0].mxu0
        %5398 = vmatprep.mubr.bf16.mxu0 0
        %5399 = vmatmul.mubr.bf16.gmra.mrb[0].mxu0 %v5175
        %v5400 = vpop.f32.mrb[0].mxu0
        %v5401 = vadd.f32 0.0, %v5400
        %v5402 = vpop.f32.mrb[0].mxu0
        %v5403 = vpop.f32.mrb[0].mxu0
        %v5404 = vadd.f32 0.0, %v5403
        %v5405 = vpop.f32.mrb[0].mxu0
        %5406 = vmatprep.mubr.bf16.mxu0 0
        %5407 = vmatmul.mubr.bf16.gmra.mrb[0].mxu0 %v5184
        %v5408 = vpop.f32.mrb[0].mxu0
        %v5409 = vadd.f32 0.0, %v5408
        %v5410 = vpop.f32.mrb[0].mxu0
        %v5411 = vpop.f32.mrb[0].mxu0
        %v5412 = vadd.f32 0.0, %v5411
        %v5413 = vpop.f32.mrb[0].mxu0
        %5414 = vmatprep.mubr.bf16.mxu0 0
        %5415 = vmatmul.mubr.bf16.gmra.mrb[0].mxu0 %v5193
        %v5416 = vpop.f32.mrb[0].mxu0
        %v5417 = vadd.f32 0.0, %v5416
        %v5418 = vpop.f32.mrb[0].mxu0
        %v5419 = vpop.f32.mrb[0].mxu0
        %v5420 = vadd.f32 0.0, %v5419
        %v5421 = vpop.f32.mrb[0].mxu0
        %5422 = vmatprep.mubr.bf16.mxu0 0
        %5423 = vmatmul.mubr.bf16.gmra.mrb[0].mxu0 %v5202
        %v5424 = vpop.f32.mrb[0].mxu0
        %v5425 = vadd.f32 0.0, %v5424
        %v5426 = vpop.f32.mrb[0].mxu0
        %v5427 = vpop.f32.mrb[0].mxu0
        %v5428 = vadd.f32 0.0, %v5427
        %v5429 = vpop.f32.mrb[0].mxu0
        %5430 = vmatprep.mubr.bf16.mxu0 0
        %5431 = vmatmul.mubr.bf16.gmra.mrb[0].mxu0 %v5211
        %v5432 = vpop.f32.mrb[0].mxu0
        %v5433 = vadd.f32 0.0, %v5432
        %v5434 = vpop.f32.mrb[0].mxu0
        %v5435 = vpop.f32.mrb[0].mxu0
        %v5436 = vadd.f32 0.0, %v5435
        %v5437 = vpop.f32.mrb[0].mxu0
        %5438 = vmatprep.mubr.bf16.mxu0 0
        %5439 = vmatmul.mubr.bf16.gmra.mrb[0].mxu0 %v5220
        %v5440 = vpop.f32.mrb[0].mxu0
        %v5441 = vadd.f32 0.0, %v5440
        %v5442 = vpop.f32.mrb[0].mxu0
        %v5443 = vpop.f32.mrb[0].mxu0
        %v5444 = vadd.f32 0.0, %v5443
        %v5445 = vpop.f32.mrb[0].mxu0
        %5446 = vmatprep.mubr.bf16.mxu0 0
        %5447 = vmatmul.mubr.bf16.gmra.mrb[0].mxu0 %v5229
        %v5448 = vpop.f32.mrb[0].mxu0
        %v5449 = vadd.f32 0.0, %v5448
        %v5450 = vpop.f32.mrb[0].mxu0
        %v5451 = vpop.f32.mrb[0].mxu0
        %v5452 = vadd.f32 0.0, %v5451
        %v5453 = vpop.f32.mrb[0].mxu0
        %5454 = vdwg.mxu0
        %v5455 = vadd.f32 %v5011, %v5329
        %v5456 = vadd.f32 %v5012, %v5332
        %v5457 = vadd.f32 %v5013, %v5337
        %v5458 = vadd.f32 %v5014, %v5340
        %v5459 = vadd.f32 %v5015, %v5345
        %v5460 = vadd.f32 %v5016, %v5348
        %v5461 = vadd.f32 %v5017, %v5353
        %v5462 = vadd.f32 %v5018, %v5356
        %v5463 = vadd.f32 %v5019, %v5361
        %v5464 = vadd.f32 %v5020, %v5364
        %v5465 = vadd.f32 %v5021, %v5369
        %v5466 = vadd.f32 %v5022, %v5372
        %v5467 = vadd.f32 %v5023, %v5377
        %v5468 = vadd.f32 %v5024, %v5380
        %v5469 = vadd.f32 %v5025, %v5385
        %v5470 = vadd.f32 %v5026, %v5388
        %v5471 = vadd.f32 %v5027, %v5393
        %v5472 = vadd.f32 %v5028, %v5396
        %v5473 = vadd.f32 %v5029, %v5401
        %v5474 = vadd.f32 %v5030, %v5404
        %v5475 = vadd.f32 %v5031, %v5409
        %v5476 = vadd.f32 %v5032, %v5412
        %v5477 = vadd.f32 %v5033, %v5417
        %v5478 = vadd.f32 %v5034, %v5420
        %v5479 = vadd.f32 %v5035, %v5425
        %v5480 = vadd.f32 %v5036, %v5428
        %v5481 = vadd.f32 %v5037, %v5433
        %v5482 = vadd.f32 %v5038, %v5436
        %v5483 = vadd.f32 %v5039, %v5441
        %v5484 = vadd.f32 %v5040, %v5444
        %v5485 = vadd.f32 %v5041, %v5449
        %v5486 = vadd.f32 %v5042, %v5452
        %v5487 = vld [vmem:[%s4] sm:$0x1]
        %v5489 = vlaneseq
        %v5490 = vshrl.u32 %v5489, 7
        %v5491 = vsub.s32 0, %v5490
        %v5492 = vrot.slane %v5487, %v5491
        %v5494 = vadd.f32 %v5455, %v5492
        %v5495 = vadd.f32 %v5456, %v5492
        %v5496 = vadd.f32 %v5457, %v5492
        %v5497 = vadd.f32 %v5458, %v5492
        %v5498 = vadd.f32 %v5459, %v5492
        %v5499 = vadd.f32 %v5460, %v5492
        %v5500 = vadd.f32 %v5461, %v5492
        %v5501 = vadd.f32 %v5462, %v5492
        %v5502 = vadd.f32 %v5463, %v5492
        %v5503 = vadd.f32 %v5464, %v5492
        %v5504 = vadd.f32 %v5465, %v5492
        %v5505 = vadd.f32 %v5466, %v5492
        %v5506 = vadd.f32 %v5467, %v5492
        %v5507 = vadd.f32 %v5468, %v5492
        %v5508 = vadd.f32 %v5469, %v5492
        %v5509 = vadd.f32 %v5470, %v5492
        %v5510 = vadd.f32 %v5471, %v5492
        %v5511 = vadd.f32 %v5472, %v5492
        %v5512 = vadd.f32 %v5473, %v5492
        %v5513 = vadd.f32 %v5474, %v5492
        %v5514 = vadd.f32 %v5475, %v5492
        %v5515 = vadd.f32 %v5476, %v5492
        %v5516 = vadd.f32 %v5477, %v5492
        %v5517 = vadd.f32 %v5478, %v5492
        %v5518 = vadd.f32 %v5479, %v5492
        %v5519 = vadd.f32 %v5480, %v5492
        %v5520 = vadd.f32 %v5481, %v5492
        %v5521 = vadd.f32 %v5482, %v5492
        %v5522 = vadd.f32 %v5483, %v5492
        %v5523 = vadd.f32 %v5484, %v5492
        %v5524 = vadd.f32 %v5485, %v5492
        %v5525 = vadd.f32 %v5486, %v5492
        %v5526 = vmax.f32 %v5494, 0.0
        %v5527 = vmax.f32 %v5495, 0.0
        %v5528 = vmax.f32 %v5496, 0.0
        %v5529 = vmax.f32 %v5497, 0.0
        %v5530 = vmax.f32 %v5498, 0.0
        %v5531 = vmax.f32 %v5499, 0.0
        %v5532 = vmax.f32 %v5500, 0.0
        %v5533 = vmax.f32 %v5501, 0.0
        %v5534 = vmax.f32 %v5502, 0.0
        %v5535 = vmax.f32 %v5503, 0.0
        %v5536 = vmax.f32 %v5504, 0.0
        %v5537 = vmax.f32 %v5505, 0.0
        %v5538 = vmax.f32 %v5506, 0.0
        %v5539 = vmax.f32 %v5507, 0.0
        %v5540 = vmax.f32 %v5508, 0.0
        %v5541 = vmax.f32 %v5509, 0.0
        %v5542 = vmax.f32 %v5510, 0.0
        %v5543 = vmax.f32 %v5511, 0.0
        %v5544 = vmax.f32 %v5512, 0.0
        %v5545 = vmax.f32 %v5513, 0.0
        %v5546 = vmax.f32 %v5514, 0.0
        %v5547 = vmax.f32 %v5515, 0.0
        %v5548 = vmax.f32 %v5516, 0.0
        %v5549 = vmax.f32 %v5517, 0.0
        %v5550 = vmax.f32 %v5518, 0.0
        %v5551 = vmax.f32 %v5519, 0.0
        %v5552 = vmax.f32 %v5520, 0.0
        %v5553 = vmax.f32 %v5521, 0.0
        %v5554 = vmax.f32 %v5522, 0.0
        %v5555 = vmax.f32 %v5523, 0.0
        %v5556 = vmax.f32 %v5524, 0.0
        %v5557 = vmax.f32 %v5525, 0.0
        %v5558 = vpack.c.bf16 %v5527, %v5526
        %v5559 = vpack.c.bf16 %v5529, %v5528
        %v5560 = vpack.c.bf16 %v5531, %v5530
        %v5561 = vpack.c.bf16 %v5533, %v5532
        %v5562 = vpack.c.bf16 %v5535, %v5534
        %v5563 = vpack.c.bf16 %v5537, %v5536
        %v5564 = vpack.c.bf16 %v5539, %v5538
        %v5565 = vpack.c.bf16 %v5541, %v5540
        %v5566 = vpack.c.bf16 %v5543, %v5542
        %v5567 = vpack.c.bf16 %v5545, %v5544
        %v5568 = vpack.c.bf16 %v5547, %v5546
        %v5569 = vpack.c.bf16 %v5549, %v5548
        %v5570 = vpack.c.bf16 %v5551, %v5550
        %v5571 = vpack.c.bf16 %v5553, %v5552
        %v5572 = vpack.c.bf16 %v5555, %v5554
        %v5573 = vpack.c.bf16 %v5557, %v5556
        %v5574 = vld [vmem:[#allocation9] sm:$0xf]
        %v5575 = vld [vmem:[#allocation9 + $0x4] sm:$0xf]
        %v5576 = vld [vmem:[#allocation9 + $0x8] sm:$0xf]
        %v5577 = vld [vmem:[#allocation9 + $0xc] sm:$0xf]
        %v5578 = vld [vmem:[#allocation9 + $0x10] sm:$0xf]
        %v5579 = vld [vmem:[#allocation9 + $0x14] sm:$0xf]
        %v5580 = vld [vmem:[#allocation9 + $0x18] sm:$0xf]
        %v5581 = vld [vmem:[#allocation9 + $0x1c] sm:$0xf]
        %v5582 = vld [vmem:[#allocation9 + $0x20] sm:$0xf]
        %v5583 = vld [vmem:[#allocation9 + $0x24] sm:$0xf]
        %v5584 = vld [vmem:[#allocation9 + $0x28] sm:$0xf]
        %v5585 = vld [vmem:[#allocation9 + $0x2c] sm:$0xf]
        %v5586 = vld [vmem:[#allocation9 + $0x30] sm:$0xf]
        %v5587 = vld [vmem:[#allocation9 + $0x34] sm:$0xf]
        %v5588 = vld [vmem:[#allocation9 + $0x38] sm:$0xf]
        %v5589 = vld [vmem:[#allocation9 + $0x3c] sm:$0xf]
        %v5590 = vld [vmem:[%s6] sm:$0x1]
        %v5592 = vlaneseq
        %v5593 = vshrl.u32 %v5592, 7
        %v5594 = vsub.s32 0, %v5593
        %v5595 = vrot.slane %v5590, %v5594
        %v5613 = vunpack.c.l.b16 %v5574
        %v5614 = vunpack.c.l.b16 %v5575
        %v5615 = vunpack.c.l.b16 %v5576
        %v5616 = vunpack.c.l.b16 %v5577
        %v5617 = vunpack.c.l.b16 %v5578
        %v5618 = vunpack.c.l.b16 %v5579
        %v5619 = vunpack.c.l.b16 %v5580
        %v5620 = vunpack.c.l.b16 %v5581
        %v5621 = vunpack.c.l.b16 %v5582
        %v5622 = vunpack.c.l.b16 %v5583
        %v5623 = vunpack.c.l.b16 %v5584
        %v5624 = vunpack.c.l.b16 %v5585
        %v5625 = vunpack.c.l.b16 %v5586
        %v5626 = vunpack.c.l.b16 %v5587
        %v5627 = vunpack.c.l.b16 %v5588
        %v5628 = vunpack.c.l.b16 %v5589
        %v5629 = vpack.c.b16 %v5614, %v5613
        %v5630 = vpack.c.b16 %v5616, %v5615
        %v5631 = vpack.c.b16 %v5618, %v5617
        %v5632 = vpack.c.b16 %v5620, %v5619
        %v5633 = vpack.c.b16 %v5622, %v5621
        %v5634 = vpack.c.b16 %v5624, %v5623
        %v5635 = vpack.c.b16 %v5626, %v5625
        %v5636 = vpack.c.b16 %v5628, %v5627
        %5645 = vmatprep.subr.bf16.mxu0 0
        %5646 = vmatpush1.bf16.msra.mxu0 %v5629
        %5647 = vmatprep.subr.bf16.mxu0 0
        %5648 = vmatpush1.bf16.msra.mxu0 %v5630
        %5649 = vmatprep.subr.bf16.mxu0 0
        %5650 = vmatpush1.bf16.msra.mxu0 %v5631
        %5651 = vmatprep.subr.bf16.mxu0 0
        %5652 = vmatpush1.bf16.msra.mxu0 %v5632
        %5653 = vmatprep.subr.bf16.mxu0 0
        %5654 = vmatpush1.bf16.msra.mxu0 %v5633
        %5655 = vmatprep.subr.bf16.mxu0 0
        %5656 = vmatpush1.bf16.msra.mxu0 %v5634
        %5657 = vmatprep.subr.bf16.mxu0 0
        %5658 = vmatpush1.bf16.msra.mxu0 %v5635
        %5659 = vmatprep.subr.bf16.mxu0 0
        %5660 = vmatpush1.bf16.msra.mxu0 %v5636
        %5661 = vmatprep.subr.bf16.mxu0 0
        %5662 = vmatpush1.bf16.msra.mxu0 0
        %5663 = vmatprep.subr.bf16.mxu0 0
        %5664 = vmatpush1.bf16.msra.mxu0 0
        %5665 = vmatprep.subr.bf16.mxu0 0
        %5666 = vmatpush1.bf16.msra.mxu0 0
        %5667 = vmatprep.subr.bf16.mxu0 0
        %5668 = vmatpush1.bf16.msra.mxu0 0
        %5669 = vmatprep.subr.bf16.mxu0 0
        %5670 = vmatpush1.bf16.msra.mxu0 0
        %5671 = vmatprep.subr.bf16.mxu0 0
        %5672 = vmatpush1.bf16.msra.mxu0 0
        %5673 = vmatprep.subr.bf16.mxu0 0
        %5674 = vmatpush1.bf16.msra.mxu0 0
        %5675 = vmatprep.subr.bf16.mxu0 0
        %5676 = vmatpush1.bf16.msra.mxu0 0
        %5677 = vmatprep.mubr.bf16.mxu0 0
        %5678 = vmatmul.mubr.bf16.gmra.mrb[0].mxu0 %v5558
        %v5679 = vpop.f32.mrb[0].mxu0
        %v5680 = vadd.f32 %v5595, %v5679
        %v5681 = vpop.f32.mrb[0].mxu0
        %v5682 = vpop.f32.mrb[0].mxu0
        %v5683 = vadd.f32 %v5595, %v5682
        %v5684 = vpop.f32.mrb[0].mxu0
        %5685 = vmatprep.mubr.bf16.mxu0 0
        %5686 = vmatmul.mubr.bf16.gmra.mrb[0].mxu0 %v5559
        %v5687 = vpop.f32.mrb[0].mxu0
        %v5688 = vadd.f32 %v5595, %v5687
        %v5689 = vpop.f32.mrb[0].mxu0
        %v5690 = vpop.f32.mrb[0].mxu0
        %v5691 = vadd.f32 %v5595, %v5690
        %v5692 = vpop.f32.mrb[0].mxu0
        %5693 = vmatprep.mubr.bf16.mxu0 0
        %5694 = vmatmul.mubr.bf16.gmra.mrb[0].mxu0 %v5560
        %v5695 = vpop.f32.mrb[0].mxu0
        %v5696 = vadd.f32 %v5595, %v5695
        %v5697 = vpop.f32.mrb[0].mxu0
        %v5698 = vpop.f32.mrb[0].mxu0
        %v5699 = vadd.f32 %v5595, %v5698
        %v5700 = vpop.f32.mrb[0].mxu0
        %5701 = vmatprep.mubr.bf16.mxu0 0
        %5702 = vmatmul.mubr.bf16.gmra.mrb[0].mxu0 %v5561
        %v5703 = vpop.f32.mrb[0].mxu0
        %v5704 = vadd.f32 %v5595, %v5703
        %v5705 = vpop.f32.mrb[0].mxu0
        %v5706 = vpop.f32.mrb[0].mxu0
        %v5707 = vadd.f32 %v5595, %v5706
        %v5708 = vpop.f32.mrb[0].mxu0
        %5709 = vmatprep.mubr.bf16.mxu0 0
        %5710 = vmatmul.mubr.bf16.gmra.mrb[0].mxu0 %v5562
        %v5711 = vpop.f32.mrb[0].mxu0
        %v5712 = vadd.f32 %v5595, %v5711
        %v5713 = vpop.f32.mrb[0].mxu0
        %v5714 = vpop.f32.mrb[0].mxu0
        %v5715 = vadd.f32 %v5595, %v5714
        %v5716 = vpop.f32.mrb[0].mxu0
        %5717 = vmatprep.mubr.bf16.mxu0 0
        %5718 = vmatmul.mubr.bf16.gmra.mrb[0].mxu0 %v5563
        %v5719 = vpop.f32.mrb[0].mxu0
        %v5720 = vadd.f32 %v5595, %v5719
        %v5721 = vpop.f32.mrb[0].mxu0
        %v5722 = vpop.f32.mrb[0].mxu0
        %v5723 = vadd.f32 %v5595, %v5722
        %v5724 = vpop.f32.mrb[0].mxu0
        %5725 = vmatprep.mubr.bf16.mxu0 0
        %5726 = vmatmul.mubr.bf16.gmra.mrb[0].mxu0 %v5564
        %v5727 = vpop.f32.mrb[0].mxu0
        %v5728 = vadd.f32 %v5595, %v5727
        %v5729 = vpop.f32.mrb[0].mxu0
        %v5730 = vpop.f32.mrb[0].mxu0
        %v5731 = vadd.f32 %v5595, %v5730
        %v5732 = vpop.f32.mrb[0].mxu0
        %5733 = vmatprep.mubr.bf16.mxu0 0
        %5734 = vmatmul.mubr.bf16.gmra.mrb[0].mxu0 %v5565
        %v5735 = vpop.f32.mrb[0].mxu0
        %v5736 = vadd.f32 %v5595, %v5735
        %v5737 = vpop.f32.mrb[0].mxu0
        %v5738 = vpop.f32.mrb[0].mxu0
        %v5739 = vadd.f32 %v5595, %v5738
        %v5740 = vpop.f32.mrb[0].mxu0
        %5741 = vmatprep.mubr.bf16.mxu0 0
        %5742 = vmatmul.mubr.bf16.gmra.mrb[0].mxu0 %v5566
        %v5743 = vpop.f32.mrb[0].mxu0
        %v5744 = vadd.f32 %v5595, %v5743
        %v5745 = vpop.f32.mrb[0].mxu0
        %v5746 = vpop.f32.mrb[0].mxu0
        %v5747 = vadd.f32 %v5595, %v5746
        %v5748 = vpop.f32.mrb[0].mxu0
        %5749 = vmatprep.mubr.bf16.mxu0 0
        %5750 = vmatmul.mubr.bf16.gmra.mrb[0].mxu0 %v5567
        %v5751 = vpop.f32.mrb[0].mxu0
        %v5752 = vadd.f32 %v5595, %v5751
        %v5753 = vpop.f32.mrb[0].mxu0
        %v5754 = vpop.f32.mrb[0].mxu0
        %v5755 = vadd.f32 %v5595, %v5754
        %v5756 = vpop.f32.mrb[0].mxu0
        %5757 = vmatprep.mubr.bf16.mxu0 0
        %5758 = vmatmul.mubr.bf16.gmra.mrb[0].mxu0 %v5568
        %v5759 = vpop.f32.mrb[0].mxu0
        %v5760 = vadd.f32 %v5595, %v5759
        %v5761 = vpop.f32.mrb[0].mxu0
        %v5762 = vpop.f32.mrb[0].mxu0
        %v5763 = vadd.f32 %v5595, %v5762
        %v5764 = vpop.f32.mrb[0].mxu0
        %5765 = vmatprep.mubr.bf16.mxu0 0
        %5766 = vmatmul.mubr.bf16.gmra.mrb[0].mxu0 %v5569
        %v5767 = vpop.f32.mrb[0].mxu0
        %v5768 = vadd.f32 %v5595, %v5767
        %v5769 = vpop.f32.mrb[0].mxu0
        %v5770 = vpop.f32.mrb[0].mxu0
        %v5771 = vadd.f32 %v5595, %v5770
        %v5772 = vpop.f32.mrb[0].mxu0
        %5773 = vmatprep.mubr.bf16.mxu0 0
        %5774 = vmatmul.mubr.bf16.gmra.mrb[0].mxu0 %v5570
        %v5775 = vpop.f32.mrb[0].mxu0
        %v5776 = vadd.f32 %v5595, %v5775
        %v5777 = vpop.f32.mrb[0].mxu0
        %v5778 = vpop.f32.mrb[0].mxu0
        %v5779 = vadd.f32 %v5595, %v5778
        %v5780 = vpop.f32.mrb[0].mxu0
        %5781 = vmatprep.mubr.bf16.mxu0 0
        %5782 = vmatmul.mubr.bf16.gmra.mrb[0].mxu0 %v5571
        %v5783 = vpop.f32.mrb[0].mxu0
        %v5784 = vadd.f32 %v5595, %v5783
        %v5785 = vpop.f32.mrb[0].mxu0
        %v5786 = vpop.f32.mrb[0].mxu0
        %v5787 = vadd.f32 %v5595, %v5786
        %v5788 = vpop.f32.mrb[0].mxu0
        %5789 = vmatprep.mubr.bf16.mxu0 0
        %5790 = vmatmul.mubr.bf16.gmra.mrb[0].mxu0 %v5572
        %v5791 = vpop.f32.mrb[0].mxu0
        %v5792 = vadd.f32 %v5595, %v5791
        %v5793 = vpop.f32.mrb[0].mxu0
        %v5794 = vpop.f32.mrb[0].mxu0
        %v5795 = vadd.f32 %v5595, %v5794
        %v5796 = vpop.f32.mrb[0].mxu0
        %5797 = vmatprep.mubr.bf16.mxu0 0
        %5798 = vmatmul.mubr.bf16.gmra.mrb[0].mxu0 %v5573
        %v5799 = vpop.f32.mrb[0].mxu0
        %v5800 = vadd.f32 %v5595, %v5799
        %v5801 = vpop.f32.mrb[0].mxu0
        %v5802 = vpop.f32.mrb[0].mxu0
        %v5803 = vadd.f32 %v5595, %v5802
        %v5804 = vpop.f32.mrb[0].mxu0
        %5805 = vdwg.mxu0
        %v5806 = vunpack.c.l.bf16 %v344
        %v5807 = vunpack.c.l.bf16 %v345
        %v5808 = vunpack.c.l.bf16 %v346
        %v5809 = vunpack.c.l.bf16 %v347
        %v5810 = vunpack.c.l.bf16 %v348
        %v5811 = vunpack.c.l.bf16 %v349
        %v5812 = vunpack.c.l.bf16 %v350
        %v5813 = vunpack.c.l.bf16 %v351
        %v5814 = vunpack.c.l.bf16 %v352
        %v5815 = vunpack.c.l.bf16 %v353
        %v5816 = vunpack.c.l.bf16 %v354
        %v5817 = vunpack.c.l.bf16 %v355
        %v5818 = vunpack.c.l.bf16 %v356
        %v5819 = vunpack.c.l.bf16 %v357
        %v5820 = vunpack.c.l.bf16 %v358
        %v5821 = vunpack.c.l.bf16 %v359
        %v5822 = vunpack.c.l.bf16 %v360
        %v5823 = vunpack.c.l.bf16 %v361
        %v5824 = vunpack.c.l.bf16 %v362
        %v5825 = vunpack.c.l.bf16 %v363
        %v5826 = vunpack.c.l.bf16 %v364
        %v5827 = vunpack.c.l.bf16 %v365
        %v5828 = vunpack.c.l.bf16 %v366
        %v5829 = vunpack.c.l.bf16 %v367
        %v5830 = vunpack.c.l.bf16 %v368
        %v5831 = vunpack.c.l.bf16 %v369
        %v5832 = vunpack.c.l.bf16 %v370
        %v5833 = vunpack.c.l.bf16 %v371
        %v5834 = vunpack.c.l.bf16 %v372
        %v5835 = vunpack.c.l.bf16 %v373
        %v5836 = vunpack.c.l.bf16 %v374
        %v5837 = vunpack.c.l.bf16 %v375
        %v5838 = vadd.f32 %v5680, %v5806
        %v5839 = vadd.f32 %v5683, %v5807
        %v5840 = vadd.f32 %v5688, %v5808
        %v5841 = vadd.f32 %v5691, %v5809
        %v5842 = vadd.f32 %v5696, %v5810
        %v5843 = vadd.f32 %v5699, %v5811
        %v5844 = vadd.f32 %v5704, %v5812
        %v5845 = vadd.f32 %v5707, %v5813
        %v5846 = vadd.f32 %v5712, %v5814
        %v5847 = vadd.f32 %v5715, %v5815
        %v5848 = vadd.f32 %v5720, %v5816
        %v5849 = vadd.f32 %v5723, %v5817
        %v5850 = vadd.f32 %v5728, %v5818
        %v5851 = vadd.f32 %v5731, %v5819
        %v5852 = vadd.f32 %v5736, %v5820
        %v5853 = vadd.f32 %v5739, %v5821
        %v5854 = vadd.f32 %v5744, %v5822
        %v5855 = vadd.f32 %v5747, %v5823
        %v5856 = vadd.f32 %v5752, %v5824
        %v5857 = vadd.f32 %v5755, %v5825
        %v5858 = vadd.f32 %v5760, %v5826
        %v5859 = vadd.f32 %v5763, %v5827
        %v5860 = vadd.f32 %v5768, %v5828
        %v5861 = vadd.f32 %v5771, %v5829
        %v5862 = vadd.f32 %v5776, %v5830
        %v5863 = vadd.f32 %v5779, %v5831
        %v5864 = vadd.f32 %v5784, %v5832
        %v5865 = vadd.f32 %v5787, %v5833
        %v5866 = vadd.f32 %v5792, %v5834
        %v5867 = vadd.f32 %v5795, %v5835
        %v5868 = vadd.f32 %v5800, %v5836
        %v5869 = vadd.f32 %v5803, %v5837
        %v5870 = vmax.f32 %v5838, 0.0
        %v5871 = vmax.f32 %v5839, 0.0
        %v5872 = vmax.f32 %v5840, 0.0
        %v5873 = vmax.f32 %v5841, 0.0
        %v5874 = vmax.f32 %v5842, 0.0
        %v5875 = vmax.f32 %v5843, 0.0
        %v5876 = vmax.f32 %v5844, 0.0
        %v5877 = vmax.f32 %v5845, 0.0
        %v5878 = vmax.f32 %v5846, 0.0
        %v5879 = vmax.f32 %v5847, 0.0
        %v5880 = vmax.f32 %v5848, 0.0
        %v5881 = vmax.f32 %v5849, 0.0
        %v5882 = vmax.f32 %v5850, 0.0
        %v5883 = vmax.f32 %v5851, 0.0
        %v5884 = vmax.f32 %v5852, 0.0
        %v5885 = vmax.f32 %v5853, 0.0
        %v5886 = vmax.f32 %v5854, 0.0
        %v5887 = vmax.f32 %v5855, 0.0
        %v5888 = vmax.f32 %v5856, 0.0
        %v5889 = vmax.f32 %v5857, 0.0
        %v5890 = vmax.f32 %v5858, 0.0
        %v5891 = vmax.f32 %v5859, 0.0
        %v5892 = vmax.f32 %v5860, 0.0
        %v5893 = vmax.f32 %v5861, 0.0
        %v5894 = vmax.f32 %v5862, 0.0
        %v5895 = vmax.f32 %v5863, 0.0
        %v5896 = vmax.f32 %v5864, 0.0
        %v5897 = vmax.f32 %v5865, 0.0
        %v5898 = vmax.f32 %v5866, 0.0
        %v5899 = vmax.f32 %v5867, 0.0
        %v5900 = vmax.f32 %v5868, 0.0
        %v5901 = vmax.f32 %v5869, 0.0
        %v5902 = vpack.c.bf16 %v5871, %v5870
        %v5903 = vpack.c.bf16 %v5873, %v5872
        %v5904 = vpack.c.bf16 %v5875, %v5874
        %v5905 = vpack.c.bf16 %v5877, %v5876
        %v5906 = vpack.c.bf16 %v5879, %v5878
        %v5907 = vpack.c.bf16 %v5881, %v5880
        %v5908 = vpack.c.bf16 %v5883, %v5882
        %v5909 = vpack.c.bf16 %v5885, %v5884
        %v5910 = vpack.c.bf16 %v5887, %v5886
        %v5911 = vpack.c.bf16 %v5889, %v5888
        %v5912 = vpack.c.bf16 %v5891, %v5890
        %v5913 = vpack.c.bf16 %v5893, %v5892
        %v5914 = vpack.c.bf16 %v5895, %v5894
        %v5915 = vpack.c.bf16 %v5897, %v5896
        %v5916 = vpack.c.bf16 %v5899, %v5898
        %v5917 = vpack.c.bf16 %v5901, %v5900
        %v5934 = vunpack.c.l.b16 %v5902
        %v5935 = vunpack.c.h.b16 %v5902
        %v5936 = vunpack.c.l.b16 %v5903
        %v5937 = vunpack.c.h.b16 %v5903
        %v5938 = vunpack.c.l.b16 %v5904
        %v5939 = vunpack.c.h.b16 %v5904
        %v5940 = vunpack.c.l.b16 %v5905
        %v5941 = vunpack.c.h.b16 %v5905
        %v5942 = vunpack.c.l.b16 %v5906
        %v5943 = vunpack.c.h.b16 %v5906
        %v5944 = vunpack.c.l.b16 %v5907
        %v5945 = vunpack.c.h.b16 %v5907
        %v5946 = vunpack.c.l.b16 %v5908
        %v5947 = vunpack.c.h.b16 %v5908
        %v5948 = vunpack.c.l.b16 %v5909
        %v5949 = vunpack.c.h.b16 %v5909
        %v5950 = vunpack.c.l.b16 %v5910
        %v5951 = vunpack.c.h.b16 %v5910
        %v5952 = vunpack.c.l.b16 %v5911
        %v5953 = vunpack.c.h.b16 %v5911
        %v5954 = vunpack.c.l.b16 %v5912
        %v5955 = vunpack.c.h.b16 %v5912
        %v5956 = vunpack.c.l.b16 %v5913
        %v5957 = vunpack.c.h.b16 %v5913
        %v5958 = vunpack.c.l.b16 %v5914
        %v5959 = vunpack.c.h.b16 %v5914
        %v5960 = vunpack.c.l.b16 %v5915
        %v5961 = vunpack.c.h.b16 %v5915
        %v5962 = vunpack.c.l.b16 %v5916
        %v5963 = vunpack.c.h.b16 %v5916
        %v5964 = vunpack.c.l.b16 %v5917
        %v5965 = vunpack.c.h.b16 %v5917
        %v5966 = vpack.c.b16 %v5934, %v5934
        %v5967 = vpack.c.b16 %v5935, %v5935
        %v5968 = vpack.c.b16 %v5936, %v5936
        %v5969 = vpack.c.b16 %v5937, %v5937
        %v5970 = vpack.c.b16 %v5938, %v5938
        %v5971 = vpack.c.b16 %v5939, %v5939
        %v5972 = vpack.c.b16 %v5940, %v5940
        %v5973 = vpack.c.b16 %v5941, %v5941
        %v5974 = vpack.c.b16 %v5942, %v5942
        %v5975 = vpack.c.b16 %v5943, %v5943
        %v5976 = vpack.c.b16 %v5944, %v5944
        %v5977 = vpack.c.b16 %v5945, %v5945
        %v5978 = vpack.c.b16 %v5946, %v5946
        %v5979 = vpack.c.b16 %v5947, %v5947
        %v5980 = vpack.c.b16 %v5948, %v5948
        %v5981 = vpack.c.b16 %v5949, %v5949
        %v5982 = vpack.c.b16 %v5950, %v5950
        %v5983 = vpack.c.b16 %v5951, %v5951
        %v5984 = vpack.c.b16 %v5952, %v5952
        %v5985 = vpack.c.b16 %v5953, %v5953
        %v5986 = vpack.c.b16 %v5954, %v5954
        %v5987 = vpack.c.b16 %v5955, %v5955
        %v5988 = vpack.c.b16 %v5956, %v5956
        %v5989 = vpack.c.b16 %v5957, %v5957
        %v5990 = vpack.c.b16 %v5958, %v5958
        %v5991 = vpack.c.b16 %v5959, %v5959
        %v5992 = vpack.c.b16 %v5960, %v5960
        %v5993 = vpack.c.b16 %v5961, %v5961
        %v5994 = vpack.c.b16 %v5962, %v5962
        %v5995 = vpack.c.b16 %v5963, %v5963
        %v5996 = vpack.c.b16 %v5964, %v5964
        %v5997 = vpack.c.b16 %v5965, %v5965
        %6030 = vst [vmem:[%s340] sm:$0xf] %v5966
        %6031 = vst [vmem:[%s340 + $0x4] sm:$0xf] %v5967
        %6032 = vst [vmem:[%s340 + $0x8] sm:$0xf] %v5968
        %6033 = vst [vmem:[%s340 + $0xc] sm:$0xf] %v5969
        %6034 = vst [vmem:[%s340 + $0x10] sm:$0xf] %v5970
        %6035 = vst [vmem:[%s340 + $0x14] sm:$0xf] %v5971
        %6036 = vst [vmem:[%s340 + $0x18] sm:$0xf] %v5972
        %6037 = vst [vmem:[%s340 + $0x1c] sm:$0xf] %v5973
        %6038 = vst [vmem:[%s340 + $0x20] sm:$0xf] %v5974
        %6039 = vst [vmem:[%s340 + $0x24] sm:$0xf] %v5975
        %6040 = vst [vmem:[%s340 + $0x28] sm:$0xf] %v5976
        %6041 = vst [vmem:[%s340 + $0x2c] sm:$0xf] %v5977
        %6042 = vst [vmem:[%s340 + $0x30] sm:$0xf] %v5978
        %6043 = vst [vmem:[%s340 + $0x34] sm:$0xf] %v5979
        %6044 = vst [vmem:[%s340 + $0x38] sm:$0xf] %v5980
        %6045 = vst [vmem:[%s340 + $0x3c] sm:$0xf] %v5981
        %6046 = vst [vmem:[%s340 + $0x40] sm:$0xf] %v5982
        %6047 = vst [vmem:[%s340 + $0x44] sm:$0xf] %v5983
        %6048 = vst [vmem:[%s340 + $0x48] sm:$0xf] %v5984
        %6049 = vst [vmem:[%s340 + $0x4c] sm:$0xf] %v5985
        %6050 = vst [vmem:[%s340 + $0x50] sm:$0xf] %v5986
        %6051 = vst [vmem:[%s340 + $0x54] sm:$0xf] %v5987
        %6052 = vst [vmem:[%s340 + $0x58] sm:$0xf] %v5988
        %6053 = vst [vmem:[%s340 + $0x5c] sm:$0xf] %v5989
        %6054 = vst [vmem:[%s340 + $0x60] sm:$0xf] %v5990
        %6055 = vst [vmem:[%s340 + $0x64] sm:$0xf] %v5991
        %6056 = vst [vmem:[%s340 + $0x68] sm:$0xf] %v5992
        %6057 = vst [vmem:[%s340 + $0x6c] sm:$0xf] %v5993
        %6058 = vst [vmem:[%s340 + $0x70] sm:$0xf] %v5994
        %6059 = vst [vmem:[%s340 + $0x74] sm:$0xf] %v5995
        %6060 = vst [vmem:[%s340 + $0x78] sm:$0xf] %v5996
        %6061 = vst [vmem:[%s340 + $0x7c] sm:$0xf] %v5997
        %s6062 = sand.u32 %s186, 1
        %s6063 = scalar_lea.sflag [#allocation5], %s6062
        %s6064 = sand.u32 %s186, 1
        %s6065 = smul.addr %s6064, 128
        %s6066 = scalar_lea.vmem [#allocation11], %s6065
        // Predicated region
        $region65: #{tpu_custom_call.1} parent=47 // pred_check
          %p6067 = pneg %p196
        $region66: #{tpu_custom_call.1} parent=47 // pred_check_branch
          %6069 = sbr.rel (%p6067) target = $region68
        $region67: #{tpu_custom_call.1} parent=47 // pred_region
          %s6071 = ssub.s32 2048, 2048
          %6072 = vsyncadd %s6063, %s6071
          %s6073 = smul.addr %s26, 32
          %s6074 = smul.addr %s6073, 64
          %s6075 = scalar_lea.hbm %s7, %s6074
          %s6076 = sshll.u32 %s6066, 4
          %s6077 = int_to_ptr.vmem [resolvable:$true] %s6076
          %6082 = dma.vmem_to_hbm [thread:$0]  %s6077, 2048, %s6075, %s6063, 64, 64, 4
        $region68: #{tpu_custom_call.1} parent=47 // pred_fallthru
          _
      $region48: #{tpu_custom_call.1} parent=5 // pred_fallthru
        _
      %p6083 = scmp.le.s32.totalorder 2, %s21
      // Predicated region
      $region69: #{tpu_custom_call.1} parent=5 // pred_check
        %p6084 = pneg %p6083
      $region70: #{tpu_custom_call.1} parent=5 // pred_check_branch
        %6086 = sbr.rel (%p6084) target = $region72
      $region71: #{tpu_custom_call.1} parent=5 // pred_region
        %s6087 = ssub.s32 %s21, 2
        // Predicated region
        $region73: #{tpu_custom_call.1} parent=71 // pred_check
          %p6088 = pneg %p202
        $region74: #{tpu_custom_call.1} parent=71 // pred_check_branch
          %6090 = sbr.rel (%p6088) target = $region76
        $region75: #{tpu_custom_call.1} parent=71 // pred_region
          %s6091 = sand.u32 %s187, 1
          %s6092 = scalar_lea.sflag [#allocation5], %s6091
          %s6093 = sand.u32 %s187, 1
          %s6094 = smul.addr %s6093, 128
          %s6095 = scalar_lea.vmem [#allocation11], %s6094
          %6096 = dma.done %s6092, 2048
        $region76: #{tpu_custom_call.1} parent=71 // pred_fallthru
          _
      $region72: #{tpu_custom_call.1} parent=5 // pred_fallthru
        _
    $region6: #{tpu_custom_call.1} parent=1 // loop_footer
      %s25 = sadd.s32 1, %s21
    $region7: #{tpu_custom_call.1} parent=1 // loop_footer_branch
      %20 = sbr.rel target = $region3
    $region8: #{tpu_custom_call.1} parent=1 // loop_exit
      _
    %6097 = vsyncpa [#allocation4], 1
    %s6098 = scalar_lea.sflag [#allocation4], 1
    %6099 = vsyncpa %s6098, 1
    %6100 = vsyncpa [#allocation7], 1
    %6101 = vsyncpa [#allocation10], 1
    %6102 = vsyncpa [#allocation5], 1
    %s6103 = scalar_lea.sflag [#allocation5], 1
    %6104 = vsyncpa %s6103, 1

</llo_original>
